<compile_context>
chip_gen: v7x
topology: tpu7x:2x2x1
jax: 0.10.0
libtpu: 0.0.40
codegen_flags: <defaults>
</compile_context>

<pallas_src>
import functools
import math

import jax
import jax.numpy as jnp
from jax.experimental import pallas as pl
from jax.experimental.pallas import tpu as pltpu


# ------------------------------------------------------------------
# Pallas kernel: fused im2col + single conv-as-matmul per image
# ------------------------------------------------------------------
def _dcf_conv_kernel(x_ref, w_ref, b_ref, o_ref, *, ksize, stride, dilation,
                     h_out, w_out):
    # x_ref: (B_tile, Hp, Wp, C_in)        compute dtype (bf16/f32), padded NHWC
    # w_ref: (C_out_pad, k*k*C_in)         compute dtype, K order = (ki, kj, ci)
    # b_ref: (C_out_pad, 1)                f32 bias column
    # o_ref: (B_tile, C_out, L_out_pad)    f32, NCHW-flat output tile
    b_tile, _, _, c_in = x_ref.shape
    c_out = o_ref.shape[1]
    l_out_pad = o_ref.shape[2]
    l_out = h_out * w_out

    w_mat = w_ref[...]                         # (C_out_pad, K) -- tiny, resident
    bias_col = b_ref[0:c_out, :]               # (C_out, 1) f32

    for b in range(b_tile):
        # ---- fused im2col: one (l_out, C_in*k*k) patch per image -----------
        cols = []
        for ki in range(ksize):
            for kj in range(ksize):
                r0 = ki * dilation
                c0 = kj * dilation
                if stride == 1:
                    win = x_ref[b, pl.ds(r0, h_out), pl.ds(c0, w_out), :]
                else:
                    # TODO(synk): stride>1 path (strided window loads on two
                    # axes) is supported in principle but not exercised by the
                    # self-test.
                    win = x_ref[b, pl.ds(r0, h_out, stride),
                                pl.ds(c0, w_out, stride), :]
                # (h_out, w_out, C_in) -> (l_out, C_in): merges leading dims
                # into sublanes, lane dim unchanged.
                cols.append(win.reshape(l_out, c_in))
        patch = jnp.concatenate(cols, axis=-1)            # (l_out, K)
        if l_out_pad != l_out:                            # lane-dense store pad
            patch = jnp.pad(patch, ((0, l_out_pad - l_out), (0, 0)))

        # ---- single MXU matmul, accumulator born in (C_out, L) orientation --
        acc = jax.lax.dot_general(
            w_mat, patch,
            dimension_numbers=(((1,), (1,)), ((), ())),
            preferred_element_type=jnp.float32)           # (C_out_pad, L_out_pad)
        out_rows = acc[0:c_out, :] + bias_col             # (C_out, L_out_pad)
        o_ref[b] = out_rows.astype(o_ref.dtype)           # lane-dense vst


# ------------------------------------------------------------------
# Helpers: padding-aware VMEM footprints and batch-tile selection
# ------------------------------------------------------------------
def _padded_tile_bytes(block_shape, dtype):
    """Bytes of one VMEM buffer of `block_shape`, with (sublane, lane) padding
    of the trailing two dims (f32 sublane tile 8, bf16 16)."""
    itemsize = jnp.dtype(dtype).itemsize
    sublane = 8 * (4 // itemsize)
    shape = list(block_shape)
    if len(shape) == 1:
        shape = [1] + shape
    lead = 1
    for d in shape[:-2]:
        lead *= d
    sub = -(-shape[-2] // sublane) * sublane
    lane = -(-shape[-1] // 128) * 128
    return lead * sub * lane * itemsize


def _pick_batch_tile(n, per_image_bytes, budget_bytes):
    """Images per grid step: keep >=2 grid steps when possible (megacore),
    cap at 8 and at the VMEM budget, and require it to divide n."""
    if n <= 2:
        bt = 1
    else:
        bt = max(1, n // (4 if n >= 8 else 2))
    bt = min(bt, 8)
    while bt > 1 and 2 * bt * per_image_bytes > budget_bytes:
        bt -= 1
    while n % bt:
        bt -= 1
    return max(bt, 1)


# ------------------------------------------------------------------
# Forward wrapper (jitted): weight reconstruction + pallas_call
# ------------------------------------------------------------------
@functools.partial(
    jax.jit,
    static_argnames=("ksize", "stride", "padding", "dilation", "out_channels",
                     "num_bases", "compute_dtype"))
def conv_dcf_forward(x, weight, bases, bias, *, ksize, stride, padding,
                     dilation, out_channels, num_bases, compute_dtype):
    n, c_in, h, w = x.shape
    h_out = (h + 2 * padding - dilation * (ksize - 1) - 1) // stride + 1
    w_out = (w + 2 * padding - dilation * (ksize - 1) - 1) // stride + 1
    hp, wp = h + 2 * padding, w + 2 * padding
    l_out = h_out * w_out
    l_out_pad = pl.cdiv(l_out, 128) * 128
    c_out = out_channels
    c_out_pad = pl.cdiv(c_out, 128) * 128
    kk = ksize * ksize * c_in

    # --- kernel reconstruction: micro-matmul, plain JAX ---------------------
    weight2d = weight.reshape(c_out * c_in, num_bases)
    bases2d = bases.transpose(1, 0, 2, 3).reshape(num_bases, ksize * ksize)
    rec = jnp.dot(weight2d, bases2d,
                  precision=jax.lax.Precision.HIGHEST).reshape(
                      c_out, c_in, ksize, ksize)
    # (C_out, C_in, k, k) -> (C_out_pad, k*k*C_in); K ordered (ki, kj, ci) to
    # match the in-kernel im2col column order.  Cast to MXU compute dtype.
    w_mat = rec.transpose(0, 2, 3, 1).reshape(c_out, kk)
    w_mat = jnp.pad(w_mat, ((0, c_out_pad - c_out), (0, 0))).astype(compute_dtype)

    if bias is None:
        bias = jnp.zeros((c_out,), jnp.float32)
    bias_col = jnp.pad(bias.astype(jnp.float32).reshape(c_out, 1),
                       ((0, c_out_pad - c_out), (0, 0)))

    # --- input: NCHW -> padded NHWC + cast (single fused XLA pass) ----------
    # TODO(synk): for very small C_in the (Wp, C_in) layout is lane-sparse in
    # VMEM; a lane-dense (Hp, Wp*C_in) staging would need lane-splitting
    # relayouts when building the im2col patch, so it is not done here.
    x_nhwc = jnp.pad(x.transpose(0, 2, 3, 1),
                     ((0, 0), (padding, padding), (padding, padding), (0, 0)))
    x_nhwc = x_nhwc.astype(compute_dtype)

    # --- VMEM budget (padding-aware) + batch tile ----------------------------
    try:
        vmem_cap = int(pltpu.get_tpu_info().vmem_capacity_bytes)
    except Exception:
        vmem_cap = 128 * 2**20
    vmem_cap = max(vmem_cap, 64 * 2**20)

    per_image_x = _padded_tile_bytes((1, hp, wp, c_in), compute_dtype)
    b_tile = _pick_batch_tile(n, per_image_x, vmem_cap // 4)
    assert n % b_tile == 0

    # TODO(synk): for large images an H_out-band grid axis (with halo rows)
    # would be needed to keep double-buffering alive on v7x's 64 MiB VMEM.
    block_bytes = (
        2 * b_tile * per_image_x                                        # x
        + 2 * _padded_tile_bytes((c_out_pad, kk), compute_dtype)        # weight
        + 2 * _padded_tile_bytes((c_out_pad, 1), jnp.float32)           # bias
        + 2 * _padded_tile_bytes((b_tile, c_out, l_out_pad), jnp.float32)  # out
        + _padded_tile_bytes((c_out_pad, l_out_pad), jnp.float32)       # acc
        + 2 * _padded_tile_bytes((l_out_pad, kk), compute_dtype))       # patch
    needed = block_bytes + (4 << 20)                    # slack for temporaries
    vmem_limit = int(min((vmem_cap * 3) // 4, max(2 * needed, 64 * 2**20)))
    vmem_limit = int(max(vmem_limit, needed))           # never under-provision

    kernel = functools.partial(_dcf_conv_kernel, ksize=ksize, stride=stride,
                               dilation=dilation, h_out=h_out, w_out=w_out)

    out = pl.pallas_call(
        kernel,
        out_shape=jax.ShapeDtypeStruct((n, c_out, l_out_pad), jnp.float32),
        grid_spec=pltpu.PrefetchScalarGridSpec(
            num_scalar_prefetch=0,
            grid=(n // b_tile,),                         # B_tile images / step
            in_specs=[
                pl.BlockSpec((b_tile, hp, wp, c_in), lambda i: (i, 0, 0, 0)),
                pl.BlockSpec((c_out_pad, kk), lambda i: (0, 0)),   # resident
                pl.BlockSpec((c_out_pad, 1), lambda i: (0, 0)),    # resident
            ],
            out_specs=pl.BlockSpec((b_tile, c_out, l_out_pad),
                                   lambda i: (i, 0, 0)),
        ),
        compiler_params=pltpu.CompilerParams(
            dimension_semantics=("parallel",),           # megacore on v7x
            vmem_limit_bytes=vmem_limit),
    )(x_nhwc, w_mat, bias_col)

    # Trailing-dim slice + split only: layout-preserving, no transpose pass.
    if l_out_pad != l_out:
        out = out[:, :, :l_out]
    return out.reshape(n, c_out, h_out, w_out)


# ------------------------------------------------------------------
# Conv_DCF module (forward_mode1) in JAX + Pallas
# ------------------------------------------------------------------
class ConvDCF:
    def __init__(self, in_channels, out_channels, kernel_size, stride=1,
                 padding=0, num_bases=6, bias=True, dilation=1,
                 compute_dtype=jnp.bfloat16, key=None):
        self.in_channels = in_channels
        self.out_channels = out_channels
        self.kernel_size = kernel_size
        self.stride = stride
        self.padding = padding
        self.num_bases = num_bases
        self.dilation = dilation
        self.compute_dtype = compute_dtype

        if key is None:
            key = jax.random.PRNGKey(0)
        k_bases, k_weight = jax.random.split(key)

        # TODO(synk): 'FB' (Fourier-Bessel) basis construction not reproduced;
        # this uses the module's 'random' initializer path.
        self.bases = jax.random.normal(
            k_bases, (num_bases, 1, kernel_size, kernel_size), jnp.float32)

        # weight: (out_channels, in_channels*num_bases, 1, 1), N(0, stdv)
        stdv = 1.0 / math.sqrt(in_channels * num_bases)
        self.weight = stdv * jax.random.normal(
            k_weight, (out_channels, in_channels * num_bases, 1, 1),
            jnp.float32)

        # bias zero-initialized (reset_parameters)
        self.bias = jnp.zeros((out_channels,), jnp.float32) if bias else None

    def __call__(self, x):
        return conv_dcf_forward(
            x, self.weight, self.bases, self.bias,
            ksize=self.kernel_size, stride=self.stride, padding=self.padding,
            dilation=self.dilation, out_channels=self.out_channels,
            num_bases=self.num_bases, compute_dtype=self.compute_dtype)


# ------------------------------------------------------------------
# Reference (plain JAX) for correctness check
# ------------------------------------------------------------------
def reference_forward(module, x, quantize_to=None):
    c_out, c_in, k = module.out_channels, module.in_channels, module.kernel_size
    weight2d = module.weight.reshape(c_out * c_in, module.num_bases)
    bases2d = module.bases.transpose(1, 0, 2, 3).reshape(module.num_bases, k * k)
    rec = jnp.dot(weight2d, bases2d,
                  precision=jax.lax.Precision.HIGHEST).reshape(c_out, c_in, k, k)
    if quantize_to is not None:
        x = x.astype(quantize_to).astype(jnp.float32)
        rec = rec.astype(quantize_to).astype(jnp.float32)
    out = jax.lax.conv_general_dilated(
        x, rec,
        window_strides=(module.stride, module.stride),
        padding=[(module.padding, module.padding)] * 2,
        rhs_dilation=(module.dilation, module.dilation),
        dimension_numbers=("NCHW", "OIHW", "NCHW"),
        precision=jax.lax.Precision.HIGHEST)
    if module.bias is not None:
        out = out + module.bias[None, :, None, None]
    return out


if __name__ == "__main__":
    key = jax.random.PRNGKey(0)
    k_x, k_params = jax.random.split(key)

    # N=4 so batch tiling is exercised (B_tile=2) while keeping 2 parallel
    # grid steps for megacore.
    N, C_in, H, W = 4, 4, 16, 16
    C_out, ksize, stride, padding, num_bases = 8, 3, 1, 1, 6

    x = jax.random.normal(k_x, (N, C_in, H, W), jnp.float32)

    # Default (performance) path: bf16 MXU inputs, f32 accumulation.  Compared
    # against an exact f32 reference evaluated on bf16-quantized inputs.
    mod_bf16 = ConvDCF(C_in, C_out, ksize, stride=stride, padding=padding,
                       num_bases=num_bases, bias=True,
                       compute_dtype=jnp.bfloat16, key=k_params)
    out_bf16 = jax.block_until_ready(mod_bf16(x))
    ref_bf16 = reference_forward(mod_bf16, x, quantize_to=jnp.bfloat16)
    assert out_bf16.shape == ref_bf16.shape, (out_bf16.shape, ref_bf16.shape)
    assert jnp.allclose(out_bf16, ref_bf16, atol=2e-3, rtol=2e-3), \
        float(jnp.max(jnp.abs(out_bf16 - ref_bf16)))

    # Full-f32 compute path against the exact f32 reference.
    mod_f32 = ConvDCF(C_in, C_out, ksize, stride=stride, padding=padding,
                      num_bases=num_bases, bias=True,
                      compute_dtype=jnp.float32, key=k_params)
    out_f32 = jax.block_until_ready(mod_f32(x))
    ref_f32 = reference_forward(mod_f32, x)
    assert out_f32.shape == ref_f32.shape, (out_f32.shape, ref_f32.shape)
    assert jnp.allclose(out_f32, ref_f32, atol=1e-3, rtol=1e-3), \
        float(jnp.max(jnp.abs(out_f32 - ref_f32)))

    print("KERNEL_OK")
</pallas_src>

<mosaic_0001>
module attributes {stable_mosaic.version = 11 : i64} {
  func.func @_dcf_conv_kernel(%arg0: i32, %arg1: memref<2x18x18x4xbf16, #tpu.memory_space<vmem>>, %arg2: memref<128x36xbf16, #tpu.memory_space<vmem>>, %arg3: memref<128x1xf32, #tpu.memory_space<vmem>>, %arg4: memref<2x8x256xf32, #tpu.memory_space<vmem>>) attributes {dimension_semantics = [#tpu.dimension_semantics<parallel>], iteration_bounds = array<i64: 2>, scalar_prefetch = 0 : i64, scratch_operands = 0 : i64, tpu.core_type = #tpu.core_type<tc>, window_params = [{transform_indices = @transform_0, window_bounds = array<i64: 2, 18, 18, 4>}, {pipeline_mode = #tpu.pipeline_mode<synchronous>, transform_indices = @transform_1, window_bounds = array<i64: 128, 36>}, {pipeline_mode = #tpu.pipeline_mode<synchronous>, transform_indices = @transform_2, window_bounds = array<i64: 128, 1>}, {transform_indices = @transform_3, window_bounds = array<i64: 2, 8, 256>}]} {
    %c0 = arith.constant 0 : index
    %c0_0 = arith.constant 0 : index
    %0 = vector.load %arg2[%c0, %c0_0] : memref<128x36xbf16, #tpu.memory_space<vmem>>, vector<128x36xbf16>
    %c0_1 = arith.constant 0 : index
    %c0_2 = arith.constant 0 : index
    %1 = vector.load %arg3[%c0_1, %c0_2] : memref<128x1xf32, #tpu.memory_space<vmem>>, vector<8x1xf32>
    %c0_3 = arith.constant 0 : index
    %c0_4 = arith.constant 0 : index
    %c0_5 = arith.constant 0 : index
    %c0_6 = arith.constant 0 : index
    %2 = vector.load %arg1[%c0_3, %c0_4, %c0_5, %c0_6] : memref<2x18x18x4xbf16, #tpu.memory_space<vmem>>, vector<1x16x16x4xbf16>
    %3 = vector.shape_cast %2 : vector<1x16x16x4xbf16> to vector<16x16x4xbf16>
    %4 = vector.shape_cast %3 : vector<16x16x4xbf16> to vector<256x4xbf16>
    %c0_7 = arith.constant 0 : index
    %c0_8 = arith.constant 0 : index
    %c1 = arith.constant 1 : index
    %c0_9 = arith.constant 0 : index
    %5 = vector.load %arg1[%c0_7, %c0_8, %c1, %c0_9] : memref<2x18x18x4xbf16, #tpu.memory_space<vmem>>, vector<1x16x16x4xbf16>
    %6 = vector.shape_cast %5 : vector<1x16x16x4xbf16> to vector<16x16x4xbf16>
    %7 = vector.shape_cast %6 : vector<16x16x4xbf16> to vector<256x4xbf16>
    %c0_10 = arith.constant 0 : index
    %c0_11 = arith.constant 0 : index
    %c2 = arith.constant 2 : index
    %c0_12 = arith.constant 0 : index
    %8 = vector.load %arg1[%c0_10, %c0_11, %c2, %c0_12] : memref<2x18x18x4xbf16, #tpu.memory_space<vmem>>, vector<1x16x16x4xbf16>
    %9 = vector.shape_cast %8 : vector<1x16x16x4xbf16> to vector<16x16x4xbf16>
    %10 = vector.shape_cast %9 : vector<16x16x4xbf16> to vector<256x4xbf16>
    %c0_13 = arith.constant 0 : index
    %c1_14 = arith.constant 1 : index
    %c0_15 = arith.constant 0 : index
    %c0_16 = arith.constant 0 : index
    %11 = vector.load %arg1[%c0_13, %c1_14, %c0_15, %c0_16] : memref<2x18x18x4xbf16, #tpu.memory_space<vmem>>, vector<1x16x16x4xbf16>
    %12 = vector.shape_cast %11 : vector<1x16x16x4xbf16> to vector<16x16x4xbf16>
    %13 = vector.shape_cast %12 : vector<16x16x4xbf16> to vector<256x4xbf16>
    %c0_17 = arith.constant 0 : index
    %c1_18 = arith.constant 1 : index
    %c1_19 = arith.constant 1 : index
    %c0_20 = arith.constant 0 : index
    %14 = vector.load %arg1[%c0_17, %c1_18, %c1_19, %c0_20] : memref<2x18x18x4xbf16, #tpu.memory_space<vmem>>, vector<1x16x16x4xbf16>
    %15 = vector.shape_cast %14 : vector<1x16x16x4xbf16> to vector<16x16x4xbf16>
    %16 = vector.shape_cast %15 : vector<16x16x4xbf16> to vector<256x4xbf16>
    %c0_21 = arith.constant 0 : index
    %c1_22 = arith.constant 1 : index
    %c2_23 = arith.constant 2 : index
    %c0_24 = arith.constant 0 : index
    %17 = vector.load %arg1[%c0_21, %c1_22, %c2_23, %c0_24] : memref<2x18x18x4xbf16, #tpu.memory_space<vmem>>, vector<1x16x16x4xbf16>
    %18 = vector.shape_cast %17 : vector<1x16x16x4xbf16> to vector<16x16x4xbf16>
    %19 = vector.shape_cast %18 : vector<16x16x4xbf16> to vector<256x4xbf16>
    %c0_25 = arith.constant 0 : index
    %c2_26 = arith.constant 2 : index
    %c0_27 = arith.constant 0 : index
    %c0_28 = arith.constant 0 : index
    %20 = vector.load %arg1[%c0_25, %c2_26, %c0_27, %c0_28] : memref<2x18x18x4xbf16, #tpu.memory_space<vmem>>, vector<1x16x16x4xbf16>
    %21 = vector.shape_cast %20 : vector<1x16x16x4xbf16> to vector<16x16x4xbf16>
    %22 = vector.shape_cast %21 : vector<16x16x4xbf16> to vector<256x4xbf16>
    %c0_29 = arith.constant 0 : index
    %c2_30 = arith.constant 2 : index
    %c1_31 = arith.constant 1 : index
    %c0_32 = arith.constant 0 : index
    %23 = vector.load %arg1[%c0_29, %c2_30, %c1_31, %c0_32] : memref<2x18x18x4xbf16, #tpu.memory_space<vmem>>, vector<1x16x16x4xbf16>
    %24 = vector.shape_cast %23 : vector<1x16x16x4xbf16> to vector<16x16x4xbf16>
    %25 = vector.shape_cast %24 : vector<16x16x4xbf16> to vector<256x4xbf16>
    %c0_33 = arith.constant 0 : index
    %c2_34 = arith.constant 2 : index
    %c2_35 = arith.constant 2 : index
    %c0_36 = arith.constant 0 : index
    %26 = vector.load %arg1[%c0_33, %c2_34, %c2_35, %c0_36] : memref<2x18x18x4xbf16, #tpu.memory_space<vmem>>, vector<1x16x16x4xbf16>
    %27 = vector.shape_cast %26 : vector<1x16x16x4xbf16> to vector<16x16x4xbf16>
    %28 = vector.shape_cast %27 : vector<16x16x4xbf16> to vector<256x4xbf16>
    %29 = tpu.concatenate %4, %7, %10, %13, %16, %19, %22, %25, %28 in 1 : vector<256x4xbf16>, vector<256x4xbf16>, vector<256x4xbf16>, vector<256x4xbf16>, vector<256x4xbf16>, vector<256x4xbf16>, vector<256x4xbf16>, vector<256x4xbf16>, vector<256x4xbf16> -> vector<256x36xbf16>
    %cst = arith.constant dense<0.000000e+00> : vector<128x256xf32>
    %30 = tpu.matmul %0, %29, %cst {dimension_numbers = #tpu.dot_dimension_numbers<[1], [1], [0], [0], [0, 0, 1, 0], [], []>} : vector<128x36xbf16>, vector<256x36xbf16>, vector<128x256xf32> -> vector<128x256xf32>
    %31 = vector.extract_strided_slice %30 {offsets = [0, 0], sizes = [8, 256], strides = [1, 1]} : vector<128x256xf32> to vector<8x256xf32>
    %32 = vector.broadcast %1 : vector<8x1xf32> to vector<8x256xf32>
    %33 = arith.addf %31, %32 : vector<8x256xf32>
    %c0_37 = arith.constant 0 : index
    %c0_38 = arith.constant 0 : index
    %c0_39 = arith.constant 0 : index
    %34 = vector.load %arg4[%c0_37, %c0_38, %c0_39] : memref<2x8x256xf32, #tpu.memory_space<vmem>>, vector<1x8x256xf32>
    %35 = vector.shape_cast %34 : vector<1x8x256xf32> to vector<8x256xf32>
    %36 = vector.shape_cast %33 : vector<8x256xf32> to vector<1x8x256xf32>
    tpu.vector_store %arg4[%c0_37, %c0_38, %c0_39], %36 {strides = array<i32>} : memref<2x8x256xf32, #tpu.memory_space<vmem>>, vector<1x8x256xf32>,
    %c1_40 = arith.constant 1 : index
    %c0_41 = arith.constant 0 : index
    %c0_42 = arith.constant 0 : index
    %c0_43 = arith.constant 0 : index
    %37 = vector.load %arg1[%c1_40, %c0_41, %c0_42, %c0_43] : memref<2x18x18x4xbf16, #tpu.memory_space<vmem>>, vector<1x16x16x4xbf16>
    %38 = vector.shape_cast %37 : vector<1x16x16x4xbf16> to vector<16x16x4xbf16>
    %39 = vector.shape_cast %38 : vector<16x16x4xbf16> to vector<256x4xbf16>
    %c1_44 = arith.constant 1 : index
    %c0_45 = arith.constant 0 : index
    %c1_46 = arith.constant 1 : index
    %c0_47 = arith.constant 0 : index
    %40 = vector.load %arg1[%c1_44, %c0_45, %c1_46, %c0_47] : memref<2x18x18x4xbf16, #tpu.memory_space<vmem>>, vector<1x16x16x4xbf16>
    %41 = vector.shape_cast %40 : vector<1x16x16x4xbf16> to vector<16x16x4xbf16>
    %42 = vector.shape_cast %41 : vector<16x16x4xbf16> to vector<256x4xbf16>
    %c1_48 = arith.constant 1 : index
    %c0_49 = arith.constant 0 : index
    %c2_50 = arith.constant 2 : index
    %c0_51 = arith.constant 0 : index
    %43 = vector.load %arg1[%c1_48, %c0_49, %c2_50, %c0_51] : memref<2x18x18x4xbf16, #tpu.memory_space<vmem>>, vector<1x16x16x4xbf16>
    %44 = vector.shape_cast %43 : vector<1x16x16x4xbf16> to vector<16x16x4xbf16>
    %45 = vector.shape_cast %44 : vector<16x16x4xbf16> to vector<256x4xbf16>
    %c1_52 = arith.constant 1 : index
    %c1_53 = arith.constant 1 : index
    %c0_54 = arith.constant 0 : index
    %c0_55 = arith.constant 0 : index
    %46 = vector.load %arg1[%c1_52, %c1_53, %c0_54, %c0_55] : memref<2x18x18x4xbf16, #tpu.memory_space<vmem>>, vector<1x16x16x4xbf16>
    %47 = vector.shape_cast %46 : vector<1x16x16x4xbf16> to vector<16x16x4xbf16>
    %48 = vector.shape_cast %47 : vector<16x16x4xbf16> to vector<256x4xbf16>
    %c1_56 = arith.constant 1 : index
    %c1_57 = arith.constant 1 : index
    %c1_58 = arith.constant 1 : index
    %c0_59 = arith.constant 0 : index
    %49 = vector.load %arg1[%c1_56, %c1_57, %c1_58, %c0_59] : memref<2x18x18x4xbf16, #tpu.memory_space<vmem>>, vector<1x16x16x4xbf16>
    %50 = vector.shape_cast %49 : vector<1x16x16x4xbf16> to vector<16x16x4xbf16>
    %51 = vector.shape_cast %50 : vector<16x16x4xbf16> to vector<256x4xbf16>
    %c1_60 = arith.constant 1 : index
    %c1_61 = arith.constant 1 : index
    %c2_62 = arith.constant 2 : index
    %c0_63 = arith.constant 0 : index
    %52 = vector.load %arg1[%c1_60, %c1_61, %c2_62, %c0_63] : memref<2x18x18x4xbf16, #tpu.memory_space<vmem>>, vector<1x16x16x4xbf16>
    %53 = vector.shape_cast %52 : vector<1x16x16x4xbf16> to vector<16x16x4xbf16>
    %54 = vector.shape_cast %53 : vector<16x16x4xbf16> to vector<256x4xbf16>
    %c1_64 = arith.constant 1 : index
    %c2_65 = arith.constant 2 : index
    %c0_66 = arith.constant 0 : index
    %c0_67 = arith.constant 0 : index
    %55 = vector.load %arg1[%c1_64, %c2_65, %c0_66, %c0_67] : memref<2x18x18x4xbf16, #tpu.memory_space<vmem>>, vector<1x16x16x4xbf16>
    %56 = vector.shape_cast %55 : vector<1x16x16x4xbf16> to vector<16x16x4xbf16>
    %57 = vector.shape_cast %56 : vector<16x16x4xbf16> to vector<256x4xbf16>
    %c1_68 = arith.constant 1 : index
    %c2_69 = arith.constant 2 : index
    %c1_70 = arith.constant 1 : index
    %c0_71 = arith.constant 0 : index
    %58 = vector.load %arg1[%c1_68, %c2_69, %c1_70, %c0_71] : memref<2x18x18x4xbf16, #tpu.memory_space<vmem>>, vector<1x16x16x4xbf16>
    %59 = vector.shape_cast %58 : vector<1x16x16x4xbf16> to vector<16x16x4xbf16>
    %60 = vector.shape_cast %59 : vector<16x16x4xbf16> to vector<256x4xbf16>
    %c1_72 = arith.constant 1 : index
    %c2_73 = arith.constant 2 : index
    %c2_74 = arith.constant 2 : index
    %c0_75 = arith.constant 0 : index
    %61 = vector.load %arg1[%c1_72, %c2_73, %c2_74, %c0_75] : memref<2x18x18x4xbf16, #tpu.memory_space<vmem>>, vector<1x16x16x4xbf16>
    %62 = vector.shape_cast %61 : vector<1x16x16x4xbf16> to vector<16x16x4xbf16>
    %63 = vector.shape_cast %62 : vector<16x16x4xbf16> to vector<256x4xbf16>
    %64 = tpu.concatenate %39, %42, %45, %48, %51, %54, %57, %60, %63 in 1 : vector<256x4xbf16>, vector<256x4xbf16>, vector<256x4xbf16>, vector<256x4xbf16>, vector<256x4xbf16>, vector<256x4xbf16>, vector<256x4xbf16>, vector<256x4xbf16>, vector<256x4xbf16> -> vector<256x36xbf16>
    %cst_76 = arith.constant dense<0.000000e+00> : vector<128x256xf32>
    %65 = tpu.matmul %0, %64, %cst_76 {dimension_numbers = #tpu.dot_dimension_numbers<[1], [1], [0], [0], [0, 0, 1, 0], [], []>} : vector<128x36xbf16>, vector<256x36xbf16>, vector<128x256xf32> -> vector<128x256xf32>
    %66 = vector.extract_strided_slice %65 {offsets = [0, 0], sizes = [8, 256], strides = [1, 1]} : vector<128x256xf32> to vector<8x256xf32>
    %67 = vector.broadcast %1 : vector<8x1xf32> to vector<8x256xf32>
    %68 = arith.addf %66, %67 : vector<8x256xf32>
    %c1_77 = arith.constant 1 : index
    %c0_78 = arith.constant 0 : index
    %c0_79 = arith.constant 0 : index
    %69 = vector.load %arg4[%c1_77, %c0_78, %c0_79] : memref<2x8x256xf32, #tpu.memory_space<vmem>>, vector<1x8x256xf32>
    %70 = vector.shape_cast %69 : vector<1x8x256xf32> to vector<8x256xf32>
    %71 = vector.shape_cast %68 : vector<8x256xf32> to vector<1x8x256xf32>
    tpu.vector_store %arg4[%c1_77, %c0_78, %c0_79], %71 {strides = array<i32>} : memref<2x8x256xf32, #tpu.memory_space<vmem>>, vector<1x8x256xf32>,
    return
  }
  func.func @transform_0(%arg0: i32) -> (i32, i32, i32, i32) {
    %c0_i32 = arith.constant 0 : i32
    %c0_i32_0 = arith.constant 0 : i32
    %c0_i32_1 = arith.constant 0 : i32
    %c0_i32_2 = arith.constant 0 : i32
    return %arg0, %c0_i32, %c0_i32_0, %c0_i32_1 : i32, i32, i32, i32
  }
  func.func @transform_1(%arg0: i32) -> (i32, i32) {
    %c0_i32 = arith.constant 0 : i32
    %c0_i32_0 = arith.constant 0 : i32
    %c0_i32_1 = arith.constant 0 : i32
    return %c0_i32, %c0_i32_0 : i32, i32
  }
  func.func @transform_2(%arg0: i32) -> (i32, i32) {
    %c0_i32 = arith.constant 0 : i32
    %c0_i32_0 = arith.constant 0 : i32
    %c0_i32_1 = arith.constant 0 : i32
    return %c0_i32, %c0_i32_0 : i32, i32
  }
  func.func @transform_3(%arg0: i32) -> (i32, i32, i32) {
    %c0_i32 = arith.constant 0 : i32
    %c0_i32_0 = arith.constant 0 : i32
    %c0_i32_1 = arith.constant 0 : i32
    return %arg0, %c0_i32, %c0_i32_0 : i32, i32, i32
  }
}

</mosaic_0001>

<llo_original>
// kernel: conv_dcf_forward.1
$region0: #{conv_dcf_forward.1}
  #allocation0 [shape = 'u32[]', space=smem, size = 0x4, offset = 0x4, fixed_abs, tag = 'smem constant byte address 0x4 - core index']
  #allocation1 [shape = 'u32[144,128]{1,0:T(1,128)}', space=vmem, size = 0x12000, scoped, tag = 'internal scratch']
  %s0 = inlined_call_operand.hbm [shape: bf16[4,18,18,4], index: 0, kind: input, shape index: {}]
  %s1 = inlined_call_operand.hbm [shape: bf16[128,36], index: 1, kind: input, shape index: {}]
  %s2 = inlined_call_operand.hbm [shape: f32[128,1], index: 2, kind: input, shape index: {}]
  %s3 = inlined_call_operand.hbm [shape: f32[4,8,256], index: 3, kind: output, shape index: {}]
  %s4 = sld [smem:[#allocation0]]
  $region57: #{conv_dcf_forward.1} parent=0
    _
  %s6 = ssub.s32 1, %s4
  %s7 = scalar_select 0, %s6, %s4
  $region1: #{conv_dcf_forward.1} parent=0
    #allocation2 [shape = 'u8[442368]{0}', space=vmem, size = 0x6c000, scoped, tag = 'input window, operand 0']
    #allocation3 [shape = 's32[2]{0}', space=sflag, size = 0x8, scoped, tag = 'scoped memory for conv_dcf_forward.1']
    #allocation4 [shape = 's32[2]{0}', space=sflag, size = 0x8, scoped, tag = 'scoped memory for conv_dcf_forward.1']
    #allocation5 [shape = 'u8[32768]{0}', space=vmem, size = 0x8000, scoped, tag = 'input window, operand 1, single buffered']
    #allocation6 [shape = 's32[1]{0}', space=sflag, size = 0x4, scoped, tag = 'scoped memory for conv_dcf_forward.1']
    #allocation7 [shape = 'u8[65536]{0}', space=vmem, size = 0x10000, scoped, tag = 'input window, operand 2, single buffered']
    #allocation8 [shape = 'u8[32768]{0}', space=vmem, size = 0x8000, scoped, tag = 'output window, operand 0']
    %8 = vsyncpa [#allocation3], 0
    %s9 = scalar_lea.sflag [#allocation3], 1
    %10 = vsyncpa %s9, 0
    %11 = vsyncpa [#allocation6], 0
    %12 = vsyncpa [#allocation4], 0
    %s13 = scalar_lea.sflag [#allocation4], 1
    %14 = vsyncpa %s13, 0
    loop: start=0, step=1, limit=4
    $region2: #{conv_dcf_forward.1} parent=1 // loop_pre_header
      _
    $region3: #{conv_dcf_forward.1} parent=1 // loop_header
      %s16 = sphi 0, %s20
      %p17 = scmp.ge.s32.totalorder %s16, 4
      %s26 = sphi 0, %s28
      %s29 = sphi 0, %s26
      %s30 = sphi 0, %s29
      %s46 = sphi 0, %s30
      %s50 = sphi 0, %s50
      %s52 = sphi 0, %s50
      %s53 = sphi 0, %s52
      %s67 = sphi 0, %s53
      %s71 = sphi 0, %s71
      %s73 = sphi 0, %s71
      %s74 = sphi 0, %s73
      %s88 = sphi 0, %s74
      %s94 = sphi 0, %s96
      %s97 = sphi 0, %s94
      %s98 = sphi 0, %s97
      %s114 = sphi 0, %s98
    $region4: #{conv_dcf_forward.1} parent=1 // loop_header_branch
      %19 = sbr.rel (%p17) target = $region8
    $region5: #{conv_dcf_forward.1} parent=1 // loop_body
      %s21 = ssub.s32 %s16, 1
      %s22 = ssub.s32 %s16, 2
      %s23 = sadd.s32 %s16, 1
      %s24 = ssub.s32 %s16, %s23
      %p25 = scmp.eq.s32.totalorder %s24, 0
      %s27 = sadd.s32 %s26, 1
      %s28 = scalar_select %p25, %s26, %s27
      %p31 = pneg %p25
      %p32 = scmp.eq.s32.totalorder %s16, 1
      %p33 = por %p31, %p32
      %p34 = scmp.ne.s32.totalorder %s26, %s29
      %p35 = scmp.eq.s32.totalorder %s16, 0
      %p36 = por %p34, %p35
      %p37 = scmp.ne.s32.totalorder %s26, %s29
      %p38 = scmp.eq.s32.totalorder %s21, 1
      %p39 = por %p37, %p38
      %p40 = scmp.ne.s32.totalorder %s29, %s30
      %p41 = scmp.eq.s32.totalorder %s21, 0
      %p42 = por %p40, %p41
      %p43 = scmp.ne.s32.totalorder %s29, %s30
      %p44 = scmp.eq.s32.totalorder %s22, 1
      %p45 = por %p43, %p44
      %p47 = scmp.ne.s32.totalorder %s30, %s46
      %p48 = scmp.eq.s32.totalorder %s22, 0
      %p49 = por %p47, %p48
      %s51 = sadd.s32 %s50, 1
      %p54 = scmp.eq.s32.totalorder %s16, 1
      %p55 = scmp.ne.s32.totalorder %s50, %s52
      %p56 = scmp.eq.s32.totalorder %s16, 0
      %p57 = por %p55, %p56
      %p58 = scmp.ne.s32.totalorder %s50, %s52
      %p59 = scmp.eq.s32.totalorder %s21, 1
      %p60 = por %p58, %p59
      %p61 = scmp.ne.s32.totalorder %s52, %s53
      %p62 = scmp.eq.s32.totalorder %s21, 0
      %p63 = por %p61, %p62
      %p64 = scmp.ne.s32.totalorder %s52, %s53
      %p65 = scmp.eq.s32.totalorder %s22, 1
      %p66 = por %p64, %p65
      %p68 = scmp.ne.s32.totalorder %s53, %s67
      %p69 = scmp.eq.s32.totalorder %s22, 0
      %p70 = por %p68, %p69
      %s72 = sadd.s32 %s71, 1
      %p75 = scmp.eq.s32.totalorder %s16, 1
      %p76 = scmp.ne.s32.totalorder %s71, %s73
      %p77 = scmp.eq.s32.totalorder %s16, 0
      %p78 = por %p76, %p77
      %p79 = scmp.ne.s32.totalorder %s71, %s73
      %p80 = scmp.eq.s32.totalorder %s21, 1
      %p81 = por %p79, %p80
      %p82 = scmp.ne.s32.totalorder %s73, %s74
      %p83 = scmp.eq.s32.totalorder %s21, 0
      %p84 = por %p82, %p83
      %p85 = scmp.ne.s32.totalorder %s73, %s74
      %p86 = scmp.eq.s32.totalorder %s22, 1
      %p87 = por %p85, %p86
      %p89 = scmp.ne.s32.totalorder %s74, %s88
      %p90 = scmp.eq.s32.totalorder %s22, 0
      %p91 = por %p89, %p90
      %s92 = ssub.s32 %s16, %s23
      %p93 = scmp.eq.s32.totalorder %s92, 0
      %s95 = sadd.s32 %s94, 1
      %s96 = scalar_select %p93, %s94, %s95
      %p99 = pneg %p93
      %p100 = scmp.eq.s32.totalorder %s16, 1
      %p101 = por %p99, %p100
      %p102 = scmp.ne.s32.totalorder %s94, %s97
      %p103 = scmp.eq.s32.totalorder %s16, 0
      %p104 = por %p102, %p103
      %p105 = scmp.ne.s32.totalorder %s94, %s97
      %p106 = scmp.eq.s32.totalorder %s21, 1
      %p107 = por %p105, %p106
      %p108 = scmp.ne.s32.totalorder %s97, %s98
      %p109 = scmp.eq.s32.totalorder %s21, 0
      %p110 = por %p108, %p109
      %p111 = scmp.ne.s32.totalorder %s97, %s98
      %p112 = scmp.eq.s32.totalorder %s22, 1
      %p113 = por %p111, %p112
      %p115 = scmp.ne.s32.totalorder %s98, %s114
      %p116 = scmp.eq.s32.totalorder %s22, 0
      %p117 = por %p115, %p116
      %p118 = scmp.le.s32.totalorder 1, %s16
      %p119 = scmp.lt.s32.totalorder %s16, 3
      %p120 = pnand %p118, %p119
      %p121 = pneg %p120
      // Predicated region
      $region9: #{conv_dcf_forward.1} parent=5 // pred_check
        _
      $region10: #{conv_dcf_forward.1} parent=5 // pred_check_branch
        %123 = sbr.rel (%p120) target = $region12
      $region11: #{conv_dcf_forward.1} parent=5 // pred_region
        %s124 = ssub.s32 %s16, 1
        // Predicated region
        $region13: #{conv_dcf_forward.1} parent=11 // pred_check
          %p125 = pneg %p63
        $region14: #{conv_dcf_forward.1} parent=11 // pred_check_branch
          %127 = sbr.rel (%p125) target = $region16
        $region15: #{conv_dcf_forward.1} parent=11 // pred_region
          %s129 = ssub.s32 1024, 1024
          %130 = vsyncadd [#allocation6], %s129
          %s131 = sshll.u32 [#allocation5], 4
          %s132 = int_to_ptr.vmem [resolvable:$true] %s131
          %137 = dma.hbm_to_vmem [thread:$0]  %s1, 1024, %s132, [#allocation6], 64, 64, 4
        $region16: #{conv_dcf_forward.1} parent=11 // pred_fallthru
          _
        // Predicated region
        $region17: #{conv_dcf_forward.1} parent=11 // pred_check
          %p138 = pneg %p84
        $region18: #{conv_dcf_forward.1} parent=11 // pred_check_branch
          %140 = sbr.rel (%p138) target = $region20
        $region19: #{conv_dcf_forward.1} parent=11 // pred_region
          %s142 = ssub.s32 2048, 2048
          %143 = vsyncadd [#allocation6], %s142
          %s144 = sshll.u32 [#allocation7], 4
          %s145 = int_to_ptr.vmem [resolvable:$true] %s144
          %150 = dma.hbm_to_vmem [thread:$0]  %s2, 2048, %s145, [#allocation6], 128, 128, 8
        $region20: #{conv_dcf_forward.1} parent=11 // pred_fallthru
          _
      $region12: #{conv_dcf_forward.1} parent=5 // pred_fallthru
        _
      %p151 = scmp.lt.s32.totalorder %s16, 2
      // Predicated region
      $region21: #{conv_dcf_forward.1} parent=5 // pred_check
        %p152 = pneg %p151
      $region22: #{conv_dcf_forward.1} parent=5 // pred_check_branch
        %154 = sbr.rel (%p152) target = $region24
      $region23: #{conv_dcf_forward.1} parent=5 // pred_region
        // Predicated region
        $region25: #{conv_dcf_forward.1} parent=23 // pred_check
          %p155 = pneg %p36
        $region26: #{conv_dcf_forward.1} parent=23 // pred_check_branch
          %157 = sbr.rel (%p155) target = $region28
        $region27: #{conv_dcf_forward.1} parent=23 // pred_region
          %s158 = sand.u32 %s26, 1
          %s159 = scalar_lea.sflag [#allocation3], %s158
          %s160 = sand.u32 %s26, 1
          %s161 = smul.addr %s160, 432
          %s162 = scalar_lea.vmem [#allocation2], %s161
          %s163 = smul.u32 2, %s16
          %s165 = ssub.s32 6912, 6912
          %166 = vsyncadd %s159, %s165
          %s167 = smul.addr %s163, 54
          %s168 = smul.addr %s167, 64
          %s169 = scalar_lea.hbm %s0, %s168
          %s170 = sshll.u32 %s162, 4
          %s171 = int_to_ptr.vmem [resolvable:$true] %s170
          %176 = dma.hbm_to_vmem [thread:$0]  %s169, 6912, %s171, %s159, 64, 64, 4
        $region28: #{conv_dcf_forward.1} parent=23 // pred_fallthru
          _
      $region24: #{conv_dcf_forward.1} parent=5 // pred_fallthru
        _
      %p177 = scmp.le.s32.totalorder 1, %s16
      %p178 = scmp.lt.s32.totalorder %s16, 3
      %p179 = pnand %p177, %p178
      %p180 = pneg %p179
      // Predicated region
      $region29: #{conv_dcf_forward.1} parent=5 // pred_check
        _
      $region30: #{conv_dcf_forward.1} parent=5 // pred_check_branch
        %182 = sbr.rel (%p179) target = $region32
      $region31: #{conv_dcf_forward.1} parent=5 // pred_region
        %s183 = ssub.s32 %s16, 1
        %s184 = sand.u32 %s29, 1
        %s185 = scalar_lea.sflag [#allocation3], %s184
        %s186 = sand.u32 %s29, 1
        %s187 = smul.addr %s186, 432
        %s188 = scalar_lea.vmem [#allocation2], %s187
        // Predicated region
        $region33: #{conv_dcf_forward.1} parent=31 // pred_check
          %p189 = pneg %p42
        $region34: #{conv_dcf_forward.1} parent=31 // pred_check_branch
          %191 = sbr.rel (%p189) target = $region36
        $region35: #{conv_dcf_forward.1} parent=31 // pred_region
          %192 = dma.done %s185, 6912
        $region36: #{conv_dcf_forward.1} parent=31 // pred_fallthru
          _
        // Predicated region
        $region37: #{conv_dcf_forward.1} parent=31 // pred_check
          %p193 = pneg %p63
        $region38: #{conv_dcf_forward.1} parent=31 // pred_check_branch
          %195 = sbr.rel (%p193) target = $region40
        $region39: #{conv_dcf_forward.1} parent=31 // pred_region
          %196 = dma.done [#allocation6], 1024
        $region40: #{conv_dcf_forward.1} parent=31 // pred_fallthru
          _
        // Predicated region
        $region41: #{conv_dcf_forward.1} parent=31 // pred_check
          %p197 = pneg %p84
        $region42: #{conv_dcf_forward.1} parent=31 // pred_check_branch
          %199 = sbr.rel (%p197) target = $region44
        $region43: #{conv_dcf_forward.1} parent=31 // pred_region
          %200 = dma.done [#allocation6], 2048
        $region44: #{conv_dcf_forward.1} parent=31 // pred_fallthru
          _
        %s201 = sand.u32 %s29, 1
        %s202 = scalar_lea.sflag [#allocation3], %s201
        %s203 = sand.u32 %s29, 1
        %s204 = smul.addr %s203, 432
        %s205 = scalar_lea.vmem [#allocation2], %s204
        %p206 = pneg %p42
        %p207 = pneg %p39
        %p208 = pneg %p63
        %p209 = pneg %p60
        %p210 = pneg %p84
        %p211 = pneg %p81
        %p212 = pneg %p110
        %p213 = pneg %p107
        %s214 = sand.u32 %s97, 1
        %s215 = scalar_lea.sflag [#allocation4], %s214
        %s216 = sand.u32 %s97, 1
        %s217 = smul.addr %s216, 32
        %s218 = scalar_lea.vmem [#allocation8], %s217
        %s219 = smul.u32 2, %s21
        %s220 = smul.u32 2, %s21
        %v222 = vld [vmem:[#allocation5] sm:$0xf]
        %v223 = vld [vmem:[#allocation5 + $0x4] sm:$0xf]
        %v224 = vld [vmem:[#allocation5 + $0x8] sm:$0xf]
        %v225 = vld [vmem:[#allocation5 + $0xc] sm:$0xf]
        %v226 = vld [vmem:[#allocation5 + $0x10] sm:$0xf]
        %v227 = vld [vmem:[#allocation5 + $0x14] sm:$0xf]
        %v228 = vld [vmem:[#allocation5 + $0x18] sm:$0xf]
        %v229 = vld [vmem:[#allocation5 + $0x1c] sm:$0xf]
        %v230 = vld [vmem:[#allocation5 + $0x20] sm:$0xf]
        %v231 = vld [vmem:[#allocation5 + $0x24] sm:$0xf]
        %v232 = vld [vmem:[#allocation5 + $0x28] sm:$0xf]
        %v233 = vld [vmem:[#allocation5 + $0x2c] sm:$0xf]
        %v234 = vld [vmem:[#allocation5 + $0x30] sm:$0xf]
        %v235 = vld [vmem:[#allocation5 + $0x34] sm:$0xf]
        %v236 = vld [vmem:[#allocation5 + $0x38] sm:$0xf]
        %v237 = vld [vmem:[#allocation5 + $0x3c] sm:$0xf]
        %v238 = vld [vmem:[#allocation7] sm:$0xff]
        %v239 = vld [vmem:[%s188] sm:$0xf]
        %v240 = vld [vmem:[%s188 + $0x4] sm:$0xf]
        %v241 = vld [vmem:[%s188 + $0xc] sm:$0xf]
        %v242 = vld [vmem:[%s188 + $0x10] sm:$0xf]
        %v243 = vld [vmem:[%s188 + $0x18] sm:$0xf]
        %v244 = vld [vmem:[%s188 + $0x1c] sm:$0xf]
        %v245 = vld [vmem:[%s188 + $0x24] sm:$0xf]
        %v246 = vld [vmem:[%s188 + $0x28] sm:$0xf]
        %v247 = vld [vmem:[%s188 + $0x30] sm:$0xf]
        %v248 = vld [vmem:[%s188 + $0x34] sm:$0xf]
        %v249 = vld [vmem:[%s188 + $0x3c] sm:$0xf]
        %v250 = vld [vmem:[%s188 + $0x40] sm:$0xf]
        %v251 = vld [vmem:[%s188 + $0x48] sm:$0xf]
        %v252 = vld [vmem:[%s188 + $0x4c] sm:$0xf]
        %v253 = vld [vmem:[%s188 + $0x54] sm:$0xf]
        %v254 = vld [vmem:[%s188 + $0x58] sm:$0xf]
        %v255 = vld [vmem:[%s188 + $0x60] sm:$0xf]
        %v256 = vld [vmem:[%s188 + $0x64] sm:$0xf]
        %v257 = vld [vmem:[%s188 + $0x6c] sm:$0xf]
        %v258 = vld [vmem:[%s188 + $0x70] sm:$0xf]
        %v259 = vld [vmem:[%s188 + $0x78] sm:$0xf]
        %v260 = vld [vmem:[%s188 + $0x7c] sm:$0xf]
        %v261 = vld [vmem:[%s188 + $0x84] sm:$0xf]
        %v262 = vld [vmem:[%s188 + $0x88] sm:$0xf]
        %v263 = vld [vmem:[%s188 + $0x90] sm:$0xf]
        %v264 = vld [vmem:[%s188 + $0x94] sm:$0xf]
        %v265 = vld [vmem:[%s188 + $0x9c] sm:$0xf]
        %v266 = vld [vmem:[%s188 + $0xa0] sm:$0xf]
        %v267 = vld [vmem:[%s188 + $0xa8] sm:$0xf]
        %v268 = vld [vmem:[%s188 + $0xac] sm:$0xf]
        %v269 = vld [vmem:[%s188 + $0xb4] sm:$0xf]
        %v270 = vld [vmem:[%s188 + $0xb8] sm:$0xf]
        %v271 = vld [vmem:[%s188 + $0x8] sm:$0x1]
        %v272 = vld [vmem:[%s188 + $0x14] sm:$0x1]
        %v273 = vld [vmem:[%s188 + $0x20] sm:$0x1]
        %v274 = vld [vmem:[%s188 + $0x2c] sm:$0x1]
        %v275 = vld [vmem:[%s188 + $0x38] sm:$0x1]
        %v276 = vld [vmem:[%s188 + $0x44] sm:$0x1]
        %v277 = vld [vmem:[%s188 + $0x50] sm:$0x1]
        %v278 = vld [vmem:[%s188 + $0x5c] sm:$0x1]
        %v279 = vld [vmem:[%s188 + $0x68] sm:$0x1]
        %v280 = vld [vmem:[%s188 + $0x74] sm:$0x1]
        %v281 = vld [vmem:[%s188 + $0x80] sm:$0x1]
        %v282 = vld [vmem:[%s188 + $0x8c] sm:$0x1]
        %v283 = vld [vmem:[%s188 + $0x98] sm:$0x1]
        %v284 = vld [vmem:[%s188 + $0xa4] sm:$0x1]
        %v285 = vld [vmem:[%s188 + $0xb0] sm:$0x1]
        %v286 = vld [vmem:[%s188 + $0xbc] sm:$0x1]
        %vm287 = vsmask.f32 3328
        %vm288 = vsmask.f32 7440
        %vm289 = vmor %vm287, %vm288
        %v291 = vshrl.u32 %v239, 16
        %v293 = vrot.slane %v291, 4
        %v294 = vshll.u32 %v239, 16
        %v296 = vrot.slane %v294, 5
        %v297 = vor.u32 %v293, %v296
        %v298 = vrot.slane %v297, 4
        %v300 = vshll.u32 %v240, 16
        %v302 = vrot.slane %v300, 5
        %v303 = vsel %vm289, %v298, %v302
        %v304 = vshrl.u32 %v240, 16
        %v306 = vrot.slane %v304, 4
        %v307 = vor.u32 %v306, %v302
        %v308 = vrot.slane %v307, 4
        %v310 = vshll.u32 %v271, 16
        %v312 = vrot.slane %v310, 5
        %v313 = vsel %vm289, %v308, %v312
        %v315 = vshrl.u32 %v241, 16
        %v317 = vrot.slane %v315, 4
        %v318 = vshll.u32 %v241, 16
        %v320 = vrot.slane %v318, 5
        %v321 = vor.u32 %v317, %v320
        %v322 = vrot.slane %v321, 4
        %v324 = vshll.u32 %v242, 16
        %v326 = vrot.slane %v324, 5
        %v327 = vsel %vm289, %v322, %v326
        %v328 = vshrl.u32 %v242, 16
        %v330 = vrot.slane %v328, 4
        %v331 = vor.u32 %v330, %v326
        %v332 = vrot.slane %v331, 4
        %v334 = vshll.u32 %v272, 16
        %v336 = vrot.slane %v334, 5
        %v337 = vsel %vm289, %v332, %v336
        %v339 = vshrl.u32 %v243, 16
        %v341 = vrot.slane %v339, 4
        %v342 = vshll.u32 %v243, 16
        %v344 = vrot.slane %v342, 5
        %v345 = vor.u32 %v341, %v344
        %v346 = vrot.slane %v345, 4
        %v348 = vshll.u32 %v244, 16
        %v350 = vrot.slane %v348, 5
        %v351 = vsel %vm289, %v346, %v350
        %v352 = vshrl.u32 %v244, 16
        %v354 = vrot.slane %v352, 4
        %v355 = vor.u32 %v354, %v350
        %v356 = vrot.slane %v355, 4
        %v358 = vshll.u32 %v273, 16
        %v360 = vrot.slane %v358, 5
        %v361 = vsel %vm289, %v356, %v360
        %v363 = vshrl.u32 %v245, 16
        %v365 = vrot.slane %v363, 4
        %v366 = vshll.u32 %v245, 16
        %v368 = vrot.slane %v366, 5
        %v369 = vor.u32 %v365, %v368
        %v370 = vrot.slane %v369, 4
        %v372 = vshll.u32 %v246, 16
        %v374 = vrot.slane %v372, 5
        %v375 = vsel %vm289, %v370, %v374
        %v376 = vshrl.u32 %v246, 16
        %v378 = vrot.slane %v376, 4
        %v379 = vor.u32 %v378, %v374
        %v380 = vrot.slane %v379, 4
        %v382 = vshll.u32 %v274, 16
        %v384 = vrot.slane %v382, 5
        %v385 = vsel %vm289, %v380, %v384
        %v387 = vshrl.u32 %v247, 16
        %v389 = vrot.slane %v387, 4
        %v390 = vshll.u32 %v247, 16
        %v392 = vrot.slane %v390, 5
        %v393 = vor.u32 %v389, %v392
        %v394 = vrot.slane %v393, 4
        %v396 = vshll.u32 %v248, 16
        %v398 = vrot.slane %v396, 5
        %v399 = vsel %vm289, %v394, %v398
        %v400 = vshrl.u32 %v248, 16
        %v402 = vrot.slane %v400, 4
        %v403 = vor.u32 %v402, %v398
        %v404 = vrot.slane %v403, 4
        %v406 = vshll.u32 %v275, 16
        %v408 = vrot.slane %v406, 5
        %v409 = vsel %vm289, %v404, %v408
        %v411 = vshrl.u32 %v249, 16
        %v413 = vrot.slane %v411, 4
        %v414 = vshll.u32 %v249, 16
        %v416 = vrot.slane %v414, 5
        %v417 = vor.u32 %v413, %v416
        %v418 = vrot.slane %v417, 4
        %v420 = vshll.u32 %v250, 16
        %v422 = vrot.slane %v420, 5
        %v423 = vsel %vm289, %v418, %v422
        %v424 = vshrl.u32 %v250, 16
        %v426 = vrot.slane %v424, 4
        %v427 = vor.u32 %v426, %v422
        %v428 = vrot.slane %v427, 4
        %v430 = vshll.u32 %v276, 16
        %v432 = vrot.slane %v430, 5
        %v433 = vsel %vm289, %v428, %v432
        %v435 = vshrl.u32 %v251, 16
        %v437 = vrot.slane %v435, 4
        %v438 = vshll.u32 %v251, 16
        %v440 = vrot.slane %v438, 5
        %v441 = vor.u32 %v437, %v440
        %v442 = vrot.slane %v441, 4
        %v444 = vshll.u32 %v252, 16
        %v446 = vrot.slane %v444, 5
        %v447 = vsel %vm289, %v442, %v446
        %v448 = vshrl.u32 %v252, 16
        %v450 = vrot.slane %v448, 4
        %v451 = vor.u32 %v450, %v446
        %v452 = vrot.slane %v451, 4
        %v454 = vshll.u32 %v277, 16
        %v456 = vrot.slane %v454, 5
        %v457 = vsel %vm289, %v452, %v456
        %v459 = vshrl.u32 %v253, 16
        %v461 = vrot.slane %v459, 4
        %v462 = vshll.u32 %v253, 16
        %v464 = vrot.slane %v462, 5
        %v465 = vor.u32 %v461, %v464
        %v466 = vrot.slane %v465, 4
        %v468 = vshll.u32 %v254, 16
        %v470 = vrot.slane %v468, 5
        %v471 = vsel %vm289, %v466, %v470
        %v472 = vshrl.u32 %v254, 16
        %v474 = vrot.slane %v472, 4
        %v475 = vor.u32 %v474, %v470
        %v476 = vrot.slane %v475, 4
        %v478 = vshll.u32 %v278, 16
        %v480 = vrot.slane %v478, 5
        %v481 = vsel %vm289, %v476, %v480
        %v483 = vshrl.u32 %v255, 16
        %v485 = vrot.slane %v483, 4
        %v486 = vshll.u32 %v255, 16
        %v488 = vrot.slane %v486, 5
        %v489 = vor.u32 %v485, %v488
        %v490 = vrot.slane %v489, 4
        %v492 = vshll.u32 %v256, 16
        %v494 = vrot.slane %v492, 5
        %v495 = vsel %vm289, %v490, %v494
        %v496 = vshrl.u32 %v256, 16
        %v498 = vrot.slane %v496, 4
        %v499 = vor.u32 %v498, %v494
        %v500 = vrot.slane %v499, 4
        %v502 = vshll.u32 %v279, 16
        %v504 = vrot.slane %v502, 5
        %v505 = vsel %vm289, %v500, %v504
        %v507 = vshrl.u32 %v257, 16
        %v509 = vrot.slane %v507, 4
        %v510 = vshll.u32 %v257, 16
        %v512 = vrot.slane %v510, 5
        %v513 = vor.u32 %v509, %v512
        %v514 = vrot.slane %v513, 4
        %v516 = vshll.u32 %v258, 16
        %v518 = vrot.slane %v516, 5
        %v519 = vsel %vm289, %v514, %v518
        %v520 = vshrl.u32 %v258, 16
        %v522 = vrot.slane %v520, 4
        %v523 = vor.u32 %v522, %v518
        %v524 = vrot.slane %v523, 4
        %v526 = vshll.u32 %v280, 16
        %v528 = vrot.slane %v526, 5
        %v529 = vsel %vm289, %v524, %v528
        %v531 = vshrl.u32 %v259, 16
        %v533 = vrot.slane %v531, 4
        %v534 = vshll.u32 %v259, 16
        %v536 = vrot.slane %v534, 5
        %v537 = vor.u32 %v533, %v536
        %v538 = vrot.slane %v537, 4
        %v540 = vshll.u32 %v260, 16
        %v542 = vrot.slane %v540, 5
        %v543 = vsel %vm289, %v538, %v542
        %v544 = vshrl.u32 %v260, 16
        %v546 = vrot.slane %v544, 4
        %v547 = vor.u32 %v546, %v542
        %v548 = vrot.slane %v547, 4
        %v550 = vshll.u32 %v281, 16
        %v552 = vrot.slane %v550, 5
        %v553 = vsel %vm289, %v548, %v552
        %v555 = vshrl.u32 %v261, 16
        %v557 = vrot.slane %v555, 4
        %v558 = vshll.u32 %v261, 16
        %v560 = vrot.slane %v558, 5
        %v561 = vor.u32 %v557, %v560
        %v562 = vrot.slane %v561, 4
        %v564 = vshll.u32 %v262, 16
        %v566 = vrot.slane %v564, 5
        %v567 = vsel %vm289, %v562, %v566
        %v568 = vshrl.u32 %v262, 16
        %v570 = vrot.slane %v568, 4
        %v571 = vor.u32 %v570, %v566
        %v572 = vrot.slane %v571, 4
        %v574 = vshll.u32 %v282, 16
        %v576 = vrot.slane %v574, 5
        %v577 = vsel %vm289, %v572, %v576
        %v579 = vshrl.u32 %v263, 16
        %v581 = vrot.slane %v579, 4
        %v582 = vshll.u32 %v263, 16
        %v584 = vrot.slane %v582, 5
        %v585 = vor.u32 %v581, %v584
        %v586 = vrot.slane %v585, 4
        %v588 = vshll.u32 %v264, 16
        %v590 = vrot.slane %v588, 5
        %v591 = vsel %vm289, %v586, %v590
        %v592 = vshrl.u32 %v264, 16
        %v594 = vrot.slane %v592, 4
        %v595 = vor.u32 %v594, %v590
        %v596 = vrot.slane %v595, 4
        %v598 = vshll.u32 %v283, 16
        %v600 = vrot.slane %v598, 5
        %v601 = vsel %vm289, %v596, %v600
        %v603 = vshrl.u32 %v265, 16
        %v605 = vrot.slane %v603, 4
        %v606 = vshll.u32 %v265, 16
        %v608 = vrot.slane %v606, 5
        %v609 = vor.u32 %v605, %v608
        %v610 = vrot.slane %v609, 4
        %v612 = vshll.u32 %v266, 16
        %v614 = vrot.slane %v612, 5
        %v615 = vsel %vm289, %v610, %v614
        %v616 = vshrl.u32 %v266, 16
        %v618 = vrot.slane %v616, 4
        %v619 = vor.u32 %v618, %v614
        %v620 = vrot.slane %v619, 4
        %v622 = vshll.u32 %v284, 16
        %v624 = vrot.slane %v622, 5
        %v625 = vsel %vm289, %v620, %v624
        %v627 = vshrl.u32 %v267, 16
        %v629 = vrot.slane %v627, 4
        %v630 = vshll.u32 %v267, 16
        %v632 = vrot.slane %v630, 5
        %v633 = vor.u32 %v629, %v632
        %v634 = vrot.slane %v633, 4
        %v636 = vshll.u32 %v268, 16
        %v638 = vrot.slane %v636, 5
        %v639 = vsel %vm289, %v634, %v638
        %v640 = vshrl.u32 %v268, 16
        %v642 = vrot.slane %v640, 4
        %v643 = vor.u32 %v642, %v638
        %v644 = vrot.slane %v643, 4
        %v646 = vshll.u32 %v285, 16
        %v648 = vrot.slane %v646, 5
        %v649 = vsel %vm289, %v644, %v648
        %v651 = vshrl.u32 %v269, 16
        %v653 = vrot.slane %v651, 4
        %v654 = vshll.u32 %v269, 16
        %v656 = vrot.slane %v654, 5
        %v657 = vor.u32 %v653, %v656
        %v658 = vrot.slane %v657, 4
        %v660 = vshll.u32 %v270, 16
        %v662 = vrot.slane %v660, 5
        %v663 = vsel %vm289, %v658, %v662
        %v664 = vshrl.u32 %v270, 16
        %v666 = vrot.slane %v664, 4
        %v667 = vor.u32 %v666, %v662
        %v668 = vrot.slane %v667, 4
        %v670 = vshll.u32 %v286, 16
        %v672 = vrot.slane %v670, 5
        %v673 = vsel %vm289, %v668, %v672
        %v674 = vld [vmem:[%s188] sm:$0xe]
        %v675 = vld [vmem:[%s188 + $0xc] sm:$0xe]
        %v676 = vld [vmem:[%s188 + $0x18] sm:$0xe]
        %v677 = vld [vmem:[%s188 + $0x24] sm:$0xe]
        %v678 = vld [vmem:[%s188 + $0x30] sm:$0xe]
        %v679 = vld [vmem:[%s188 + $0x3c] sm:$0xe]
        %v680 = vld [vmem:[%s188 + $0x48] sm:$0xe]
        %v681 = vld [vmem:[%s188 + $0x54] sm:$0xe]
        %v682 = vld [vmem:[%s188 + $0x60] sm:$0xe]
        %v683 = vld [vmem:[%s188 + $0x6c] sm:$0xe]
        %v684 = vld [vmem:[%s188 + $0x78] sm:$0xe]
        %v685 = vld [vmem:[%s188 + $0x84] sm:$0xe]
        %v686 = vld [vmem:[%s188 + $0x90] sm:$0xe]
        %v687 = vld [vmem:[%s188 + $0x9c] sm:$0xe]
        %v688 = vld [vmem:[%s188 + $0xa8] sm:$0xe]
        %v689 = vld [vmem:[%s188 + $0xb4] sm:$0xe]
        %vm738 = vcmask 1042432
        %vm739 = vcmask 1046532
        %vm740 = vmor %vm738, %vm739
        %v741 = vrot.slane %v674, 5
        %v742 = vrot.slane %v741, 4
        %v743 = vrot.slane %v240, 5
        %v744 = vsel %vm740, %v742, %v743
        %v745 = vrot.slane %v743, 4
        %v746 = vrot.slane %v271, 5
        %v747 = vsel %vm740, %v745, %v746
        %v748 = vrot.slane %v675, 5
        %v749 = vrot.slane %v748, 4
        %v750 = vrot.slane %v242, 5
        %v751 = vsel %vm740, %v749, %v750
        %v752 = vrot.slane %v750, 4
        %v753 = vrot.slane %v272, 5
        %v754 = vsel %vm740, %v752, %v753
        %v755 = vrot.slane %v676, 5
        %v756 = vrot.slane %v755, 4
        %v757 = vrot.slane %v244, 5
        %v758 = vsel %vm740, %v756, %v757
        %v759 = vrot.slane %v757, 4
        %v760 = vrot.slane %v273, 5
        %v761 = vsel %vm740, %v759, %v760
        %v762 = vrot.slane %v677, 5
        %v763 = vrot.slane %v762, 4
        %v764 = vrot.slane %v246, 5
        %v765 = vsel %vm740, %v763, %v764
        %v766 = vrot.slane %v764, 4
        %v767 = vrot.slane %v274, 5
        %v768 = vsel %vm740, %v766, %v767
        %v769 = vrot.slane %v678, 5
        %v770 = vrot.slane %v769, 4
        %v771 = vrot.slane %v248, 5
        %v772 = vsel %vm740, %v770, %v771
        %v773 = vrot.slane %v771, 4
        %v774 = vrot.slane %v275, 5
        %v775 = vsel %vm740, %v773, %v774
        %v776 = vrot.slane %v679, 5
        %v777 = vrot.slane %v776, 4
        %v778 = vrot.slane %v250, 5
        %v779 = vsel %vm740, %v777, %v778
        %v780 = vrot.slane %v778, 4
        %v781 = vrot.slane %v276, 5
        %v782 = vsel %vm740, %v780, %v781
        %v783 = vrot.slane %v680, 5
        %v784 = vrot.slane %v783, 4
        %v785 = vrot.slane %v252, 5
        %v786 = vsel %vm740, %v784, %v785
        %v787 = vrot.slane %v785, 4
        %v788 = vrot.slane %v277, 5
        %v789 = vsel %vm740, %v787, %v788
        %v790 = vrot.slane %v681, 5
        %v791 = vrot.slane %v790, 4
        %v792 = vrot.slane %v254, 5
        %v793 = vsel %vm740, %v791, %v792
        %v794 = vrot.slane %v792, 4
        %v795 = vrot.slane %v278, 5
        %v796 = vsel %vm740, %v794, %v795
        %v797 = vrot.slane %v682, 5
        %v798 = vrot.slane %v797, 4
        %v799 = vrot.slane %v256, 5
        %v800 = vsel %vm740, %v798, %v799
        %v801 = vrot.slane %v799, 4
        %v802 = vrot.slane %v279, 5
        %v803 = vsel %vm740, %v801, %v802
        %v804 = vrot.slane %v683, 5
        %v805 = vrot.slane %v804, 4
        %v806 = vrot.slane %v258, 5
        %v807 = vsel %vm740, %v805, %v806
        %v808 = vrot.slane %v806, 4
        %v809 = vrot.slane %v280, 5
        %v810 = vsel %vm740, %v808, %v809
        %v811 = vrot.slane %v684, 5
        %v812 = vrot.slane %v811, 4
        %v813 = vrot.slane %v260, 5
        %v814 = vsel %vm740, %v812, %v813
        %v815 = vrot.slane %v813, 4
        %v816 = vrot.slane %v281, 5
        %v817 = vsel %vm740, %v815, %v816
        %v818 = vrot.slane %v685, 5
        %v819 = vrot.slane %v818, 4
        %v820 = vrot.slane %v262, 5
        %v821 = vsel %vm740, %v819, %v820
        %v822 = vrot.slane %v820, 4
        %v823 = vrot.slane %v282, 5
        %v824 = vsel %vm740, %v822, %v823
        %v825 = vrot.slane %v686, 5
        %v826 = vrot.slane %v825, 4
        %v827 = vrot.slane %v264, 5
        %v828 = vsel %vm740, %v826, %v827
        %v829 = vrot.slane %v827, 4
        %v830 = vrot.slane %v283, 5
        %v831 = vsel %vm740, %v829, %v830
        %v832 = vrot.slane %v687, 5
        %v833 = vrot.slane %v832, 4
        %v834 = vrot.slane %v266, 5
        %v835 = vsel %vm740, %v833, %v834
        %v836 = vrot.slane %v834, 4
        %v837 = vrot.slane %v284, 5
        %v838 = vsel %vm740, %v836, %v837
        %v839 = vrot.slane %v688, 5
        %v840 = vrot.slane %v839, 4
        %v841 = vrot.slane %v268, 5
        %v842 = vsel %vm740, %v840, %v841
        %v843 = vrot.slane %v841, 4
        %v844 = vrot.slane %v285, 5
        %v845 = vsel %vm740, %v843, %v844
        %v846 = vrot.slane %v689, 5
        %v847 = vrot.slane %v846, 4
        %v848 = vrot.slane %v270, 5
        %v849 = vsel %vm740, %v847, %v848
        %v850 = vrot.slane %v848, 4
        %v851 = vrot.slane %v286, 5
        %v852 = vsel %vm740, %v850, %v851
        %s853 = scalar_lea.vmem %s188, 12 [#allocation2]
        %v854 = vld [vmem:[%s853] sm:$0xf]
        %v855 = vld [vmem:[%s853 + $0x4] sm:$0xf]
        %v856 = vld [vmem:[%s853 + $0xc] sm:$0xf]
        %v857 = vld [vmem:[%s853 + $0x10] sm:$0xf]
        %v858 = vld [vmem:[%s853 + $0x18] sm:$0xf]
        %v859 = vld [vmem:[%s853 + $0x1c] sm:$0xf]
        %v860 = vld [vmem:[%s853 + $0x24] sm:$0xf]
        %v861 = vld [vmem:[%s853 + $0x28] sm:$0xf]
        %v862 = vld [vmem:[%s853 + $0x30] sm:$0xf]
        %v863 = vld [vmem:[%s853 + $0x34] sm:$0xf]
        %v864 = vld [vmem:[%s853 + $0x3c] sm:$0xf]
        %v865 = vld [vmem:[%s853 + $0x40] sm:$0xf]
        %v866 = vld [vmem:[%s853 + $0x48] sm:$0xf]
        %v867 = vld [vmem:[%s853 + $0x4c] sm:$0xf]
        %v868 = vld [vmem:[%s853 + $0x54] sm:$0xf]
        %v869 = vld [vmem:[%s853 + $0x58] sm:$0xf]
        %v870 = vld [vmem:[%s853 + $0x60] sm:$0xf]
        %v871 = vld [vmem:[%s853 + $0x64] sm:$0xf]
        %v872 = vld [vmem:[%s853 + $0x6c] sm:$0xf]
        %v873 = vld [vmem:[%s853 + $0x70] sm:$0xf]
        %v874 = vld [vmem:[%s853 + $0x78] sm:$0xf]
        %v875 = vld [vmem:[%s853 + $0x7c] sm:$0xf]
        %v876 = vld [vmem:[%s853 + $0x84] sm:$0xf]
        %v877 = vld [vmem:[%s853 + $0x88] sm:$0xf]
        %v878 = vld [vmem:[%s853 + $0x90] sm:$0xf]
        %v879 = vld [vmem:[%s853 + $0x94] sm:$0xf]
        %v880 = vld [vmem:[%s853 + $0x9c] sm:$0xf]
        %v881 = vld [vmem:[%s853 + $0xa0] sm:$0xf]
        %v882 = vld [vmem:[%s853 + $0xa8] sm:$0xf]
        %v883 = vld [vmem:[%s853 + $0xac] sm:$0xf]
        %v884 = vld [vmem:[%s853 + $0xb4] sm:$0xf]
        %v885 = vld [vmem:[%s853 + $0xb8] sm:$0xf]
        %v886 = vld [vmem:[%s853 + $0x8] sm:$0x1]
        %v887 = vld [vmem:[%s853 + $0x14] sm:$0x1]
        %v888 = vld [vmem:[%s853 + $0x20] sm:$0x1]
        %v889 = vld [vmem:[%s853 + $0x2c] sm:$0x1]
        %v890 = vld [vmem:[%s853 + $0x38] sm:$0x1]
        %v891 = vld [vmem:[%s853 + $0x44] sm:$0x1]
        %v892 = vld [vmem:[%s853 + $0x50] sm:$0x1]
        %v893 = vld [vmem:[%s853 + $0x5c] sm:$0x1]
        %v894 = vld [vmem:[%s853 + $0x68] sm:$0x1]
        %v895 = vld [vmem:[%s853 + $0x74] sm:$0x1]
        %v896 = vld [vmem:[%s853 + $0x80] sm:$0x1]
        %v897 = vld [vmem:[%s853 + $0x8c] sm:$0x1]
        %v898 = vld [vmem:[%s853 + $0x98] sm:$0x1]
        %v899 = vld [vmem:[%s853 + $0xa4] sm:$0x1]
        %v900 = vld [vmem:[%s853 + $0xb0] sm:$0x1]
        %v901 = vld [vmem:[%s853 + $0xbc] sm:$0x1]
        %v903 = vshrl.u32 %v854, 16
        %v905 = vrot.slane %v903, 4
        %v906 = vshll.u32 %v854, 16
        %v908 = vrot.slane %v906, 5
        %v909 = vor.u32 %v905, %v908
        %v910 = vrot.slane %v909, 4
        %v912 = vshll.u32 %v855, 16
        %v914 = vrot.slane %v912, 5
        %v915 = vsel %vm289, %v910, %v914
        %v916 = vshrl.u32 %v855, 16
        %v918 = vrot.slane %v916, 4
        %v919 = vor.u32 %v918, %v914
        %v920 = vrot.slane %v919, 4
        %v922 = vshll.u32 %v886, 16
        %v924 = vrot.slane %v922, 5
        %v925 = vsel %vm289, %v920, %v924
        %v927 = vshrl.u32 %v856, 16
        %v929 = vrot.slane %v927, 4
        %v930 = vshll.u32 %v856, 16
        %v932 = vrot.slane %v930, 5
        %v933 = vor.u32 %v929, %v932
        %v934 = vrot.slane %v933, 4
        %v936 = vshll.u32 %v857, 16
        %v938 = vrot.slane %v936, 5
        %v939 = vsel %vm289, %v934, %v938
        %v940 = vshrl.u32 %v857, 16
        %v942 = vrot.slane %v940, 4
        %v943 = vor.u32 %v942, %v938
        %v944 = vrot.slane %v943, 4
        %v946 = vshll.u32 %v887, 16
        %v948 = vrot.slane %v946, 5
        %v949 = vsel %vm289, %v944, %v948
        %v951 = vshrl.u32 %v858, 16
        %v953 = vrot.slane %v951, 4
        %v954 = vshll.u32 %v858, 16
        %v956 = vrot.slane %v954, 5
        %v957 = vor.u32 %v953, %v956
        %v958 = vrot.slane %v957, 4
        %v960 = vshll.u32 %v859, 16
        %v962 = vrot.slane %v960, 5
        %v963 = vsel %vm289, %v958, %v962
        %v964 = vshrl.u32 %v859, 16
        %v966 = vrot.slane %v964, 4
        %v967 = vor.u32 %v966, %v962
        %v968 = vrot.slane %v967, 4
        %v970 = vshll.u32 %v888, 16
        %v972 = vrot.slane %v970, 5
        %v973 = vsel %vm289, %v968, %v972
        %v975 = vshrl.u32 %v860, 16
        %v977 = vrot.slane %v975, 4
        %v978 = vshll.u32 %v860, 16
        %v980 = vrot.slane %v978, 5
        %v981 = vor.u32 %v977, %v980
        %v982 = vrot.slane %v981, 4
        %v984 = vshll.u32 %v861, 16
        %v986 = vrot.slane %v984, 5
        %v987 = vsel %vm289, %v982, %v986
        %v988 = vshrl.u32 %v861, 16
        %v990 = vrot.slane %v988, 4
        %v991 = vor.u32 %v990, %v986
        %v992 = vrot.slane %v991, 4
        %v994 = vshll.u32 %v889, 16
        %v996 = vrot.slane %v994, 5
        %v997 = vsel %vm289, %v992, %v996
        %v999 = vshrl.u32 %v862, 16
        %v1001 = vrot.slane %v999, 4
        %v1002 = vshll.u32 %v862, 16
        %v1004 = vrot.slane %v1002, 5
        %v1005 = vor.u32 %v1001, %v1004
        %v1006 = vrot.slane %v1005, 4
        %v1008 = vshll.u32 %v863, 16
        %v1010 = vrot.slane %v1008, 5
        %v1011 = vsel %vm289, %v1006, %v1010
        %v1012 = vshrl.u32 %v863, 16
        %v1014 = vrot.slane %v1012, 4
        %v1015 = vor.u32 %v1014, %v1010
        %v1016 = vrot.slane %v1015, 4
        %v1018 = vshll.u32 %v890, 16
        %v1020 = vrot.slane %v1018, 5
        %v1021 = vsel %vm289, %v1016, %v1020
        %v1023 = vshrl.u32 %v864, 16
        %v1025 = vrot.slane %v1023, 4
        %v1026 = vshll.u32 %v864, 16
        %v1028 = vrot.slane %v1026, 5
        %v1029 = vor.u32 %v1025, %v1028
        %v1030 = vrot.slane %v1029, 4
        %v1032 = vshll.u32 %v865, 16
        %v1034 = vrot.slane %v1032, 5
        %v1035 = vsel %vm289, %v1030, %v1034
        %v1036 = vshrl.u32 %v865, 16
        %v1038 = vrot.slane %v1036, 4
        %v1039 = vor.u32 %v1038, %v1034
        %v1040 = vrot.slane %v1039, 4
        %v1042 = vshll.u32 %v891, 16
        %v1044 = vrot.slane %v1042, 5
        %v1045 = vsel %vm289, %v1040, %v1044
        %v1047 = vshrl.u32 %v866, 16
        %v1049 = vrot.slane %v1047, 4
        %v1050 = vshll.u32 %v866, 16
        %v1052 = vrot.slane %v1050, 5
        %v1053 = vor.u32 %v1049, %v1052
        %v1054 = vrot.slane %v1053, 4
        %v1056 = vshll.u32 %v867, 16
        %v1058 = vrot.slane %v1056, 5
        %v1059 = vsel %vm289, %v1054, %v1058
        %v1060 = vshrl.u32 %v867, 16
        %v1062 = vrot.slane %v1060, 4
        %v1063 = vor.u32 %v1062, %v1058
        %v1064 = vrot.slane %v1063, 4
        %v1066 = vshll.u32 %v892, 16
        %v1068 = vrot.slane %v1066, 5
        %v1069 = vsel %vm289, %v1064, %v1068
        %v1071 = vshrl.u32 %v868, 16
        %v1073 = vrot.slane %v1071, 4
        %v1074 = vshll.u32 %v868, 16
        %v1076 = vrot.slane %v1074, 5
        %v1077 = vor.u32 %v1073, %v1076
        %v1078 = vrot.slane %v1077, 4
        %v1080 = vshll.u32 %v869, 16
        %v1082 = vrot.slane %v1080, 5
        %v1083 = vsel %vm289, %v1078, %v1082
        %v1084 = vshrl.u32 %v869, 16
        %v1086 = vrot.slane %v1084, 4
        %v1087 = vor.u32 %v1086, %v1082
        %v1088 = vrot.slane %v1087, 4
        %v1090 = vshll.u32 %v893, 16
        %v1092 = vrot.slane %v1090, 5
        %v1093 = vsel %vm289, %v1088, %v1092
        %v1095 = vshrl.u32 %v870, 16
        %v1097 = vrot.slane %v1095, 4
        %v1098 = vshll.u32 %v870, 16
        %v1100 = vrot.slane %v1098, 5
        %v1101 = vor.u32 %v1097, %v1100
        %v1102 = vrot.slane %v1101, 4
        %v1104 = vshll.u32 %v871, 16
        %v1106 = vrot.slane %v1104, 5
        %v1107 = vsel %vm289, %v1102, %v1106
        %v1108 = vshrl.u32 %v871, 16
        %v1110 = vrot.slane %v1108, 4
        %v1111 = vor.u32 %v1110, %v1106
        %v1112 = vrot.slane %v1111, 4
        %v1114 = vshll.u32 %v894, 16
        %v1116 = vrot.slane %v1114, 5
        %v1117 = vsel %vm289, %v1112, %v1116
        %v1119 = vshrl.u32 %v872, 16
        %v1121 = vrot.slane %v1119, 4
        %v1122 = vshll.u32 %v872, 16
        %v1124 = vrot.slane %v1122, 5
        %v1125 = vor.u32 %v1121, %v1124
        %v1126 = vrot.slane %v1125, 4
        %v1128 = vshll.u32 %v873, 16
        %v1130 = vrot.slane %v1128, 5
        %v1131 = vsel %vm289, %v1126, %v1130
        %v1132 = vshrl.u32 %v873, 16
        %v1134 = vrot.slane %v1132, 4
        %v1135 = vor.u32 %v1134, %v1130
        %v1136 = vrot.slane %v1135, 4
        %v1138 = vshll.u32 %v895, 16
        %v1140 = vrot.slane %v1138, 5
        %v1141 = vsel %vm289, %v1136, %v1140
        %v1143 = vshrl.u32 %v874, 16
        %v1145 = vrot.slane %v1143, 4
        %v1146 = vshll.u32 %v874, 16
        %v1148 = vrot.slane %v1146, 5
        %v1149 = vor.u32 %v1145, %v1148
        %v1150 = vrot.slane %v1149, 4
        %v1152 = vshll.u32 %v875, 16
        %v1154 = vrot.slane %v1152, 5
        %v1155 = vsel %vm289, %v1150, %v1154
        %v1156 = vshrl.u32 %v875, 16
        %v1158 = vrot.slane %v1156, 4
        %v1159 = vor.u32 %v1158, %v1154
        %v1160 = vrot.slane %v1159, 4
        %v1162 = vshll.u32 %v896, 16
        %v1164 = vrot.slane %v1162, 5
        %v1165 = vsel %vm289, %v1160, %v1164
        %v1167 = vshrl.u32 %v876, 16
        %v1169 = vrot.slane %v1167, 4
        %v1170 = vshll.u32 %v876, 16
        %v1172 = vrot.slane %v1170, 5
        %v1173 = vor.u32 %v1169, %v1172
        %v1174 = vrot.slane %v1173, 4
        %v1176 = vshll.u32 %v877, 16
        %v1178 = vrot.slane %v1176, 5
        %v1179 = vsel %vm289, %v1174, %v1178
        %v1180 = vshrl.u32 %v877, 16
        %v1182 = vrot.slane %v1180, 4
        %v1183 = vor.u32 %v1182, %v1178
        %v1184 = vrot.slane %v1183, 4
        %v1186 = vshll.u32 %v897, 16
        %v1188 = vrot.slane %v1186, 5
        %v1189 = vsel %vm289, %v1184, %v1188
        %v1191 = vshrl.u32 %v878, 16
        %v1193 = vrot.slane %v1191, 4
        %v1194 = vshll.u32 %v878, 16
        %v1196 = vrot.slane %v1194, 5
        %v1197 = vor.u32 %v1193, %v1196
        %v1198 = vrot.slane %v1197, 4
        %v1200 = vshll.u32 %v879, 16
        %v1202 = vrot.slane %v1200, 5
        %v1203 = vsel %vm289, %v1198, %v1202
        %v1204 = vshrl.u32 %v879, 16
        %v1206 = vrot.slane %v1204, 4
        %v1207 = vor.u32 %v1206, %v1202
        %v1208 = vrot.slane %v1207, 4
        %v1210 = vshll.u32 %v898, 16
        %v1212 = vrot.slane %v1210, 5
        %v1213 = vsel %vm289, %v1208, %v1212
        %v1215 = vshrl.u32 %v880, 16
        %v1217 = vrot.slane %v1215, 4
        %v1218 = vshll.u32 %v880, 16
        %v1220 = vrot.slane %v1218, 5
        %v1221 = vor.u32 %v1217, %v1220
        %v1222 = vrot.slane %v1221, 4
        %v1224 = vshll.u32 %v881, 16
        %v1226 = vrot.slane %v1224, 5
        %v1227 = vsel %vm289, %v1222, %v1226
        %v1228 = vshrl.u32 %v881, 16
        %v1230 = vrot.slane %v1228, 4
        %v1231 = vor.u32 %v1230, %v1226
        %v1232 = vrot.slane %v1231, 4
        %v1234 = vshll.u32 %v899, 16
        %v1236 = vrot.slane %v1234, 5
        %v1237 = vsel %vm289, %v1232, %v1236
        %v1239 = vshrl.u32 %v882, 16
        %v1241 = vrot.slane %v1239, 4
        %v1242 = vshll.u32 %v882, 16
        %v1244 = vrot.slane %v1242, 5
        %v1245 = vor.u32 %v1241, %v1244
        %v1246 = vrot.slane %v1245, 4
        %v1248 = vshll.u32 %v883, 16
        %v1250 = vrot.slane %v1248, 5
        %v1251 = vsel %vm289, %v1246, %v1250
        %v1252 = vshrl.u32 %v883, 16
        %v1254 = vrot.slane %v1252, 4
        %v1255 = vor.u32 %v1254, %v1250
        %v1256 = vrot.slane %v1255, 4
        %v1258 = vshll.u32 %v900, 16
        %v1260 = vrot.slane %v1258, 5
        %v1261 = vsel %vm289, %v1256, %v1260
        %v1263 = vshrl.u32 %v884, 16
        %v1265 = vrot.slane %v1263, 4
        %v1266 = vshll.u32 %v884, 16
        %v1268 = vrot.slane %v1266, 5
        %v1269 = vor.u32 %v1265, %v1268
        %v1270 = vrot.slane %v1269, 4
        %v1272 = vshll.u32 %v885, 16
        %v1274 = vrot.slane %v1272, 5
        %v1275 = vsel %vm289, %v1270, %v1274
        %v1276 = vshrl.u32 %v885, 16
        %v1278 = vrot.slane %v1276, 4
        %v1279 = vor.u32 %v1278, %v1274
        %v1280 = vrot.slane %v1279, 4
        %v1282 = vshll.u32 %v901, 16
        %v1284 = vrot.slane %v1282, 5
        %v1285 = vsel %vm289, %v1280, %v1284
        %v1286 = vld [vmem:[%s853] sm:$0xe]
        %v1287 = vld [vmem:[%s853 + $0xc] sm:$0xe]
        %v1288 = vld [vmem:[%s853 + $0x18] sm:$0xe]
        %v1289 = vld [vmem:[%s853 + $0x24] sm:$0xe]
        %v1290 = vld [vmem:[%s853 + $0x30] sm:$0xe]
        %v1291 = vld [vmem:[%s853 + $0x3c] sm:$0xe]
        %v1292 = vld [vmem:[%s853 + $0x48] sm:$0xe]
        %v1293 = vld [vmem:[%s853 + $0x54] sm:$0xe]
        %v1294 = vld [vmem:[%s853 + $0x60] sm:$0xe]
        %v1295 = vld [vmem:[%s853 + $0x6c] sm:$0xe]
        %v1296 = vld [vmem:[%s853 + $0x78] sm:$0xe]
        %v1297 = vld [vmem:[%s853 + $0x84] sm:$0xe]
        %v1298 = vld [vmem:[%s853 + $0x90] sm:$0xe]
        %v1299 = vld [vmem:[%s853 + $0x9c] sm:$0xe]
        %v1300 = vld [vmem:[%s853 + $0xa8] sm:$0xe]
        %v1301 = vld [vmem:[%s853 + $0xb4] sm:$0xe]
        %v1350 = vrot.slane %v1286, 5
        %v1351 = vrot.slane %v1350, 4
        %v1352 = vrot.slane %v855, 5
        %v1353 = vsel %vm740, %v1351, %v1352
        %v1354 = vrot.slane %v1352, 4
        %v1355 = vrot.slane %v886, 5
        %v1356 = vsel %vm740, %v1354, %v1355
        %v1357 = vrot.slane %v1287, 5
        %v1358 = vrot.slane %v1357, 4
        %v1359 = vrot.slane %v857, 5
        %v1360 = vsel %vm740, %v1358, %v1359
        %v1361 = vrot.slane %v1359, 4
        %v1362 = vrot.slane %v887, 5
        %v1363 = vsel %vm740, %v1361, %v1362
        %v1364 = vrot.slane %v1288, 5
        %v1365 = vrot.slane %v1364, 4
        %v1366 = vrot.slane %v859, 5
        %v1367 = vsel %vm740, %v1365, %v1366
        %v1368 = vrot.slane %v1366, 4
        %v1369 = vrot.slane %v888, 5
        %v1370 = vsel %vm740, %v1368, %v1369
        %v1371 = vrot.slane %v1289, 5
        %v1372 = vrot.slane %v1371, 4
        %v1373 = vrot.slane %v861, 5
        %v1374 = vsel %vm740, %v1372, %v1373
        %v1375 = vrot.slane %v1373, 4
        %v1376 = vrot.slane %v889, 5
        %v1377 = vsel %vm740, %v1375, %v1376
        %v1378 = vrot.slane %v1290, 5
        %v1379 = vrot.slane %v1378, 4
        %v1380 = vrot.slane %v863, 5
        %v1381 = vsel %vm740, %v1379, %v1380
        %v1382 = vrot.slane %v1380, 4
        %v1383 = vrot.slane %v890, 5
        %v1384 = vsel %vm740, %v1382, %v1383
        %v1385 = vrot.slane %v1291, 5
        %v1386 = vrot.slane %v1385, 4
        %v1387 = vrot.slane %v865, 5
        %v1388 = vsel %vm740, %v1386, %v1387
        %v1389 = vrot.slane %v1387, 4
        %v1390 = vrot.slane %v891, 5
        %v1391 = vsel %vm740, %v1389, %v1390
        %v1392 = vrot.slane %v1292, 5
        %v1393 = vrot.slane %v1392, 4
        %v1394 = vrot.slane %v867, 5
        %v1395 = vsel %vm740, %v1393, %v1394
        %v1396 = vrot.slane %v1394, 4
        %v1397 = vrot.slane %v892, 5
        %v1398 = vsel %vm740, %v1396, %v1397
        %v1399 = vrot.slane %v1293, 5
        %v1400 = vrot.slane %v1399, 4
        %v1401 = vrot.slane %v869, 5
        %v1402 = vsel %vm740, %v1400, %v1401
        %v1403 = vrot.slane %v1401, 4
        %v1404 = vrot.slane %v893, 5
        %v1405 = vsel %vm740, %v1403, %v1404
        %v1406 = vrot.slane %v1294, 5
        %v1407 = vrot.slane %v1406, 4
        %v1408 = vrot.slane %v871, 5
        %v1409 = vsel %vm740, %v1407, %v1408
        %v1410 = vrot.slane %v1408, 4
        %v1411 = vrot.slane %v894, 5
        %v1412 = vsel %vm740, %v1410, %v1411
        %v1413 = vrot.slane %v1295, 5
        %v1414 = vrot.slane %v1413, 4
        %v1415 = vrot.slane %v873, 5
        %v1416 = vsel %vm740, %v1414, %v1415
        %v1417 = vrot.slane %v1415, 4
        %v1418 = vrot.slane %v895, 5
        %v1419 = vsel %vm740, %v1417, %v1418
        %v1420 = vrot.slane %v1296, 5
        %v1421 = vrot.slane %v1420, 4
        %v1422 = vrot.slane %v875, 5
        %v1423 = vsel %vm740, %v1421, %v1422
        %v1424 = vrot.slane %v1422, 4
        %v1425 = vrot.slane %v896, 5
        %v1426 = vsel %vm740, %v1424, %v1425
        %v1427 = vrot.slane %v1297, 5
        %v1428 = vrot.slane %v1427, 4
        %v1429 = vrot.slane %v877, 5
        %v1430 = vsel %vm740, %v1428, %v1429
        %v1431 = vrot.slane %v1429, 4
        %v1432 = vrot.slane %v897, 5
        %v1433 = vsel %vm740, %v1431, %v1432
        %v1434 = vrot.slane %v1298, 5
        %v1435 = vrot.slane %v1434, 4
        %v1436 = vrot.slane %v879, 5
        %v1437 = vsel %vm740, %v1435, %v1436
        %v1438 = vrot.slane %v1436, 4
        %v1439 = vrot.slane %v898, 5
        %v1440 = vsel %vm740, %v1438, %v1439
        %v1441 = vrot.slane %v1299, 5
        %v1442 = vrot.slane %v1441, 4
        %v1443 = vrot.slane %v881, 5
        %v1444 = vsel %vm740, %v1442, %v1443
        %v1445 = vrot.slane %v1443, 4
        %v1446 = vrot.slane %v899, 5
        %v1447 = vsel %vm740, %v1445, %v1446
        %v1448 = vrot.slane %v1300, 5
        %v1449 = vrot.slane %v1448, 4
        %v1450 = vrot.slane %v883, 5
        %v1451 = vsel %vm740, %v1449, %v1450
        %v1452 = vrot.slane %v1450, 4
        %v1453 = vrot.slane %v900, 5
        %v1454 = vsel %vm740, %v1452, %v1453
        %v1455 = vrot.slane %v1301, 5
        %v1456 = vrot.slane %v1455, 4
        %v1457 = vrot.slane %v885, 5
        %v1458 = vsel %vm740, %v1456, %v1457
        %v1459 = vrot.slane %v1457, 4
        %v1460 = vrot.slane %v901, 5
        %v1461 = vsel %vm740, %v1459, %v1460
        %s1462 = scalar_lea.vmem %s188, 24 [#allocation2]
        %v1463 = vld [vmem:[%s1462] sm:$0xf]
        %v1464 = vld [vmem:[%s1462 + $0x4] sm:$0xf]
        %v1465 = vld [vmem:[%s1462 + $0xc] sm:$0xf]
        %v1466 = vld [vmem:[%s1462 + $0x10] sm:$0xf]
        %v1467 = vld [vmem:[%s1462 + $0x18] sm:$0xf]
        %v1468 = vld [vmem:[%s1462 + $0x1c] sm:$0xf]
        %v1469 = vld [vmem:[%s1462 + $0x24] sm:$0xf]
        %v1470 = vld [vmem:[%s1462 + $0x28] sm:$0xf]
        %v1471 = vld [vmem:[%s1462 + $0x30] sm:$0xf]
        %v1472 = vld [vmem:[%s1462 + $0x34] sm:$0xf]
        %v1473 = vld [vmem:[%s1462 + $0x3c] sm:$0xf]
        %v1474 = vld [vmem:[%s1462 + $0x40] sm:$0xf]
        %v1475 = vld [vmem:[%s1462 + $0x48] sm:$0xf]
        %v1476 = vld [vmem:[%s1462 + $0x4c] sm:$0xf]
        %v1477 = vld [vmem:[%s1462 + $0x54] sm:$0xf]
        %v1478 = vld [vmem:[%s1462 + $0x58] sm:$0xf]
        %v1479 = vld [vmem:[%s1462 + $0x60] sm:$0xf]
        %v1480 = vld [vmem:[%s1462 + $0x64] sm:$0xf]
        %v1481 = vld [vmem:[%s1462 + $0x6c] sm:$0xf]
        %v1482 = vld [vmem:[%s1462 + $0x70] sm:$0xf]
        %v1483 = vld [vmem:[%s1462 + $0x78] sm:$0xf]
        %v1484 = vld [vmem:[%s1462 + $0x7c] sm:$0xf]
        %v1485 = vld [vmem:[%s1462 + $0x84] sm:$0xf]
        %v1486 = vld [vmem:[%s1462 + $0x88] sm:$0xf]
        %v1487 = vld [vmem:[%s1462 + $0x90] sm:$0xf]
        %v1488 = vld [vmem:[%s1462 + $0x94] sm:$0xf]
        %v1489 = vld [vmem:[%s1462 + $0x9c] sm:$0xf]
        %v1490 = vld [vmem:[%s1462 + $0xa0] sm:$0xf]
        %v1491 = vld [vmem:[%s1462 + $0xa8] sm:$0xf]
        %v1492 = vld [vmem:[%s1462 + $0xac] sm:$0xf]
        %v1493 = vld [vmem:[%s1462 + $0xb4] sm:$0xf]
        %v1494 = vld [vmem:[%s1462 + $0xb8] sm:$0xf]
        %v1495 = vld [vmem:[%s1462 + $0x8] sm:$0x1]
        %v1496 = vld [vmem:[%s1462 + $0x14] sm:$0x1]
        %v1497 = vld [vmem:[%s1462 + $0x20] sm:$0x1]
        %v1498 = vld [vmem:[%s1462 + $0x2c] sm:$0x1]
        %v1499 = vld [vmem:[%s1462 + $0x38] sm:$0x1]
        %v1500 = vld [vmem:[%s1462 + $0x44] sm:$0x1]
        %v1501 = vld [vmem:[%s1462 + $0x50] sm:$0x1]
        %v1502 = vld [vmem:[%s1462 + $0x5c] sm:$0x1]
        %v1503 = vld [vmem:[%s1462 + $0x68] sm:$0x1]
        %v1504 = vld [vmem:[%s1462 + $0x74] sm:$0x1]
        %v1505 = vld [vmem:[%s1462 + $0x80] sm:$0x1]
        %v1506 = vld [vmem:[%s1462 + $0x8c] sm:$0x1]
        %v1507 = vld [vmem:[%s1462 + $0x98] sm:$0x1]
        %v1508 = vld [vmem:[%s1462 + $0xa4] sm:$0x1]
        %v1509 = vld [vmem:[%s1462 + $0xb0] sm:$0x1]
        %v1510 = vld [vmem:[%s1462 + $0xbc] sm:$0x1]
        %v1512 = vshrl.u32 %v1463, 16
        %v1514 = vrot.slane %v1512, 4
        %v1515 = vshll.u32 %v1463, 16
        %v1517 = vrot.slane %v1515, 5
        %v1518 = vor.u32 %v1514, %v1517
        %v1519 = vrot.slane %v1518, 4
        %v1521 = vshll.u32 %v1464, 16
        %v1523 = vrot.slane %v1521, 5
        %v1524 = vsel %vm289, %v1519, %v1523
        %v1525 = vshrl.u32 %v1464, 16
        %v1527 = vrot.slane %v1525, 4
        %v1528 = vor.u32 %v1527, %v1523
        %v1529 = vrot.slane %v1528, 4
        %v1531 = vshll.u32 %v1495, 16
        %v1533 = vrot.slane %v1531, 5
        %v1534 = vsel %vm289, %v1529, %v1533
        %v1536 = vshrl.u32 %v1465, 16
        %v1538 = vrot.slane %v1536, 4
        %v1539 = vshll.u32 %v1465, 16
        %v1541 = vrot.slane %v1539, 5
        %v1542 = vor.u32 %v1538, %v1541
        %v1543 = vrot.slane %v1542, 4
        %v1545 = vshll.u32 %v1466, 16
        %v1547 = vrot.slane %v1545, 5
        %v1548 = vsel %vm289, %v1543, %v1547
        %v1549 = vshrl.u32 %v1466, 16
        %v1551 = vrot.slane %v1549, 4
        %v1552 = vor.u32 %v1551, %v1547
        %v1553 = vrot.slane %v1552, 4
        %v1555 = vshll.u32 %v1496, 16
        %v1557 = vrot.slane %v1555, 5
        %v1558 = vsel %vm289, %v1553, %v1557
        %v1560 = vshrl.u32 %v1467, 16
        %v1562 = vrot.slane %v1560, 4
        %v1563 = vshll.u32 %v1467, 16
        %v1565 = vrot.slane %v1563, 5
        %v1566 = vor.u32 %v1562, %v1565
        %v1567 = vrot.slane %v1566, 4
        %v1569 = vshll.u32 %v1468, 16
        %v1571 = vrot.slane %v1569, 5
        %v1572 = vsel %vm289, %v1567, %v1571
        %v1573 = vshrl.u32 %v1468, 16
        %v1575 = vrot.slane %v1573, 4
        %v1576 = vor.u32 %v1575, %v1571
        %v1577 = vrot.slane %v1576, 4
        %v1579 = vshll.u32 %v1497, 16
        %v1581 = vrot.slane %v1579, 5
        %v1582 = vsel %vm289, %v1577, %v1581
        %v1584 = vshrl.u32 %v1469, 16
        %v1586 = vrot.slane %v1584, 4
        %v1587 = vshll.u32 %v1469, 16
        %v1589 = vrot.slane %v1587, 5
        %v1590 = vor.u32 %v1586, %v1589
        %v1591 = vrot.slane %v1590, 4
        %v1593 = vshll.u32 %v1470, 16
        %v1595 = vrot.slane %v1593, 5
        %v1596 = vsel %vm289, %v1591, %v1595
        %v1597 = vshrl.u32 %v1470, 16
        %v1599 = vrot.slane %v1597, 4
        %v1600 = vor.u32 %v1599, %v1595
        %v1601 = vrot.slane %v1600, 4
        %v1603 = vshll.u32 %v1498, 16
        %v1605 = vrot.slane %v1603, 5
        %v1606 = vsel %vm289, %v1601, %v1605
        %v1608 = vshrl.u32 %v1471, 16
        %v1610 = vrot.slane %v1608, 4
        %v1611 = vshll.u32 %v1471, 16
        %v1613 = vrot.slane %v1611, 5
        %v1614 = vor.u32 %v1610, %v1613
        %v1615 = vrot.slane %v1614, 4
        %v1617 = vshll.u32 %v1472, 16
        %v1619 = vrot.slane %v1617, 5
        %v1620 = vsel %vm289, %v1615, %v1619
        %v1621 = vshrl.u32 %v1472, 16
        %v1623 = vrot.slane %v1621, 4
        %v1624 = vor.u32 %v1623, %v1619
        %v1625 = vrot.slane %v1624, 4
        %v1627 = vshll.u32 %v1499, 16
        %v1629 = vrot.slane %v1627, 5
        %v1630 = vsel %vm289, %v1625, %v1629
        %v1632 = vshrl.u32 %v1473, 16
        %v1634 = vrot.slane %v1632, 4
        %v1635 = vshll.u32 %v1473, 16
        %v1637 = vrot.slane %v1635, 5
        %v1638 = vor.u32 %v1634, %v1637
        %v1639 = vrot.slane %v1638, 4
        %v1641 = vshll.u32 %v1474, 16
        %v1643 = vrot.slane %v1641, 5
        %v1644 = vsel %vm289, %v1639, %v1643
        %v1645 = vshrl.u32 %v1474, 16
        %v1647 = vrot.slane %v1645, 4
        %v1648 = vor.u32 %v1647, %v1643
        %v1649 = vrot.slane %v1648, 4
        %v1651 = vshll.u32 %v1500, 16
        %v1653 = vrot.slane %v1651, 5
        %v1654 = vsel %vm289, %v1649, %v1653
        %v1656 = vshrl.u32 %v1475, 16
        %v1658 = vrot.slane %v1656, 4
        %v1659 = vshll.u32 %v1475, 16
        %v1661 = vrot.slane %v1659, 5
        %v1662 = vor.u32 %v1658, %v1661
        %v1663 = vrot.slane %v1662, 4
        %v1665 = vshll.u32 %v1476, 16
        %v1667 = vrot.slane %v1665, 5
        %v1668 = vsel %vm289, %v1663, %v1667
        %v1669 = vshrl.u32 %v1476, 16
        %v1671 = vrot.slane %v1669, 4
        %v1672 = vor.u32 %v1671, %v1667
        %v1673 = vrot.slane %v1672, 4
        %v1675 = vshll.u32 %v1501, 16
        %v1677 = vrot.slane %v1675, 5
        %v1678 = vsel %vm289, %v1673, %v1677
        %v1680 = vshrl.u32 %v1477, 16
        %v1682 = vrot.slane %v1680, 4
        %v1683 = vshll.u32 %v1477, 16
        %v1685 = vrot.slane %v1683, 5
        %v1686 = vor.u32 %v1682, %v1685
        %v1687 = vrot.slane %v1686, 4
        %v1689 = vshll.u32 %v1478, 16
        %v1691 = vrot.slane %v1689, 5
        %v1692 = vsel %vm289, %v1687, %v1691
        %v1693 = vshrl.u32 %v1478, 16
        %v1695 = vrot.slane %v1693, 4
        %v1696 = vor.u32 %v1695, %v1691
        %v1697 = vrot.slane %v1696, 4
        %v1699 = vshll.u32 %v1502, 16
        %v1701 = vrot.slane %v1699, 5
        %v1702 = vsel %vm289, %v1697, %v1701
        %v1704 = vshrl.u32 %v1479, 16
        %v1706 = vrot.slane %v1704, 4
        %v1707 = vshll.u32 %v1479, 16
        %v1709 = vrot.slane %v1707, 5
        %v1710 = vor.u32 %v1706, %v1709
        %v1711 = vrot.slane %v1710, 4
        %v1713 = vshll.u32 %v1480, 16
        %v1715 = vrot.slane %v1713, 5
        %v1716 = vsel %vm289, %v1711, %v1715
        %v1717 = vshrl.u32 %v1480, 16
        %v1719 = vrot.slane %v1717, 4
        %v1720 = vor.u32 %v1719, %v1715
        %v1721 = vrot.slane %v1720, 4
        %v1723 = vshll.u32 %v1503, 16
        %v1725 = vrot.slane %v1723, 5
        %v1726 = vsel %vm289, %v1721, %v1725
        %v1728 = vshrl.u32 %v1481, 16
        %v1730 = vrot.slane %v1728, 4
        %v1731 = vshll.u32 %v1481, 16
        %v1733 = vrot.slane %v1731, 5
        %v1734 = vor.u32 %v1730, %v1733
        %v1735 = vrot.slane %v1734, 4
        %v1737 = vshll.u32 %v1482, 16
        %v1739 = vrot.slane %v1737, 5
        %v1740 = vsel %vm289, %v1735, %v1739
        %v1741 = vshrl.u32 %v1482, 16
        %v1743 = vrot.slane %v1741, 4
        %v1744 = vor.u32 %v1743, %v1739
        %v1745 = vrot.slane %v1744, 4
        %v1747 = vshll.u32 %v1504, 16
        %v1749 = vrot.slane %v1747, 5
        %v1750 = vsel %vm289, %v1745, %v1749
        %v1752 = vshrl.u32 %v1483, 16
        %v1754 = vrot.slane %v1752, 4
        %v1755 = vshll.u32 %v1483, 16
        %v1757 = vrot.slane %v1755, 5
        %v1758 = vor.u32 %v1754, %v1757
        %v1759 = vrot.slane %v1758, 4
        %v1761 = vshll.u32 %v1484, 16
        %v1763 = vrot.slane %v1761, 5
        %v1764 = vsel %vm289, %v1759, %v1763
        %v1765 = vshrl.u32 %v1484, 16
        %v1767 = vrot.slane %v1765, 4
        %v1768 = vor.u32 %v1767, %v1763
        %v1769 = vrot.slane %v1768, 4
        %v1771 = vshll.u32 %v1505, 16
        %v1773 = vrot.slane %v1771, 5
        %v1774 = vsel %vm289, %v1769, %v1773
        %v1776 = vshrl.u32 %v1485, 16
        %v1778 = vrot.slane %v1776, 4
        %v1779 = vshll.u32 %v1485, 16
        %v1781 = vrot.slane %v1779, 5
        %v1782 = vor.u32 %v1778, %v1781
        %v1783 = vrot.slane %v1782, 4
        %v1785 = vshll.u32 %v1486, 16
        %v1787 = vrot.slane %v1785, 5
        %v1788 = vsel %vm289, %v1783, %v1787
        %v1789 = vshrl.u32 %v1486, 16
        %v1791 = vrot.slane %v1789, 4
        %v1792 = vor.u32 %v1791, %v1787
        %v1793 = vrot.slane %v1792, 4
        %v1795 = vshll.u32 %v1506, 16
        %v1797 = vrot.slane %v1795, 5
        %v1798 = vsel %vm289, %v1793, %v1797
        %v1800 = vshrl.u32 %v1487, 16
        %v1802 = vrot.slane %v1800, 4
        %v1803 = vshll.u32 %v1487, 16
        %v1805 = vrot.slane %v1803, 5
        %v1806 = vor.u32 %v1802, %v1805
        %v1807 = vrot.slane %v1806, 4
        %v1809 = vshll.u32 %v1488, 16
        %v1811 = vrot.slane %v1809, 5
        %v1812 = vsel %vm289, %v1807, %v1811
        %v1813 = vshrl.u32 %v1488, 16
        %v1815 = vrot.slane %v1813, 4
        %v1816 = vor.u32 %v1815, %v1811
        %v1817 = vrot.slane %v1816, 4
        %v1819 = vshll.u32 %v1507, 16
        %v1821 = vrot.slane %v1819, 5
        %v1822 = vsel %vm289, %v1817, %v1821
        %v1824 = vshrl.u32 %v1489, 16
        %v1826 = vrot.slane %v1824, 4
        %v1827 = vshll.u32 %v1489, 16
        %v1829 = vrot.slane %v1827, 5
        %v1830 = vor.u32 %v1826, %v1829
        %v1831 = vrot.slane %v1830, 4
        %v1833 = vshll.u32 %v1490, 16
        %v1835 = vrot.slane %v1833, 5
        %v1836 = vsel %vm289, %v1831, %v1835
        %v1837 = vshrl.u32 %v1490, 16
        %v1839 = vrot.slane %v1837, 4
        %v1840 = vor.u32 %v1839, %v1835
        %v1841 = vrot.slane %v1840, 4
        %v1843 = vshll.u32 %v1508, 16
        %v1845 = vrot.slane %v1843, 5
        %v1846 = vsel %vm289, %v1841, %v1845
        %v1848 = vshrl.u32 %v1491, 16
        %v1850 = vrot.slane %v1848, 4
        %v1851 = vshll.u32 %v1491, 16
        %v1853 = vrot.slane %v1851, 5
        %v1854 = vor.u32 %v1850, %v1853
        %v1855 = vrot.slane %v1854, 4
        %v1857 = vshll.u32 %v1492, 16
        %v1859 = vrot.slane %v1857, 5
        %v1860 = vsel %vm289, %v1855, %v1859
        %v1861 = vshrl.u32 %v1492, 16
        %v1863 = vrot.slane %v1861, 4
        %v1864 = vor.u32 %v1863, %v1859
        %v1865 = vrot.slane %v1864, 4
        %v1867 = vshll.u32 %v1509, 16
        %v1869 = vrot.slane %v1867, 5
        %v1870 = vsel %vm289, %v1865, %v1869
        %v1872 = vshrl.u32 %v1493, 16
        %v1874 = vrot.slane %v1872, 4
        %v1875 = vshll.u32 %v1493, 16
        %v1877 = vrot.slane %v1875, 5
        %v1878 = vor.u32 %v1874, %v1877
        %v1879 = vrot.slane %v1878, 4
        %v1881 = vshll.u32 %v1494, 16
        %v1883 = vrot.slane %v1881, 5
        %v1884 = vsel %vm289, %v1879, %v1883
        %v1885 = vshrl.u32 %v1494, 16
        %v1887 = vrot.slane %v1885, 4
        %v1888 = vor.u32 %v1887, %v1883
        %v1889 = vrot.slane %v1888, 4
        %v1891 = vshll.u32 %v1510, 16
        %v1893 = vrot.slane %v1891, 5
        %v1894 = vsel %vm289, %v1889, %v1893
        %v1895 = vld [vmem:[%s1462] sm:$0xe]
        %v1896 = vld [vmem:[%s1462 + $0xc] sm:$0xe]
        %v1897 = vld [vmem:[%s1462 + $0x18] sm:$0xe]
        %v1898 = vld [vmem:[%s1462 + $0x24] sm:$0xe]
        %v1899 = vld [vmem:[%s1462 + $0x30] sm:$0xe]
        %v1900 = vld [vmem:[%s1462 + $0x3c] sm:$0xe]
        %v1901 = vld [vmem:[%s1462 + $0x48] sm:$0xe]
        %v1902 = vld [vmem:[%s1462 + $0x54] sm:$0xe]
        %v1903 = vld [vmem:[%s1462 + $0x60] sm:$0xe]
        %v1904 = vld [vmem:[%s1462 + $0x6c] sm:$0xe]
        %v1905 = vld [vmem:[%s1462 + $0x78] sm:$0xe]
        %v1906 = vld [vmem:[%s1462 + $0x84] sm:$0xe]
        %v1907 = vld [vmem:[%s1462 + $0x90] sm:$0xe]
        %v1908 = vld [vmem:[%s1462 + $0x9c] sm:$0xe]
        %v1909 = vld [vmem:[%s1462 + $0xa8] sm:$0xe]
        %v1910 = vld [vmem:[%s1462 + $0xb4] sm:$0xe]
        %v1959 = vrot.slane %v1895, 5
        %v1960 = vrot.slane %v1959, 4
        %v1961 = vrot.slane %v1464, 5
        %v1962 = vsel %vm740, %v1960, %v1961
        %v1963 = vrot.slane %v1961, 4
        %v1964 = vrot.slane %v1495, 5
        %v1965 = vsel %vm740, %v1963, %v1964
        %v1966 = vrot.slane %v1896, 5
        %v1967 = vrot.slane %v1966, 4
        %v1968 = vrot.slane %v1466, 5
        %v1969 = vsel %vm740, %v1967, %v1968
        %v1970 = vrot.slane %v1968, 4
        %v1971 = vrot.slane %v1496, 5
        %v1972 = vsel %vm740, %v1970, %v1971
        %v1973 = vrot.slane %v1897, 5
        %v1974 = vrot.slane %v1973, 4
        %v1975 = vrot.slane %v1468, 5
        %v1976 = vsel %vm740, %v1974, %v1975
        %v1977 = vrot.slane %v1975, 4
        %v1978 = vrot.slane %v1497, 5
        %v1979 = vsel %vm740, %v1977, %v1978
        %v1980 = vrot.slane %v1898, 5
        %v1981 = vrot.slane %v1980, 4
        %v1982 = vrot.slane %v1470, 5
        %v1983 = vsel %vm740, %v1981, %v1982
        %v1984 = vrot.slane %v1982, 4
        %v1985 = vrot.slane %v1498, 5
        %v1986 = vsel %vm740, %v1984, %v1985
        %v1987 = vrot.slane %v1899, 5
        %v1988 = vrot.slane %v1987, 4
        %v1989 = vrot.slane %v1472, 5
        %v1990 = vsel %vm740, %v1988, %v1989
        %v1991 = vrot.slane %v1989, 4
        %v1992 = vrot.slane %v1499, 5
        %v1993 = vsel %vm740, %v1991, %v1992
        %v1994 = vrot.slane %v1900, 5
        %v1995 = vrot.slane %v1994, 4
        %v1996 = vrot.slane %v1474, 5
        %v1997 = vsel %vm740, %v1995, %v1996
        %v1998 = vrot.slane %v1996, 4
        %v1999 = vrot.slane %v1500, 5
        %v2000 = vsel %vm740, %v1998, %v1999
        %v2001 = vrot.slane %v1901, 5
        %v2002 = vrot.slane %v2001, 4
        %v2003 = vrot.slane %v1476, 5
        %v2004 = vsel %vm740, %v2002, %v2003
        %v2005 = vrot.slane %v2003, 4
        %v2006 = vrot.slane %v1501, 5
        %v2007 = vsel %vm740, %v2005, %v2006
        %v2008 = vrot.slane %v1902, 5
        %v2009 = vrot.slane %v2008, 4
        %v2010 = vrot.slane %v1478, 5
        %v2011 = vsel %vm740, %v2009, %v2010
        %v2012 = vrot.slane %v2010, 4
        %v2013 = vrot.slane %v1502, 5
        %v2014 = vsel %vm740, %v2012, %v2013
        %v2015 = vrot.slane %v1903, 5
        %v2016 = vrot.slane %v2015, 4
        %v2017 = vrot.slane %v1480, 5
        %v2018 = vsel %vm740, %v2016, %v2017
        %v2019 = vrot.slane %v2017, 4
        %v2020 = vrot.slane %v1503, 5
        %v2021 = vsel %vm740, %v2019, %v2020
        %v2022 = vrot.slane %v1904, 5
        %v2023 = vrot.slane %v2022, 4
        %v2024 = vrot.slane %v1482, 5
        %v2025 = vsel %vm740, %v2023, %v2024
        %v2026 = vrot.slane %v2024, 4
        %v2027 = vrot.slane %v1504, 5
        %v2028 = vsel %vm740, %v2026, %v2027
        %v2029 = vrot.slane %v1905, 5
        %v2030 = vrot.slane %v2029, 4
        %v2031 = vrot.slane %v1484, 5
        %v2032 = vsel %vm740, %v2030, %v2031
        %v2033 = vrot.slane %v2031, 4
        %v2034 = vrot.slane %v1505, 5
        %v2035 = vsel %vm740, %v2033, %v2034
        %v2036 = vrot.slane %v1906, 5
        %v2037 = vrot.slane %v2036, 4
        %v2038 = vrot.slane %v1486, 5
        %v2039 = vsel %vm740, %v2037, %v2038
        %v2040 = vrot.slane %v2038, 4
        %v2041 = vrot.slane %v1506, 5
        %v2042 = vsel %vm740, %v2040, %v2041
        %v2043 = vrot.slane %v1907, 5
        %v2044 = vrot.slane %v2043, 4
        %v2045 = vrot.slane %v1488, 5
        %v2046 = vsel %vm740, %v2044, %v2045
        %v2047 = vrot.slane %v2045, 4
        %v2048 = vrot.slane %v1507, 5
        %v2049 = vsel %vm740, %v2047, %v2048
        %v2050 = vrot.slane %v1908, 5
        %v2051 = vrot.slane %v2050, 4
        %v2052 = vrot.slane %v1490, 5
        %v2053 = vsel %vm740, %v2051, %v2052
        %v2054 = vrot.slane %v2052, 4
        %v2055 = vrot.slane %v1508, 5
        %v2056 = vsel %vm740, %v2054, %v2055
        %v2057 = vrot.slane %v1909, 5
        %v2058 = vrot.slane %v2057, 4
        %v2059 = vrot.slane %v1492, 5
        %v2060 = vsel %vm740, %v2058, %v2059
        %v2061 = vrot.slane %v2059, 4
        %v2062 = vrot.slane %v1509, 5
        %v2063 = vsel %vm740, %v2061, %v2062
        %v2064 = vrot.slane %v1910, 5
        %v2065 = vrot.slane %v2064, 4
        %v2066 = vrot.slane %v1494, 5
        %v2067 = vsel %vm740, %v2065, %v2066
        %v2068 = vrot.slane %v2066, 4
        %v2069 = vrot.slane %v1510, 5
        %v2070 = vsel %vm740, %v2068, %v2069
        %v2087 = vunpack.c.l.b16 %v239
        %v2088 = vunpack.c.l.b16 %v240
        %v2089 = vunpack.c.l.b16 %v241
        %v2090 = vunpack.c.l.b16 %v242
        %v2091 = vunpack.c.l.b16 %v243
        %v2092 = vunpack.c.l.b16 %v244
        %v2093 = vunpack.c.l.b16 %v245
        %v2094 = vunpack.c.l.b16 %v246
        %v2095 = vunpack.c.l.b16 %v247
        %v2096 = vunpack.c.l.b16 %v248
        %v2097 = vunpack.c.l.b16 %v249
        %v2098 = vunpack.c.l.b16 %v250
        %v2099 = vunpack.c.l.b16 %v251
        %v2100 = vunpack.c.l.b16 %v252
        %v2101 = vunpack.c.l.b16 %v253
        %v2102 = vunpack.c.l.b16 %v254
        %v2103 = vunpack.c.l.b16 %v255
        %v2104 = vunpack.c.l.b16 %v256
        %v2105 = vunpack.c.l.b16 %v257
        %v2106 = vunpack.c.l.b16 %v258
        %v2107 = vunpack.c.l.b16 %v259
        %v2108 = vunpack.c.l.b16 %v260
        %v2109 = vunpack.c.l.b16 %v261
        %v2110 = vunpack.c.l.b16 %v262
        %v2111 = vunpack.c.l.b16 %v263
        %v2112 = vunpack.c.l.b16 %v264
        %v2113 = vunpack.c.l.b16 %v265
        %v2114 = vunpack.c.l.b16 %v266
        %v2115 = vunpack.c.l.b16 %v267
        %v2116 = vunpack.c.l.b16 %v268
        %v2117 = vunpack.c.l.b16 %v269
        %v2118 = vunpack.c.l.b16 %v270
        %v2119 = vpack.c.b16 %v2088, %v2087
        %v2120 = vpack.c.b16 %v2090, %v2089
        %v2121 = vpack.c.b16 %v2092, %v2091
        %v2122 = vpack.c.b16 %v2094, %v2093
        %v2123 = vpack.c.b16 %v2096, %v2095
        %v2124 = vpack.c.b16 %v2098, %v2097
        %v2125 = vpack.c.b16 %v2100, %v2099
        %v2126 = vpack.c.b16 %v2102, %v2101
        %v2127 = vpack.c.b16 %v2104, %v2103
        %v2128 = vpack.c.b16 %v2106, %v2105
        %v2129 = vpack.c.b16 %v2108, %v2107
        %v2130 = vpack.c.b16 %v2110, %v2109
        %v2131 = vpack.c.b16 %v2112, %v2111
        %v2132 = vpack.c.b16 %v2114, %v2113
        %v2133 = vpack.c.b16 %v2116, %v2115
        %v2134 = vpack.c.b16 %v2118, %v2117
        %v2135 = vunpack.c.l.b16 %v303
        %v2136 = vunpack.c.l.b16 %v313
        %v2137 = vunpack.c.l.b16 %v327
        %v2138 = vunpack.c.l.b16 %v337
        %v2139 = vunpack.c.l.b16 %v351
        %v2140 = vunpack.c.l.b16 %v361
        %v2141 = vunpack.c.l.b16 %v375
        %v2142 = vunpack.c.l.b16 %v385
        %v2143 = vunpack.c.l.b16 %v399
        %v2144 = vunpack.c.l.b16 %v409
        %v2145 = vunpack.c.l.b16 %v423
        %v2146 = vunpack.c.l.b16 %v433
        %v2147 = vunpack.c.l.b16 %v447
        %v2148 = vunpack.c.l.b16 %v457
        %v2149 = vunpack.c.l.b16 %v471
        %v2150 = vunpack.c.l.b16 %v481
        %v2151 = vunpack.c.l.b16 %v495
        %v2152 = vunpack.c.l.b16 %v505
        %v2153 = vunpack.c.l.b16 %v519
        %v2154 = vunpack.c.l.b16 %v529
        %v2155 = vunpack.c.l.b16 %v543
        %v2156 = vunpack.c.l.b16 %v553
        %v2157 = vunpack.c.l.b16 %v567
        %v2158 = vunpack.c.l.b16 %v577
        %v2159 = vunpack.c.l.b16 %v591
        %v2160 = vunpack.c.l.b16 %v601
        %v2161 = vunpack.c.l.b16 %v615
        %v2162 = vunpack.c.l.b16 %v625
        %v2163 = vunpack.c.l.b16 %v639
        %v2164 = vunpack.c.l.b16 %v649
        %v2165 = vunpack.c.l.b16 %v663
        %v2166 = vunpack.c.l.b16 %v673
        %v2167 = vpack.c.b16 %v2136, %v2135
        %v2168 = vpack.c.b16 %v2138, %v2137
        %v2169 = vpack.c.b16 %v2140, %v2139
        %v2170 = vpack.c.b16 %v2142, %v2141
        %v2171 = vpack.c.b16 %v2144, %v2143
        %v2172 = vpack.c.b16 %v2146, %v2145
        %v2173 = vpack.c.b16 %v2148, %v2147
        %v2174 = vpack.c.b16 %v2150, %v2149
        %v2175 = vpack.c.b16 %v2152, %v2151
        %v2176 = vpack.c.b16 %v2154, %v2153
        %v2177 = vpack.c.b16 %v2156, %v2155
        %v2178 = vpack.c.b16 %v2158, %v2157
        %v2179 = vpack.c.b16 %v2160, %v2159
        %v2180 = vpack.c.b16 %v2162, %v2161
        %v2181 = vpack.c.b16 %v2164, %v2163
        %v2182 = vpack.c.b16 %v2166, %v2165
        %2183 = vrot.lane.b32.xlu0 %v2167, 4
        %v2184 = vpop.permute.xlu0 %2183
        %2185 = vrot.lane.b32.xlu0 %v2168, 4
        %v2186 = vpop.permute.xlu0 %2185
        %2187 = vrot.lane.b32.xlu0 %v2169, 4
        %v2188 = vpop.permute.xlu0 %2187
        %2189 = vrot.lane.b32.xlu0 %v2170, 4
        %v2190 = vpop.permute.xlu0 %2189
        %2191 = vrot.lane.b32.xlu0 %v2171, 4
        %v2192 = vpop.permute.xlu0 %2191
        %2193 = vrot.lane.b32.xlu0 %v2172, 4
        %v2194 = vpop.permute.xlu0 %2193
        %2195 = vrot.lane.b32.xlu0 %v2173, 4
        %v2196 = vpop.permute.xlu0 %2195
        %2197 = vrot.lane.b32.xlu0 %v2174, 4
        %v2198 = vpop.permute.xlu0 %2197
        %2199 = vrot.lane.b32.xlu0 %v2175, 4
        %v2200 = vpop.permute.xlu0 %2199
        %2201 = vrot.lane.b32.xlu0 %v2176, 4
        %v2202 = vpop.permute.xlu0 %2201
        %2203 = vrot.lane.b32.xlu0 %v2177, 4
        %v2204 = vpop.permute.xlu0 %2203
        %2205 = vrot.lane.b32.xlu0 %v2178, 4
        %v2206 = vpop.permute.xlu0 %2205
        %2207 = vrot.lane.b32.xlu0 %v2179, 4
        %v2208 = vpop.permute.xlu0 %2207
        %2209 = vrot.lane.b32.xlu0 %v2180, 4
        %v2210 = vpop.permute.xlu0 %2209
        %2211 = vrot.lane.b32.xlu0 %v2181, 4
        %v2212 = vpop.permute.xlu0 %2211
        %2213 = vrot.lane.b32.xlu0 %v2182, 4
        %v2214 = vpop.permute.xlu0 %2213
        %v2215 = vunpack.c.l.b16 %v744
        %v2216 = vunpack.c.l.b16 %v747
        %v2217 = vunpack.c.l.b16 %v751
        %v2218 = vunpack.c.l.b16 %v754
        %v2219 = vunpack.c.l.b16 %v758
        %v2220 = vunpack.c.l.b16 %v761
        %v2221 = vunpack.c.l.b16 %v765
        %v2222 = vunpack.c.l.b16 %v768
        %v2223 = vunpack.c.l.b16 %v772
        %v2224 = vunpack.c.l.b16 %v775
        %v2225 = vunpack.c.l.b16 %v779
        %v2226 = vunpack.c.l.b16 %v782
        %v2227 = vunpack.c.l.b16 %v786
        %v2228 = vunpack.c.l.b16 %v789
        %v2229 = vunpack.c.l.b16 %v793
        %v2230 = vunpack.c.l.b16 %v796
        %v2231 = vunpack.c.l.b16 %v800
        %v2232 = vunpack.c.l.b16 %v803
        %v2233 = vunpack.c.l.b16 %v807
        %v2234 = vunpack.c.l.b16 %v810
        %v2235 = vunpack.c.l.b16 %v814
        %v2236 = vunpack.c.l.b16 %v817
        %v2237 = vunpack.c.l.b16 %v821
        %v2238 = vunpack.c.l.b16 %v824
        %v2239 = vunpack.c.l.b16 %v828
        %v2240 = vunpack.c.l.b16 %v831
        %v2241 = vunpack.c.l.b16 %v835
        %v2242 = vunpack.c.l.b16 %v838
        %v2243 = vunpack.c.l.b16 %v842
        %v2244 = vunpack.c.l.b16 %v845
        %v2245 = vunpack.c.l.b16 %v849
        %v2246 = vunpack.c.l.b16 %v852
        %v2247 = vpack.c.b16 %v2216, %v2215
        %v2248 = vpack.c.b16 %v2218, %v2217
        %v2249 = vpack.c.b16 %v2220, %v2219
        %v2250 = vpack.c.b16 %v2222, %v2221
        %v2251 = vpack.c.b16 %v2224, %v2223
        %v2252 = vpack.c.b16 %v2226, %v2225
        %v2253 = vpack.c.b16 %v2228, %v2227
        %v2254 = vpack.c.b16 %v2230, %v2229
        %v2255 = vpack.c.b16 %v2232, %v2231
        %v2256 = vpack.c.b16 %v2234, %v2233
        %v2257 = vpack.c.b16 %v2236, %v2235
        %v2258 = vpack.c.b16 %v2238, %v2237
        %v2259 = vpack.c.b16 %v2240, %v2239
        %v2260 = vpack.c.b16 %v2242, %v2241
        %v2261 = vpack.c.b16 %v2244, %v2243
        %v2262 = vpack.c.b16 %v2246, %v2245
        %2263 = vrot.lane.b32.xlu0 %v2247, 8
        %v2264 = vpop.permute.xlu0 %2263
        %2265 = vrot.lane.b32.xlu0 %v2248, 8
        %v2266 = vpop.permute.xlu0 %2265
        %2267 = vrot.lane.b32.xlu0 %v2249, 8
        %v2268 = vpop.permute.xlu0 %2267
        %2269 = vrot.lane.b32.xlu0 %v2250, 8
        %v2270 = vpop.permute.xlu0 %2269
        %2271 = vrot.lane.b32.xlu0 %v2251, 8
        %v2272 = vpop.permute.xlu0 %2271
        %2273 = vrot.lane.b32.xlu0 %v2252, 8
        %v2274 = vpop.permute.xlu0 %2273
        %2275 = vrot.lane.b32.xlu0 %v2253, 8
        %v2276 = vpop.permute.xlu0 %2275
        %2277 = vrot.lane.b32.xlu0 %v2254, 8
        %v2278 = vpop.permute.xlu0 %2277
        %2279 = vrot.lane.b32.xlu0 %v2255, 8
        %v2280 = vpop.permute.xlu0 %2279
        %2281 = vrot.lane.b32.xlu0 %v2256, 8
        %v2282 = vpop.permute.xlu0 %2281
        %2283 = vrot.lane.b32.xlu0 %v2257, 8
        %v2284 = vpop.permute.xlu0 %2283
        %2285 = vrot.lane.b32.xlu0 %v2258, 8
        %v2286 = vpop.permute.xlu0 %2285
        %2287 = vrot.lane.b32.xlu0 %v2259, 8
        %v2288 = vpop.permute.xlu0 %2287
        %2289 = vrot.lane.b32.xlu0 %v2260, 8
        %v2290 = vpop.permute.xlu0 %2289
        %2291 = vrot.lane.b32.xlu0 %v2261, 8
        %v2292 = vpop.permute.xlu0 %2291
        %2293 = vrot.lane.b32.xlu0 %v2262, 8
        %v2294 = vpop.permute.xlu0 %2293
        %v2311 = vunpack.c.l.b16 %v854
        %v2312 = vunpack.c.l.b16 %v855
        %v2313 = vunpack.c.l.b16 %v856
        %v2314 = vunpack.c.l.b16 %v857
        %v2315 = vunpack.c.l.b16 %v858
        %v2316 = vunpack.c.l.b16 %v859
        %v2317 = vunpack.c.l.b16 %v860
        %v2318 = vunpack.c.l.b16 %v861
        %v2319 = vunpack.c.l.b16 %v862
        %v2320 = vunpack.c.l.b16 %v863
        %v2321 = vunpack.c.l.b16 %v864
        %v2322 = vunpack.c.l.b16 %v865
        %v2323 = vunpack.c.l.b16 %v866
        %v2324 = vunpack.c.l.b16 %v867
        %v2325 = vunpack.c.l.b16 %v868
        %v2326 = vunpack.c.l.b16 %v869
        %v2327 = vunpack.c.l.b16 %v870
        %v2328 = vunpack.c.l.b16 %v871
        %v2329 = vunpack.c.l.b16 %v872
        %v2330 = vunpack.c.l.b16 %v873
        %v2331 = vunpack.c.l.b16 %v874
        %v2332 = vunpack.c.l.b16 %v875
        %v2333 = vunpack.c.l.b16 %v876
        %v2334 = vunpack.c.l.b16 %v877
        %v2335 = vunpack.c.l.b16 %v878
        %v2336 = vunpack.c.l.b16 %v879
        %v2337 = vunpack.c.l.b16 %v880
        %v2338 = vunpack.c.l.b16 %v881
        %v2339 = vunpack.c.l.b16 %v882
        %v2340 = vunpack.c.l.b16 %v883
        %v2341 = vunpack.c.l.b16 %v884
        %v2342 = vunpack.c.l.b16 %v885
        %v2343 = vpack.c.b16 %v2312, %v2311
        %v2344 = vpack.c.b16 %v2314, %v2313
        %v2345 = vpack.c.b16 %v2316, %v2315
        %v2346 = vpack.c.b16 %v2318, %v2317
        %v2347 = vpack.c.b16 %v2320, %v2319
        %v2348 = vpack.c.b16 %v2322, %v2321
        %v2349 = vpack.c.b16 %v2324, %v2323
        %v2350 = vpack.c.b16 %v2326, %v2325
        %v2351 = vpack.c.b16 %v2328, %v2327
        %v2352 = vpack.c.b16 %v2330, %v2329
        %v2353 = vpack.c.b16 %v2332, %v2331
        %v2354 = vpack.c.b16 %v2334, %v2333
        %v2355 = vpack.c.b16 %v2336, %v2335
        %v2356 = vpack.c.b16 %v2338, %v2337
        %v2357 = vpack.c.b16 %v2340, %v2339
        %v2358 = vpack.c.b16 %v2342, %v2341
        %2359 = vrot.lane.b32.xlu0 %v2343, 12
        %v2360 = vpop.permute.xlu0 %2359
        %2361 = vrot.lane.b32.xlu0 %v2344, 12
        %v2362 = vpop.permute.xlu0 %2361
        %2363 = vrot.lane.b32.xlu0 %v2345, 12
        %v2364 = vpop.permute.xlu0 %2363
        %2365 = vrot.lane.b32.xlu0 %v2346, 12
        %v2366 = vpop.permute.xlu0 %2365
        %2367 = vrot.lane.b32.xlu0 %v2347, 12
        %v2368 = vpop.permute.xlu0 %2367
        %2369 = vrot.lane.b32.xlu0 %v2348, 12
        %v2370 = vpop.permute.xlu0 %2369
        %2371 = vrot.lane.b32.xlu0 %v2349, 12
        %v2372 = vpop.permute.xlu0 %2371
        %2373 = vrot.lane.b32.xlu0 %v2350, 12
        %v2374 = vpop.permute.xlu0 %2373
        %2375 = vrot.lane.b32.xlu0 %v2351, 12
        %v2376 = vpop.permute.xlu0 %2375
        %2377 = vrot.lane.b32.xlu0 %v2352, 12
        %v2378 = vpop.permute.xlu0 %2377
        %2379 = vrot.lane.b32.xlu0 %v2353, 12
        %v2380 = vpop.permute.xlu0 %2379
        %2381 = vrot.lane.b32.xlu0 %v2354, 12
        %v2382 = vpop.permute.xlu0 %2381
        %2383 = vrot.lane.b32.xlu0 %v2355, 12
        %v2384 = vpop.permute.xlu0 %2383
        %2385 = vrot.lane.b32.xlu0 %v2356, 12
        %v2386 = vpop.permute.xlu0 %2385
        %2387 = vrot.lane.b32.xlu0 %v2357, 12
        %v2388 = vpop.permute.xlu0 %2387
        %2389 = vrot.lane.b32.xlu0 %v2358, 12
        %v2390 = vpop.permute.xlu0 %2389
        %v2391 = vunpack.c.l.b16 %v915
        %v2392 = vunpack.c.l.b16 %v925
        %v2393 = vunpack.c.l.b16 %v939
        %v2394 = vunpack.c.l.b16 %v949
        %v2395 = vunpack.c.l.b16 %v963
        %v2396 = vunpack.c.l.b16 %v973
        %v2397 = vunpack.c.l.b16 %v987
        %v2398 = vunpack.c.l.b16 %v997
        %v2399 = vunpack.c.l.b16 %v1011
        %v2400 = vunpack.c.l.b16 %v1021
        %v2401 = vunpack.c.l.b16 %v1035
        %v2402 = vunpack.c.l.b16 %v1045
        %v2403 = vunpack.c.l.b16 %v1059
        %v2404 = vunpack.c.l.b16 %v1069
        %v2405 = vunpack.c.l.b16 %v1083
        %v2406 = vunpack.c.l.b16 %v1093
        %v2407 = vunpack.c.l.b16 %v1107
        %v2408 = vunpack.c.l.b16 %v1117
        %v2409 = vunpack.c.l.b16 %v1131
        %v2410 = vunpack.c.l.b16 %v1141
        %v2411 = vunpack.c.l.b16 %v1155
        %v2412 = vunpack.c.l.b16 %v1165
        %v2413 = vunpack.c.l.b16 %v1179
        %v2414 = vunpack.c.l.b16 %v1189
        %v2415 = vunpack.c.l.b16 %v1203
        %v2416 = vunpack.c.l.b16 %v1213
        %v2417 = vunpack.c.l.b16 %v1227
        %v2418 = vunpack.c.l.b16 %v1237
        %v2419 = vunpack.c.l.b16 %v1251
        %v2420 = vunpack.c.l.b16 %v1261
        %v2421 = vunpack.c.l.b16 %v1275
        %v2422 = vunpack.c.l.b16 %v1285
        %v2423 = vpack.c.b16 %v2392, %v2391
        %v2424 = vpack.c.b16 %v2394, %v2393
        %v2425 = vpack.c.b16 %v2396, %v2395
        %v2426 = vpack.c.b16 %v2398, %v2397
        %v2427 = vpack.c.b16 %v2400, %v2399
        %v2428 = vpack.c.b16 %v2402, %v2401
        %v2429 = vpack.c.b16 %v2404, %v2403
        %v2430 = vpack.c.b16 %v2406, %v2405
        %v2431 = vpack.c.b16 %v2408, %v2407
        %v2432 = vpack.c.b16 %v2410, %v2409
        %v2433 = vpack.c.b16 %v2412, %v2411
        %v2434 = vpack.c.b16 %v2414, %v2413
        %v2435 = vpack.c.b16 %v2416, %v2415
        %v2436 = vpack.c.b16 %v2418, %v2417
        %v2437 = vpack.c.b16 %v2420, %v2419
        %v2438 = vpack.c.b16 %v2422, %v2421
        %2439 = vrot.lane.b32.xlu0 %v2423, 16
        %v2440 = vpop.permute.xlu0 %2439
        %2441 = vrot.lane.b32.xlu0 %v2424, 16
        %v2442 = vpop.permute.xlu0 %2441
        %2443 = vrot.lane.b32.xlu0 %v2425, 16
        %v2444 = vpop.permute.xlu0 %2443
        %2445 = vrot.lane.b32.xlu0 %v2426, 16
        %v2446 = vpop.permute.xlu0 %2445
        %2447 = vrot.lane.b32.xlu0 %v2427, 16
        %v2448 = vpop.permute.xlu0 %2447
        %2449 = vrot.lane.b32.xlu0 %v2428, 16
        %v2450 = vpop.permute.xlu0 %2449
        %2451 = vrot.lane.b32.xlu0 %v2429, 16
        %v2452 = vpop.permute.xlu0 %2451
        %2453 = vrot.lane.b32.xlu0 %v2430, 16
        %v2454 = vpop.permute.xlu0 %2453
        %2455 = vrot.lane.b32.xlu0 %v2431, 16
        %v2456 = vpop.permute.xlu0 %2455
        %2457 = vrot.lane.b32.xlu0 %v2432, 16
        %v2458 = vpop.permute.xlu0 %2457
        %2459 = vrot.lane.b32.xlu0 %v2433, 16
        %v2460 = vpop.permute.xlu0 %2459
        %2461 = vrot.lane.b32.xlu0 %v2434, 16
        %v2462 = vpop.permute.xlu0 %2461
        %2463 = vrot.lane.b32.xlu0 %v2435, 16
        %v2464 = vpop.permute.xlu0 %2463
        %2465 = vrot.lane.b32.xlu0 %v2436, 16
        %v2466 = vpop.permute.xlu0 %2465
        %2467 = vrot.lane.b32.xlu0 %v2437, 16
        %v2468 = vpop.permute.xlu0 %2467
        %2469 = vrot.lane.b32.xlu0 %v2438, 16
        %v2470 = vpop.permute.xlu0 %2469
        %v2471 = vunpack.c.l.b16 %v1353
        %v2472 = vunpack.c.l.b16 %v1356
        %v2473 = vunpack.c.l.b16 %v1360
        %v2474 = vunpack.c.l.b16 %v1363
        %v2475 = vunpack.c.l.b16 %v1367
        %v2476 = vunpack.c.l.b16 %v1370
        %v2477 = vunpack.c.l.b16 %v1374
        %v2478 = vunpack.c.l.b16 %v1377
        %v2479 = vunpack.c.l.b16 %v1381
        %v2480 = vunpack.c.l.b16 %v1384
        %v2481 = vunpack.c.l.b16 %v1388
        %v2482 = vunpack.c.l.b16 %v1391
        %v2483 = vunpack.c.l.b16 %v1395
        %v2484 = vunpack.c.l.b16 %v1398
        %v2485 = vunpack.c.l.b16 %v1402
        %v2486 = vunpack.c.l.b16 %v1405
        %v2487 = vunpack.c.l.b16 %v1409
        %v2488 = vunpack.c.l.b16 %v1412
        %v2489 = vunpack.c.l.b16 %v1416
        %v2490 = vunpack.c.l.b16 %v1419
        %v2491 = vunpack.c.l.b16 %v1423
        %v2492 = vunpack.c.l.b16 %v1426
        %v2493 = vunpack.c.l.b16 %v1430
        %v2494 = vunpack.c.l.b16 %v1433
        %v2495 = vunpack.c.l.b16 %v1437
        %v2496 = vunpack.c.l.b16 %v1440
        %v2497 = vunpack.c.l.b16 %v1444
        %v2498 = vunpack.c.l.b16 %v1447
        %v2499 = vunpack.c.l.b16 %v1451
        %v2500 = vunpack.c.l.b16 %v1454
        %v2501 = vunpack.c.l.b16 %v1458
        %v2502 = vunpack.c.l.b16 %v1461
        %v2503 = vpack.c.b16 %v2472, %v2471
        %v2504 = vpack.c.b16 %v2474, %v2473
        %v2505 = vpack.c.b16 %v2476, %v2475
        %v2506 = vpack.c.b16 %v2478, %v2477
        %v2507 = vpack.c.b16 %v2480, %v2479
        %v2508 = vpack.c.b16 %v2482, %v2481
        %v2509 = vpack.c.b16 %v2484, %v2483
        %v2510 = vpack.c.b16 %v2486, %v2485
        %v2511 = vpack.c.b16 %v2488, %v2487
        %v2512 = vpack.c.b16 %v2490, %v2489
        %v2513 = vpack.c.b16 %v2492, %v2491
        %v2514 = vpack.c.b16 %v2494, %v2493
        %v2515 = vpack.c.b16 %v2496, %v2495
        %v2516 = vpack.c.b16 %v2498, %v2497
        %v2517 = vpack.c.b16 %v2500, %v2499
        %v2518 = vpack.c.b16 %v2502, %v2501
        %2519 = vrot.lane.b32.xlu0 %v2503, 20
        %v2520 = vpop.permute.xlu0 %2519
        %2521 = vrot.lane.b32.xlu0 %v2504, 20
        %v2522 = vpop.permute.xlu0 %2521
        %2523 = vrot.lane.b32.xlu0 %v2505, 20
        %v2524 = vpop.permute.xlu0 %2523
        %2525 = vrot.lane.b32.xlu0 %v2506, 20
        %v2526 = vpop.permute.xlu0 %2525
        %2527 = vrot.lane.b32.xlu0 %v2507, 20
        %v2528 = vpop.permute.xlu0 %2527
        %2529 = vrot.lane.b32.xlu0 %v2508, 20
        %v2530 = vpop.permute.xlu0 %2529
        %2531 = vrot.lane.b32.xlu0 %v2509, 20
        %v2532 = vpop.permute.xlu0 %2531
        %2533 = vrot.lane.b32.xlu0 %v2510, 20
        %v2534 = vpop.permute.xlu0 %2533
        %2535 = vrot.lane.b32.xlu0 %v2511, 20
        %v2536 = vpop.permute.xlu0 %2535
        %2537 = vrot.lane.b32.xlu0 %v2512, 20
        %v2538 = vpop.permute.xlu0 %2537
        %2539 = vrot.lane.b32.xlu0 %v2513, 20
        %v2540 = vpop.permute.xlu0 %2539
        %2541 = vrot.lane.b32.xlu0 %v2514, 20
        %v2542 = vpop.permute.xlu0 %2541
        %2543 = vrot.lane.b32.xlu0 %v2515, 20
        %v2544 = vpop.permute.xlu0 %2543
        %2545 = vrot.lane.b32.xlu0 %v2516, 20
        %v2546 = vpop.permute.xlu0 %2545
        %2547 = vrot.lane.b32.xlu0 %v2517, 20
        %v2548 = vpop.permute.xlu0 %2547
        %2549 = vrot.lane.b32.xlu0 %v2518, 20
        %v2550 = vpop.permute.xlu0 %2549
        %v2567 = vunpack.c.l.b16 %v1463
        %v2568 = vunpack.c.l.b16 %v1464
        %v2569 = vunpack.c.l.b16 %v1465
        %v2570 = vunpack.c.l.b16 %v1466
        %v2571 = vunpack.c.l.b16 %v1467
        %v2572 = vunpack.c.l.b16 %v1468
        %v2573 = vunpack.c.l.b16 %v1469
        %v2574 = vunpack.c.l.b16 %v1470
        %v2575 = vunpack.c.l.b16 %v1471
        %v2576 = vunpack.c.l.b16 %v1472
        %v2577 = vunpack.c.l.b16 %v1473
        %v2578 = vunpack.c.l.b16 %v1474
        %v2579 = vunpack.c.l.b16 %v1475
        %v2580 = vunpack.c.l.b16 %v1476
        %v2581 = vunpack.c.l.b16 %v1477
        %v2582 = vunpack.c.l.b16 %v1478
        %v2583 = vunpack.c.l.b16 %v1479
        %v2584 = vunpack.c.l.b16 %v1480
        %v2585 = vunpack.c.l.b16 %v1481
        %v2586 = vunpack.c.l.b16 %v1482
        %v2587 = vunpack.c.l.b16 %v1483
        %v2588 = vunpack.c.l.b16 %v1484
        %v2589 = vunpack.c.l.b16 %v1485
        %v2590 = vunpack.c.l.b16 %v1486
        %v2591 = vunpack.c.l.b16 %v1487
        %v2592 = vunpack.c.l.b16 %v1488
        %v2593 = vunpack.c.l.b16 %v1489
        %v2594 = vunpack.c.l.b16 %v1490
        %v2595 = vunpack.c.l.b16 %v1491
        %v2596 = vunpack.c.l.b16 %v1492
        %v2597 = vunpack.c.l.b16 %v1493
        %v2598 = vunpack.c.l.b16 %v1494
        %v2599 = vpack.c.b16 %v2568, %v2567
        %v2600 = vpack.c.b16 %v2570, %v2569
        %v2601 = vpack.c.b16 %v2572, %v2571
        %v2602 = vpack.c.b16 %v2574, %v2573
        %v2603 = vpack.c.b16 %v2576, %v2575
        %v2604 = vpack.c.b16 %v2578, %v2577
        %v2605 = vpack.c.b16 %v2580, %v2579
        %v2606 = vpack.c.b16 %v2582, %v2581
        %v2607 = vpack.c.b16 %v2584, %v2583
        %v2608 = vpack.c.b16 %v2586, %v2585
        %v2609 = vpack.c.b16 %v2588, %v2587
        %v2610 = vpack.c.b16 %v2590, %v2589
        %v2611 = vpack.c.b16 %v2592, %v2591
        %v2612 = vpack.c.b16 %v2594, %v2593
        %v2613 = vpack.c.b16 %v2596, %v2595
        %v2614 = vpack.c.b16 %v2598, %v2597
        %2615 = vrot.lane.b32.xlu0 %v2599, 24
        %v2616 = vpop.permute.xlu0 %2615
        %2617 = vrot.lane.b32.xlu0 %v2600, 24
        %v2618 = vpop.permute.xlu0 %2617
        %2619 = vrot.lane.b32.xlu0 %v2601, 24
        %v2620 = vpop.permute.xlu0 %2619
        %2621 = vrot.lane.b32.xlu0 %v2602, 24
        %v2622 = vpop.permute.xlu0 %2621
        %2623 = vrot.lane.b32.xlu0 %v2603, 24
        %v2624 = vpop.permute.xlu0 %2623
        %2625 = vrot.lane.b32.xlu0 %v2604, 24
        %v2626 = vpop.permute.xlu0 %2625
        %2627 = vrot.lane.b32.xlu0 %v2605, 24
        %v2628 = vpop.permute.xlu0 %2627
        %2629 = vrot.lane.b32.xlu0 %v2606, 24
        %v2630 = vpop.permute.xlu0 %2629
        %2631 = vrot.lane.b32.xlu0 %v2607, 24
        %v2632 = vpop.permute.xlu0 %2631
        %2633 = vrot.lane.b32.xlu0 %v2608, 24
        %v2634 = vpop.permute.xlu0 %2633
        %2635 = vrot.lane.b32.xlu0 %v2609, 24
        %v2636 = vpop.permute.xlu0 %2635
        %2637 = vrot.lane.b32.xlu0 %v2610, 24
        %v2638 = vpop.permute.xlu0 %2637
        %2639 = vrot.lane.b32.xlu0 %v2611, 24
        %v2640 = vpop.permute.xlu0 %2639
        %2641 = vrot.lane.b32.xlu0 %v2612, 24
        %v2642 = vpop.permute.xlu0 %2641
        %2643 = vrot.lane.b32.xlu0 %v2613, 24
        %v2644 = vpop.permute.xlu0 %2643
        %2645 = vrot.lane.b32.xlu0 %v2614, 24
        %v2646 = vpop.permute.xlu0 %2645
        %v2647 = vunpack.c.l.b16 %v1524
        %v2648 = vunpack.c.l.b16 %v1534
        %v2649 = vunpack.c.l.b16 %v1548
        %v2650 = vunpack.c.l.b16 %v1558
        %v2651 = vunpack.c.l.b16 %v1572
        %v2652 = vunpack.c.l.b16 %v1582
        %v2653 = vunpack.c.l.b16 %v1596
        %v2654 = vunpack.c.l.b16 %v1606
        %v2655 = vunpack.c.l.b16 %v1620
        %v2656 = vunpack.c.l.b16 %v1630
        %v2657 = vunpack.c.l.b16 %v1644
        %v2658 = vunpack.c.l.b16 %v1654
        %v2659 = vunpack.c.l.b16 %v1668
        %v2660 = vunpack.c.l.b16 %v1678
        %v2661 = vunpack.c.l.b16 %v1692
        %v2662 = vunpack.c.l.b16 %v1702
        %v2663 = vunpack.c.l.b16 %v1716
        %v2664 = vunpack.c.l.b16 %v1726
        %v2665 = vunpack.c.l.b16 %v1740
        %v2666 = vunpack.c.l.b16 %v1750
        %v2667 = vunpack.c.l.b16 %v1764
        %v2668 = vunpack.c.l.b16 %v1774
        %v2669 = vunpack.c.l.b16 %v1788
        %v2670 = vunpack.c.l.b16 %v1798
        %v2671 = vunpack.c.l.b16 %v1812
        %v2672 = vunpack.c.l.b16 %v1822
        %v2673 = vunpack.c.l.b16 %v1836
        %v2674 = vunpack.c.l.b16 %v1846
        %v2675 = vunpack.c.l.b16 %v1860
        %v2676 = vunpack.c.l.b16 %v1870
        %v2677 = vunpack.c.l.b16 %v1884
        %v2678 = vunpack.c.l.b16 %v1894
        %v2679 = vpack.c.b16 %v2648, %v2647
        %v2680 = vpack.c.b16 %v2650, %v2649
        %v2681 = vpack.c.b16 %v2652, %v2651
        %v2682 = vpack.c.b16 %v2654, %v2653
        %v2683 = vpack.c.b16 %v2656, %v2655
        %v2684 = vpack.c.b16 %v2658, %v2657
        %v2685 = vpack.c.b16 %v2660, %v2659
        %v2686 = vpack.c.b16 %v2662, %v2661
        %v2687 = vpack.c.b16 %v2664, %v2663
        %v2688 = vpack.c.b16 %v2666, %v2665
        %v2689 = vpack.c.b16 %v2668, %v2667
        %v2690 = vpack.c.b16 %v2670, %v2669
        %v2691 = vpack.c.b16 %v2672, %v2671
        %v2692 = vpack.c.b16 %v2674, %v2673
        %v2693 = vpack.c.b16 %v2676, %v2675
        %v2694 = vpack.c.b16 %v2678, %v2677
        %2695 = vrot.lane.b32.xlu0 %v2679, 28
        %v2696 = vpop.permute.xlu0 %2695
        %2697 = vrot.lane.b32.xlu0 %v2680, 28
        %v2698 = vpop.permute.xlu0 %2697
        %2699 = vrot.lane.b32.xlu0 %v2681, 28
        %v2700 = vpop.permute.xlu0 %2699
        %2701 = vrot.lane.b32.xlu0 %v2682, 28
        %v2702 = vpop.permute.xlu0 %2701
        %2703 = vrot.lane.b32.xlu0 %v2683, 28
        %v2704 = vpop.permute.xlu0 %2703
        %2705 = vrot.lane.b32.xlu0 %v2684, 28
        %v2706 = vpop.permute.xlu0 %2705
        %2707 = vrot.lane.b32.xlu0 %v2685, 28
        %v2708 = vpop.permute.xlu0 %2707
        %2709 = vrot.lane.b32.xlu0 %v2686, 28
        %v2710 = vpop.permute.xlu0 %2709
        %2711 = vrot.lane.b32.xlu0 %v2687, 28
        %v2712 = vpop.permute.xlu0 %2711
        %2713 = vrot.lane.b32.xlu0 %v2688, 28
        %v2714 = vpop.permute.xlu0 %2713
        %2715 = vrot.lane.b32.xlu0 %v2689, 28
        %v2716 = vpop.permute.xlu0 %2715
        %2717 = vrot.lane.b32.xlu0 %v2690, 28
        %v2718 = vpop.permute.xlu0 %2717
        %2719 = vrot.lane.b32.xlu0 %v2691, 28
        %v2720 = vpop.permute.xlu0 %2719
        %2721 = vrot.lane.b32.xlu0 %v2692, 28
        %v2722 = vpop.permute.xlu0 %2721
        %2723 = vrot.lane.b32.xlu0 %v2693, 28
        %v2724 = vpop.permute.xlu0 %2723
        %2725 = vrot.lane.b32.xlu0 %v2694, 28
        %v2726 = vpop.permute.xlu0 %2725
        %v2727 = vunpack.c.l.b16 %v1962
        %v2728 = vunpack.c.l.b16 %v1965
        %v2729 = vunpack.c.l.b16 %v1969
        %v2730 = vunpack.c.l.b16 %v1972
        %v2731 = vunpack.c.l.b16 %v1976
        %v2732 = vunpack.c.l.b16 %v1979
        %v2733 = vunpack.c.l.b16 %v1983
        %v2734 = vunpack.c.l.b16 %v1986
        %v2735 = vunpack.c.l.b16 %v1990
        %v2736 = vunpack.c.l.b16 %v1993
        %v2737 = vunpack.c.l.b16 %v1997
        %v2738 = vunpack.c.l.b16 %v2000
        %v2739 = vunpack.c.l.b16 %v2004
        %v2740 = vunpack.c.l.b16 %v2007
        %v2741 = vunpack.c.l.b16 %v2011
        %v2742 = vunpack.c.l.b16 %v2014
        %v2743 = vunpack.c.l.b16 %v2018
        %v2744 = vunpack.c.l.b16 %v2021
        %v2745 = vunpack.c.l.b16 %v2025
        %v2746 = vunpack.c.l.b16 %v2028
        %v2747 = vunpack.c.l.b16 %v2032
        %v2748 = vunpack.c.l.b16 %v2035
        %v2749 = vunpack.c.l.b16 %v2039
        %v2750 = vunpack.c.l.b16 %v2042
        %v2751 = vunpack.c.l.b16 %v2046
        %v2752 = vunpack.c.l.b16 %v2049
        %v2753 = vunpack.c.l.b16 %v2053
        %v2754 = vunpack.c.l.b16 %v2056
        %v2755 = vunpack.c.l.b16 %v2060
        %v2756 = vunpack.c.l.b16 %v2063
        %v2757 = vunpack.c.l.b16 %v2067
        %v2758 = vunpack.c.l.b16 %v2070
        %v2759 = vpack.c.b16 %v2728, %v2727
        %v2760 = vpack.c.b16 %v2730, %v2729
        %v2761 = vpack.c.b16 %v2732, %v2731
        %v2762 = vpack.c.b16 %v2734, %v2733
        %v2763 = vpack.c.b16 %v2736, %v2735
        %v2764 = vpack.c.b16 %v2738, %v2737
        %v2765 = vpack.c.b16 %v2740, %v2739
        %v2766 = vpack.c.b16 %v2742, %v2741
        %v2767 = vpack.c.b16 %v2744, %v2743
        %v2768 = vpack.c.b16 %v2746, %v2745
        %v2769 = vpack.c.b16 %v2748, %v2747
        %v2770 = vpack.c.b16 %v2750, %v2749
        %v2771 = vpack.c.b16 %v2752, %v2751
        %v2772 = vpack.c.b16 %v2754, %v2753
        %v2773 = vpack.c.b16 %v2756, %v2755
        %v2774 = vpack.c.b16 %v2758, %v2757
        %2775 = vrot.lane.b32.xlu0 %v2759, 32
        %v2776 = vpop.permute.xlu0 %2775
        %2777 = vrot.lane.b32.xlu0 %v2760, 32
        %v2778 = vpop.permute.xlu0 %2777
        %2779 = vrot.lane.b32.xlu0 %v2761, 32
        %v2780 = vpop.permute.xlu0 %2779
        %2781 = vrot.lane.b32.xlu0 %v2762, 32
        %v2782 = vpop.permute.xlu0 %2781
        %2783 = vrot.lane.b32.xlu0 %v2763, 32
        %v2784 = vpop.permute.xlu0 %2783
        %2785 = vrot.lane.b32.xlu0 %v2764, 32
        %v2786 = vpop.permute.xlu0 %2785
        %2787 = vrot.lane.b32.xlu0 %v2765, 32
        %v2788 = vpop.permute.xlu0 %2787
        %2789 = vrot.lane.b32.xlu0 %v2766, 32
        %v2790 = vpop.permute.xlu0 %2789
        %2791 = vrot.lane.b32.xlu0 %v2767, 32
        %v2792 = vpop.permute.xlu0 %2791
        %2793 = vrot.lane.b32.xlu0 %v2768, 32
        %v2794 = vpop.permute.xlu0 %2793
        %2795 = vrot.lane.b32.xlu0 %v2769, 32
        %v2796 = vpop.permute.xlu0 %2795
        %2797 = vrot.lane.b32.xlu0 %v2770, 32
        %v2798 = vpop.permute.xlu0 %2797
        %2799 = vrot.lane.b32.xlu0 %v2771, 32
        %v2800 = vpop.permute.xlu0 %2799
        %2801 = vrot.lane.b32.xlu0 %v2772, 32
        %v2802 = vpop.permute.xlu0 %2801
        %2803 = vrot.lane.b32.xlu0 %v2773, 32
        %v2804 = vpop.permute.xlu0 %2803
        %2805 = vrot.lane.b32.xlu0 %v2774, 32
        %v2806 = vpop.permute.xlu0 %2805
        %vm2807 = vcmask 31744
        %v2810 = vsel %vm2807, %v2119, %v2184
        %v2813 = vsel %vm2807, %v2120, %v2186
        %v2816 = vsel %vm2807, %v2121, %v2188
        %v2819 = vsel %vm2807, %v2122, %v2190
        %v2822 = vsel %vm2807, %v2123, %v2192
        %v2825 = vsel %vm2807, %v2124, %v2194
        %v2828 = vsel %vm2807, %v2125, %v2196
        %v2831 = vsel %vm2807, %v2126, %v2198
        %v2834 = vsel %vm2807, %v2127, %v2200
        %v2837 = vsel %vm2807, %v2128, %v2202
        %v2840 = vsel %vm2807, %v2129, %v2204
        %v2843 = vsel %vm2807, %v2130, %v2206
        %v2846 = vsel %vm2807, %v2131, %v2208
        %v2849 = vsel %vm2807, %v2132, %v2210
        %v2852 = vsel %vm2807, %v2133, %v2212
        %v2855 = vsel %vm2807, %v2134, %v2214
        %vm2856 = vcmask 64512
        %v2858 = vsel %vm2856, %v2810, %v2264
        %v2860 = vsel %vm2856, %v2813, %v2266
        %v2862 = vsel %vm2856, %v2816, %v2268
        %v2864 = vsel %vm2856, %v2819, %v2270
        %v2866 = vsel %vm2856, %v2822, %v2272
        %v2868 = vsel %vm2856, %v2825, %v2274
        %v2870 = vsel %vm2856, %v2828, %v2276
        %v2872 = vsel %vm2856, %v2831, %v2278
        %v2874 = vsel %vm2856, %v2834, %v2280
        %v2876 = vsel %vm2856, %v2837, %v2282
        %v2878 = vsel %vm2856, %v2840, %v2284
        %v2880 = vsel %vm2856, %v2843, %v2286
        %v2882 = vsel %vm2856, %v2846, %v2288
        %v2884 = vsel %vm2856, %v2849, %v2290
        %v2886 = vsel %vm2856, %v2852, %v2292
        %v2888 = vsel %vm2856, %v2855, %v2294
        %vm2889 = vcmask 97280
        %v2891 = vsel %vm2889, %v2858, %v2360
        %v2893 = vsel %vm2889, %v2860, %v2362
        %v2895 = vsel %vm2889, %v2862, %v2364
        %v2897 = vsel %vm2889, %v2864, %v2366
        %v2899 = vsel %vm2889, %v2866, %v2368
        %v2901 = vsel %vm2889, %v2868, %v2370
        %v2903 = vsel %vm2889, %v2870, %v2372
        %v2905 = vsel %vm2889, %v2872, %v2374
        %v2907 = vsel %vm2889, %v2874, %v2376
        %v2909 = vsel %vm2889, %v2876, %v2378
        %v2911 = vsel %vm2889, %v2878, %v2380
        %v2913 = vsel %vm2889, %v2880, %v2382
        %v2915 = vsel %vm2889, %v2882, %v2384
        %v2917 = vsel %vm2889, %v2884, %v2386
        %v2919 = vsel %vm2889, %v2886, %v2388
        %v2921 = vsel %vm2889, %v2888, %v2390
        %vm2922 = vcmask 130048
        %v2924 = vsel %vm2922, %v2891, %v2440
        %v2926 = vsel %vm2922, %v2893, %v2442
        %v2928 = vsel %vm2922, %v2895, %v2444
        %v2930 = vsel %vm2922, %v2897, %v2446
        %v2932 = vsel %vm2922, %v2899, %v2448
        %v2934 = vsel %vm2922, %v2901, %v2450
        %v2936 = vsel %vm2922, %v2903, %v2452
        %v2938 = vsel %vm2922, %v2905, %v2454
        %v2940 = vsel %vm2922, %v2907, %v2456
        %v2942 = vsel %vm2922, %v2909, %v2458
        %v2944 = vsel %vm2922, %v2911, %v2460
        %v2946 = vsel %vm2922, %v2913, %v2462
        %v2948 = vsel %vm2922, %v2915, %v2464
        %v2950 = vsel %vm2922, %v2917, %v2466
        %v2952 = vsel %vm2922, %v2919, %v2468
        %v2954 = vsel %vm2922, %v2921, %v2470
        %vm2955 = vcmask 162816
        %v2957 = vsel %vm2955, %v2924, %v2520
        %v2959 = vsel %vm2955, %v2926, %v2522
        %v2961 = vsel %vm2955, %v2928, %v2524
        %v2963 = vsel %vm2955, %v2930, %v2526
        %v2965 = vsel %vm2955, %v2932, %v2528
        %v2967 = vsel %vm2955, %v2934, %v2530
        %v2969 = vsel %vm2955, %v2936, %v2532
        %v2971 = vsel %vm2955, %v2938, %v2534
        %v2973 = vsel %vm2955, %v2940, %v2536
        %v2975 = vsel %vm2955, %v2942, %v2538
        %v2977 = vsel %vm2955, %v2944, %v2540
        %v2979 = vsel %vm2955, %v2946, %v2542
        %v2981 = vsel %vm2955, %v2948, %v2544
        %v2983 = vsel %vm2955, %v2950, %v2546
        %v2985 = vsel %vm2955, %v2952, %v2548
        %v2987 = vsel %vm2955, %v2954, %v2550
        %vm2988 = vcmask 195584
        %v2990 = vsel %vm2988, %v2957, %v2616
        %v2992 = vsel %vm2988, %v2959, %v2618
        %v2994 = vsel %vm2988, %v2961, %v2620
        %v2996 = vsel %vm2988, %v2963, %v2622
        %v2998 = vsel %vm2988, %v2965, %v2624
        %v3000 = vsel %vm2988, %v2967, %v2626
        %v3002 = vsel %vm2988, %v2969, %v2628
        %v3004 = vsel %vm2988, %v2971, %v2630
        %v3006 = vsel %vm2988, %v2973, %v2632
        %v3008 = vsel %vm2988, %v2975, %v2634
        %v3010 = vsel %vm2988, %v2977, %v2636
        %v3012 = vsel %vm2988, %v2979, %v2638
        %v3014 = vsel %vm2988, %v2981, %v2640
        %v3016 = vsel %vm2988, %v2983, %v2642
        %v3018 = vsel %vm2988, %v2985, %v2644
        %v3020 = vsel %vm2988, %v2987, %v2646
        %vm3021 = vcmask 228352
        %v3023 = vsel %vm3021, %v2990, %v2696
        %v3025 = vsel %vm3021, %v2992, %v2698
        %v3027 = vsel %vm3021, %v2994, %v2700
        %v3029 = vsel %vm3021, %v2996, %v2702
        %v3031 = vsel %vm3021, %v2998, %v2704
        %v3033 = vsel %vm3021, %v3000, %v2706
        %v3035 = vsel %vm3021, %v3002, %v2708
        %v3037 = vsel %vm3021, %v3004, %v2710
        %v3039 = vsel %vm3021, %v3006, %v2712
        %v3041 = vsel %vm3021, %v3008, %v2714
        %v3043 = vsel %vm3021, %v3010, %v2716
        %v3045 = vsel %vm3021, %v3012, %v2718
        %v3047 = vsel %vm3021, %v3014, %v2720
        %v3049 = vsel %vm3021, %v3016, %v2722
        %v3051 = vsel %vm3021, %v3018, %v2724
        %v3053 = vsel %vm3021, %v3020, %v2726
        %vm3054 = vcmask 261120
        %v3056 = vsel %vm3054, %v3023, %v2776
        %v3058 = vsel %vm3054, %v3025, %v2778
        %v3060 = vsel %vm3054, %v3027, %v2780
        %v3062 = vsel %vm3054, %v3029, %v2782
        %v3064 = vsel %vm3054, %v3031, %v2784
        %v3066 = vsel %vm3054, %v3033, %v2786
        %v3068 = vsel %vm3054, %v3035, %v2788
        %v3070 = vsel %vm3054, %v3037, %v2790
        %v3072 = vsel %vm3054, %v3039, %v2792
        %v3074 = vsel %vm3054, %v3041, %v2794
        %v3076 = vsel %vm3054, %v3043, %v2796
        %v3078 = vsel %vm3054, %v3045, %v2798
        %v3080 = vsel %vm3054, %v3047, %v2800
        %v3082 = vsel %vm3054, %v3049, %v2802
        %v3084 = vsel %vm3054, %v3051, %v2804
        %v3086 = vsel %vm3054, %v3053, %v2806
        %v3103 = vunpack.c.l.b16 %v222
        %v3104 = vunpack.c.l.b16 %v223
        %v3105 = vunpack.c.l.b16 %v224
        %v3106 = vunpack.c.l.b16 %v225
        %v3107 = vunpack.c.l.b16 %v226
        %v3108 = vunpack.c.l.b16 %v227
        %v3109 = vunpack.c.l.b16 %v228
        %v3110 = vunpack.c.l.b16 %v229
        %v3111 = vunpack.c.l.b16 %v230
        %v3112 = vunpack.c.l.b16 %v231
        %v3113 = vunpack.c.l.b16 %v232
        %v3114 = vunpack.c.l.b16 %v233
        %v3115 = vunpack.c.l.b16 %v234
        %v3116 = vunpack.c.l.b16 %v235
        %v3117 = vunpack.c.l.b16 %v236
        %v3118 = vunpack.c.l.b16 %v237
        %v3119 = vpack.c.b16 %v3104, %v3103
        %v3120 = vpack.c.b16 %v3106, %v3105
        %v3121 = vpack.c.b16 %v3108, %v3107
        %v3122 = vpack.c.b16 %v3110, %v3109
        %v3123 = vpack.c.b16 %v3112, %v3111
        %v3124 = vpack.c.b16 %v3114, %v3113
        %v3125 = vpack.c.b16 %v3116, %v3115
        %v3126 = vpack.c.b16 %v3118, %v3117
        %vm3127 = vcmask 293888
        %v3129 = vsel %vm3127, %v3119, 0
        %v3132 = vsel %vm3127, %v3120, 0
        %v3135 = vsel %vm3127, %v3121, 0
        %v3138 = vsel %vm3127, %v3122, 0
        %v3141 = vsel %vm3127, %v3123, 0
        %v3144 = vsel %vm3127, %v3124, 0
        %v3147 = vsel %vm3127, %v3125, 0
        %v3150 = vsel %vm3127, %v3126, 0
        %v3152 = vsel %vm3127, %v3056, 0
        %v3154 = vsel %vm3127, %v3058, 0
        %v3156 = vsel %vm3127, %v3060, 0
        %v3158 = vsel %vm3127, %v3062, 0
        %v3160 = vsel %vm3127, %v3064, 0
        %v3162 = vsel %vm3127, %v3066, 0
        %v3164 = vsel %vm3127, %v3068, 0
        %v3166 = vsel %vm3127, %v3070, 0
        %v3168 = vsel %vm3127, %v3072, 0
        %v3170 = vsel %vm3127, %v3074, 0
        %v3172 = vsel %vm3127, %v3076, 0
        %v3174 = vsel %vm3127, %v3078, 0
        %v3176 = vsel %vm3127, %v3080, 0
        %v3178 = vsel %vm3127, %v3082, 0
        %v3180 = vsel %vm3127, %v3084, 0
        %v3182 = vsel %vm3127, %v3086, 0
        %3184 = vmatprep.subr.bf16.mxu0 0
        %3185 = vmatpush1.bf16.xpose.msra.mxu0 %v3152
        %3186 = vmatprep.subr.bf16.mxu0 0
        %3187 = vmatpush1.bf16.xpose.msra.mxu0 %v3154
        %3188 = vmatprep.subr.bf16.mxu0 0
        %3189 = vmatpush1.bf16.xpose.msra.mxu0 %v3156
        %3190 = vmatprep.subr.bf16.mxu0 0
        %3191 = vmatpush1.bf16.xpose.msra.mxu0 %v3158
        %3192 = vmatprep.subr.bf16.mxu0 0
        %3193 = vmatpush1.bf16.xpose.msra.mxu0 %v3160
        %3194 = vmatprep.subr.bf16.mxu0 0
        %3195 = vmatpush1.bf16.xpose.msra.mxu0 %v3162
        %3196 = vmatprep.subr.bf16.mxu0 0
        %3197 = vmatpush1.bf16.xpose.msra.mxu0 %v3164
        %3198 = vmatprep.subr.bf16.mxu0 0
        %3199 = vmatpush1.bf16.xpose.msra.mxu0 %v3166
        %3200 = vmatprep.subr.bf16.mxu0 0
        %3201 = vmatpush1.bf16.xpose.msra.mxu0 %v3168
        %3202 = vmatprep.subr.bf16.mxu0 0
        %3203 = vmatpush1.bf16.xpose.msra.mxu0 %v3170
        %3204 = vmatprep.subr.bf16.mxu0 0
        %3205 = vmatpush1.bf16.xpose.msra.mxu0 %v3172
        %3206 = vmatprep.subr.bf16.mxu0 0
        %3207 = vmatpush1.bf16.xpose.msra.mxu0 %v3174
        %3208 = vmatprep.subr.bf16.mxu0 0
        %3209 = vmatpush1.bf16.xpose.msra.mxu0 %v3176
        %3210 = vmatprep.subr.bf16.mxu0 0
        %3211 = vmatpush1.bf16.xpose.msra.mxu0 %v3178
        %3212 = vmatprep.subr.bf16.mxu0 0
        %3213 = vmatpush1.bf16.xpose.msra.mxu0 %v3180
        %3214 = vmatprep.subr.bf16.mxu0 0
        %3215 = vmatpush1.bf16.xpose.msra.mxu0 %v3182
        %3216 = vmatprep.mubr.bf16.mxu0 0
        %3217 = vmatmul.mubr.bf16.gmra.mrb[0].mxu0 %v3129
        %v3218 = vpop.f32.mrb[0].mxu0
        %v3219 = vadd.f32 0.0, %v3218
        %v3220 = vpop.f32.mrb[0].mxu0
        %v3221 = vadd.f32 0.0, %v3220
        %v3222 = vpop.f32.mrb[0].mxu0
        %v3223 = vpop.f32.mrb[0].mxu0
        %3224 = vmatprep.mubr.bf16.mxu0 0
        %3225 = vmatmul.mubr.bf16.gmra.mrb[0].mxu0 %v3132
        %v3226 = vpop.f32.mrb[0].mxu0
        %v3227 = vpop.f32.mrb[0].mxu0
        %v3228 = vpop.f32.mrb[0].mxu0
        %v3229 = vpop.f32.mrb[0].mxu0
        %3230 = vmatprep.mubr.bf16.mxu0 0
        %3231 = vmatmul.mubr.bf16.gmra.mrb[0].mxu0 %v3135
        %v3232 = vpop.f32.mrb[0].mxu0
        %v3233 = vpop.f32.mrb[0].mxu0
        %v3234 = vpop.f32.mrb[0].mxu0
        %v3235 = vpop.f32.mrb[0].mxu0
        %3236 = vmatprep.mubr.bf16.mxu0 0
        %3237 = vmatmul.mubr.bf16.gmra.mrb[0].mxu0 %v3138
        %v3238 = vpop.f32.mrb[0].mxu0
        %v3239 = vpop.f32.mrb[0].mxu0
        %v3240 = vpop.f32.mrb[0].mxu0
        %v3241 = vpop.f32.mrb[0].mxu0
        %3242 = vmatprep.mubr.bf16.mxu0 0
        %3243 = vmatmul.mubr.bf16.gmra.mrb[0].mxu0 %v3141
        %v3244 = vpop.f32.mrb[0].mxu0
        %v3245 = vpop.f32.mrb[0].mxu0
        %v3246 = vpop.f32.mrb[0].mxu0
        %v3247 = vpop.f32.mrb[0].mxu0
        %3248 = vmatprep.mubr.bf16.mxu0 0
        %3249 = vmatmul.mubr.bf16.gmra.mrb[0].mxu0 %v3144
        %v3250 = vpop.f32.mrb[0].mxu0
        %v3251 = vpop.f32.mrb[0].mxu0
        %v3252 = vpop.f32.mrb[0].mxu0
        %v3253 = vpop.f32.mrb[0].mxu0
        %3254 = vmatprep.mubr.bf16.mxu0 0
        %3255 = vmatmul.mubr.bf16.gmra.mrb[0].mxu0 %v3147
        %v3256 = vpop.f32.mrb[0].mxu0
        %v3257 = vpop.f32.mrb[0].mxu0
        %v3258 = vpop.f32.mrb[0].mxu0
        %v3259 = vpop.f32.mrb[0].mxu0
        %3260 = vmatprep.mubr.bf16.mxu0 0
        %3261 = vmatmul.mubr.bf16.gmra.mrb[0].mxu0 %v3150
        %v3262 = vpop.f32.mrb[0].mxu0
        %v3263 = vpop.f32.mrb[0].mxu0
        %v3264 = vpop.f32.mrb[0].mxu0
        %v3265 = vpop.f32.mrb[0].mxu0
        %3266 = vdwg.mxu0
        %3268 = vset.pattern.permute.xlu0 0
        %3269 = vperm.xlu0 %3268, %v238
        %v3270 = vpop.permute.xlu0 %3269
        %v3272 = vadd.f32 %v3219, %v3270
        %v3273 = vadd.f32 %v3221, %v3270
        %3274 = vst [vmem:[%s218] sm:$0xff] %v3272
        %3275 = vst [vmem:[%s218 + $0x8] sm:$0xff] %v3273
        %s3276 = scalar_lea.vmem %s188, 216 [#allocation2]
        %v3277 = vld [vmem:[%s3276] sm:$0xf]
        %v3278 = vld [vmem:[%s3276 + $0x4] sm:$0xf]
        %v3279 = vld [vmem:[%s3276 + $0xc] sm:$0xf]
        %v3280 = vld [vmem:[%s3276 + $0x10] sm:$0xf]
        %v3281 = vld [vmem:[%s3276 + $0x18] sm:$0xf]
        %v3282 = vld [vmem:[%s3276 + $0x1c] sm:$0xf]
        %v3283 = vld [vmem:[%s3276 + $0x24] sm:$0xf]
        %v3284 = vld [vmem:[%s3276 + $0x28] sm:$0xf]
        %v3285 = vld [vmem:[%s3276 + $0x30] sm:$0xf]
        %v3286 = vld [vmem:[%s3276 + $0x34] sm:$0xf]
        %v3287 = vld [vmem:[%s3276 + $0x3c] sm:$0xf]
        %v3288 = vld [vmem:[%s3276 + $0x40] sm:$0xf]
        %v3289 = vld [vmem:[%s3276 + $0x48] sm:$0xf]
        %v3290 = vld [vmem:[%s3276 + $0x4c] sm:$0xf]
        %v3291 = vld [vmem:[%s3276 + $0x54] sm:$0xf]
        %v3292 = vld [vmem:[%s3276 + $0x58] sm:$0xf]
        %v3293 = vld [vmem:[%s3276 + $0x60] sm:$0xf]
        %v3294 = vld [vmem:[%s3276 + $0x64] sm:$0xf]
        %v3295 = vld [vmem:[%s3276 + $0x6c] sm:$0xf]
        %v3296 = vld [vmem:[%s3276 + $0x70] sm:$0xf]
        %v3297 = vld [vmem:[%s3276 + $0x78] sm:$0xf]
        %v3298 = vld [vmem:[%s3276 + $0x7c] sm:$0xf]
        %v3299 = vld [vmem:[%s3276 + $0x84] sm:$0xf]
        %v3300 = vld [vmem:[%s3276 + $0x88] sm:$0xf]
        %v3301 = vld [vmem:[%s3276 + $0x90] sm:$0xf]
        %v3302 = vld [vmem:[%s3276 + $0x94] sm:$0xf]
        %v3303 = vld [vmem:[%s3276 + $0x9c] sm:$0xf]
        %v3304 = vld [vmem:[%s3276 + $0xa0] sm:$0xf]
        %v3305 = vld [vmem:[%s3276 + $0xa8] sm:$0xf]
        %v3306 = vld [vmem:[%s3276 + $0xac] sm:$0xf]
        %v3307 = vld [vmem:[%s3276 + $0xb4] sm:$0xf]
        %v3308 = vld [vmem:[%s3276 + $0xb8] sm:$0xf]
        %v3309 = vld [vmem:[%s3276 + $0x8] sm:$0x1]
        %v3310 = vld [vmem:[%s3276 + $0x14] sm:$0x1]
        %v3311 = vld [vmem:[%s3276 + $0x20] sm:$0x1]
        %v3312 = vld [vmem:[%s3276 + $0x2c] sm:$0x1]
        %v3313 = vld [vmem:[%s3276 + $0x38] sm:$0x1]
        %v3314 = vld [vmem:[%s3276 + $0x44] sm:$0x1]
        %v3315 = vld [vmem:[%s3276 + $0x50] sm:$0x1]
        %v3316 = vld [vmem:[%s3276 + $0x5c] sm:$0x1]
        %v3317 = vld [vmem:[%s3276 + $0x68] sm:$0x1]
        %v3318 = vld [vmem:[%s3276 + $0x74] sm:$0x1]
        %v3319 = vld [vmem:[%s3276 + $0x80] sm:$0x1]
        %v3320 = vld [vmem:[%s3276 + $0x8c] sm:$0x1]
        %v3321 = vld [vmem:[%s3276 + $0x98] sm:$0x1]
        %v3322 = vld [vmem:[%s3276 + $0xa4] sm:$0x1]
        %v3323 = vld [vmem:[%s3276 + $0xb0] sm:$0x1]
        %v3324 = vld [vmem:[%s3276 + $0xbc] sm:$0x1]
        %v3326 = vshrl.u32 %v3277, 16
        %v3328 = vrot.slane %v3326, 4
        %v3329 = vshll.u32 %v3277, 16
        %v3331 = vrot.slane %v3329, 5
        %v3332 = vor.u32 %v3328, %v3331
        %v3333 = vrot.slane %v3332, 4
        %v3335 = vshll.u32 %v3278, 16
        %v3337 = vrot.slane %v3335, 5
        %v3338 = vsel %vm289, %v3333, %v3337
        %v3339 = vshrl.u32 %v3278, 16
        %v3341 = vrot.slane %v3339, 4
        %v3342 = vor.u32 %v3341, %v3337
        %v3343 = vrot.slane %v3342, 4
        %v3345 = vshll.u32 %v3309, 16
        %v3347 = vrot.slane %v3345, 5
        %v3348 = vsel %vm289, %v3343, %v3347
        %v3350 = vshrl.u32 %v3279, 16
        %v3352 = vrot.slane %v3350, 4
        %v3353 = vshll.u32 %v3279, 16
        %v3355 = vrot.slane %v3353, 5
        %v3356 = vor.u32 %v3352, %v3355
        %v3357 = vrot.slane %v3356, 4
        %v3359 = vshll.u32 %v3280, 16
        %v3361 = vrot.slane %v3359, 5
        %v3362 = vsel %vm289, %v3357, %v3361
        %v3363 = vshrl.u32 %v3280, 16
        %v3365 = vrot.slane %v3363, 4
        %v3366 = vor.u32 %v3365, %v3361
        %v3367 = vrot.slane %v3366, 4
        %v3369 = vshll.u32 %v3310, 16
        %v3371 = vrot.slane %v3369, 5
        %v3372 = vsel %vm289, %v3367, %v3371
        %v3374 = vshrl.u32 %v3281, 16
        %v3376 = vrot.slane %v3374, 4
        %v3377 = vshll.u32 %v3281, 16
        %v3379 = vrot.slane %v3377, 5
        %v3380 = vor.u32 %v3376, %v3379
        %v3381 = vrot.slane %v3380, 4
        %v3383 = vshll.u32 %v3282, 16
        %v3385 = vrot.slane %v3383, 5
        %v3386 = vsel %vm289, %v3381, %v3385
        %v3387 = vshrl.u32 %v3282, 16
        %v3389 = vrot.slane %v3387, 4
        %v3390 = vor.u32 %v3389, %v3385
        %v3391 = vrot.slane %v3390, 4
        %v3393 = vshll.u32 %v3311, 16
        %v3395 = vrot.slane %v3393, 5
        %v3396 = vsel %vm289, %v3391, %v3395
        %v3398 = vshrl.u32 %v3283, 16
        %v3400 = vrot.slane %v3398, 4
        %v3401 = vshll.u32 %v3283, 16
        %v3403 = vrot.slane %v3401, 5
        %v3404 = vor.u32 %v3400, %v3403
        %v3405 = vrot.slane %v3404, 4
        %v3407 = vshll.u32 %v3284, 16
        %v3409 = vrot.slane %v3407, 5
        %v3410 = vsel %vm289, %v3405, %v3409
        %v3411 = vshrl.u32 %v3284, 16
        %v3413 = vrot.slane %v3411, 4
        %v3414 = vor.u32 %v3413, %v3409
        %v3415 = vrot.slane %v3414, 4
        %v3417 = vshll.u32 %v3312, 16
        %v3419 = vrot.slane %v3417, 5
        %v3420 = vsel %vm289, %v3415, %v3419
        %v3422 = vshrl.u32 %v3285, 16
        %v3424 = vrot.slane %v3422, 4
        %v3425 = vshll.u32 %v3285, 16
        %v3427 = vrot.slane %v3425, 5
        %v3428 = vor.u32 %v3424, %v3427
        %v3429 = vrot.slane %v3428, 4
        %v3431 = vshll.u32 %v3286, 16
        %v3433 = vrot.slane %v3431, 5
        %v3434 = vsel %vm289, %v3429, %v3433
        %v3435 = vshrl.u32 %v3286, 16
        %v3437 = vrot.slane %v3435, 4
        %v3438 = vor.u32 %v3437, %v3433
        %v3439 = vrot.slane %v3438, 4
        %v3441 = vshll.u32 %v3313, 16
        %v3443 = vrot.slane %v3441, 5
        %v3444 = vsel %vm289, %v3439, %v3443
        %v3446 = vshrl.u32 %v3287, 16
        %v3448 = vrot.slane %v3446, 4
        %v3449 = vshll.u32 %v3287, 16
        %v3451 = vrot.slane %v3449, 5
        %v3452 = vor.u32 %v3448, %v3451
        %v3453 = vrot.slane %v3452, 4
        %v3455 = vshll.u32 %v3288, 16
        %v3457 = vrot.slane %v3455, 5
        %v3458 = vsel %vm289, %v3453, %v3457
        %v3459 = vshrl.u32 %v3288, 16
        %v3461 = vrot.slane %v3459, 4
        %v3462 = vor.u32 %v3461, %v3457
        %v3463 = vrot.slane %v3462, 4
        %v3465 = vshll.u32 %v3314, 16
        %v3467 = vrot.slane %v3465, 5
        %v3468 = vsel %vm289, %v3463, %v3467
        %v3470 = vshrl.u32 %v3289, 16
        %v3472 = vrot.slane %v3470, 4
        %v3473 = vshll.u32 %v3289, 16
        %v3475 = vrot.slane %v3473, 5
        %v3476 = vor.u32 %v3472, %v3475
        %v3477 = vrot.slane %v3476, 4
        %v3479 = vshll.u32 %v3290, 16
        %v3481 = vrot.slane %v3479, 5
        %v3482 = vsel %vm289, %v3477, %v3481
        %v3483 = vshrl.u32 %v3290, 16
        %v3485 = vrot.slane %v3483, 4
        %v3486 = vor.u32 %v3485, %v3481
        %v3487 = vrot.slane %v3486, 4
        %v3489 = vshll.u32 %v3315, 16
        %v3491 = vrot.slane %v3489, 5
        %v3492 = vsel %vm289, %v3487, %v3491
        %v3494 = vshrl.u32 %v3291, 16
        %v3496 = vrot.slane %v3494, 4
        %v3497 = vshll.u32 %v3291, 16
        %v3499 = vrot.slane %v3497, 5
        %v3500 = vor.u32 %v3496, %v3499
        %v3501 = vrot.slane %v3500, 4
        %v3503 = vshll.u32 %v3292, 16
        %v3505 = vrot.slane %v3503, 5
        %v3506 = vsel %vm289, %v3501, %v3505
        %v3507 = vshrl.u32 %v3292, 16
        %v3509 = vrot.slane %v3507, 4
        %v3510 = vor.u32 %v3509, %v3505
        %v3511 = vrot.slane %v3510, 4
        %v3513 = vshll.u32 %v3316, 16
        %v3515 = vrot.slane %v3513, 5
        %v3516 = vsel %vm289, %v3511, %v3515
        %v3518 = vshrl.u32 %v3293, 16
        %v3520 = vrot.slane %v3518, 4
        %v3521 = vshll.u32 %v3293, 16
        %v3523 = vrot.slane %v3521, 5
        %v3524 = vor.u32 %v3520, %v3523
        %v3525 = vrot.slane %v3524, 4
        %v3527 = vshll.u32 %v3294, 16
        %v3529 = vrot.slane %v3527, 5
        %v3530 = vsel %vm289, %v3525, %v3529
        %v3531 = vshrl.u32 %v3294, 16
        %v3533 = vrot.slane %v3531, 4
        %v3534 = vor.u32 %v3533, %v3529
        %v3535 = vrot.slane %v3534, 4
        %v3537 = vshll.u32 %v3317, 16
        %v3539 = vrot.slane %v3537, 5
        %v3540 = vsel %vm289, %v3535, %v3539
        %v3542 = vshrl.u32 %v3295, 16
        %v3544 = vrot.slane %v3542, 4
        %v3545 = vshll.u32 %v3295, 16
        %v3547 = vrot.slane %v3545, 5
        %v3548 = vor.u32 %v3544, %v3547
        %v3549 = vrot.slane %v3548, 4
        %v3551 = vshll.u32 %v3296, 16
        %v3553 = vrot.slane %v3551, 5
        %v3554 = vsel %vm289, %v3549, %v3553
        %v3555 = vshrl.u32 %v3296, 16
        %v3557 = vrot.slane %v3555, 4
        %v3558 = vor.u32 %v3557, %v3553
        %v3559 = vrot.slane %v3558, 4
        %v3561 = vshll.u32 %v3318, 16
        %v3563 = vrot.slane %v3561, 5
        %v3564 = vsel %vm289, %v3559, %v3563
        %v3566 = vshrl.u32 %v3297, 16
        %v3568 = vrot.slane %v3566, 4
        %v3569 = vshll.u32 %v3297, 16
        %v3571 = vrot.slane %v3569, 5
        %v3572 = vor.u32 %v3568, %v3571
        %v3573 = vrot.slane %v3572, 4
        %v3575 = vshll.u32 %v3298, 16
        %v3577 = vrot.slane %v3575, 5
        %v3578 = vsel %vm289, %v3573, %v3577
        %v3579 = vshrl.u32 %v3298, 16
        %v3581 = vrot.slane %v3579, 4
        %v3582 = vor.u32 %v3581, %v3577
        %v3583 = vrot.slane %v3582, 4
        %v3585 = vshll.u32 %v3319, 16
        %v3587 = vrot.slane %v3585, 5
        %v3588 = vsel %vm289, %v3583, %v3587
        %v3590 = vshrl.u32 %v3299, 16
        %v3592 = vrot.slane %v3590, 4
        %v3593 = vshll.u32 %v3299, 16
        %v3595 = vrot.slane %v3593, 5
        %v3596 = vor.u32 %v3592, %v3595
        %v3597 = vrot.slane %v3596, 4
        %v3599 = vshll.u32 %v3300, 16
        %v3601 = vrot.slane %v3599, 5
        %v3602 = vsel %vm289, %v3597, %v3601
        %v3603 = vshrl.u32 %v3300, 16
        %v3605 = vrot.slane %v3603, 4
        %v3606 = vor.u32 %v3605, %v3601
        %v3607 = vrot.slane %v3606, 4
        %v3609 = vshll.u32 %v3320, 16
        %v3611 = vrot.slane %v3609, 5
        %v3612 = vsel %vm289, %v3607, %v3611
        %v3614 = vshrl.u32 %v3301, 16
        %v3616 = vrot.slane %v3614, 4
        %v3617 = vshll.u32 %v3301, 16
        %v3619 = vrot.slane %v3617, 5
        %v3620 = vor.u32 %v3616, %v3619
        %v3621 = vrot.slane %v3620, 4
        %v3623 = vshll.u32 %v3302, 16
        %v3625 = vrot.slane %v3623, 5
        %v3626 = vsel %vm289, %v3621, %v3625
        %v3627 = vshrl.u32 %v3302, 16
        %v3629 = vrot.slane %v3627, 4
        %v3630 = vor.u32 %v3629, %v3625
        %v3631 = vrot.slane %v3630, 4
        %v3633 = vshll.u32 %v3321, 16
        %v3635 = vrot.slane %v3633, 5
        %v3636 = vsel %vm289, %v3631, %v3635
        %v3638 = vshrl.u32 %v3303, 16
        %v3640 = vrot.slane %v3638, 4
        %v3641 = vshll.u32 %v3303, 16
        %v3643 = vrot.slane %v3641, 5
        %v3644 = vor.u32 %v3640, %v3643
        %v3645 = vrot.slane %v3644, 4
        %v3647 = vshll.u32 %v3304, 16
        %v3649 = vrot.slane %v3647, 5
        %v3650 = vsel %vm289, %v3645, %v3649
        %v3651 = vshrl.u32 %v3304, 16
        %v3653 = vrot.slane %v3651, 4
        %v3654 = vor.u32 %v3653, %v3649
        %v3655 = vrot.slane %v3654, 4
        %v3657 = vshll.u32 %v3322, 16
        %v3659 = vrot.slane %v3657, 5
        %v3660 = vsel %vm289, %v3655, %v3659
        %v3662 = vshrl.u32 %v3305, 16
        %v3664 = vrot.slane %v3662, 4
        %v3665 = vshll.u32 %v3305, 16
        %v3667 = vrot.slane %v3665, 5
        %v3668 = vor.u32 %v3664, %v3667
        %v3669 = vrot.slane %v3668, 4
        %v3671 = vshll.u32 %v3306, 16
        %v3673 = vrot.slane %v3671, 5
        %v3674 = vsel %vm289, %v3669, %v3673
        %v3675 = vshrl.u32 %v3306, 16
        %v3677 = vrot.slane %v3675, 4
        %v3678 = vor.u32 %v3677, %v3673
        %v3679 = vrot.slane %v3678, 4
        %v3681 = vshll.u32 %v3323, 16
        %v3683 = vrot.slane %v3681, 5
        %v3684 = vsel %vm289, %v3679, %v3683
        %v3686 = vshrl.u32 %v3307, 16
        %v3688 = vrot.slane %v3686, 4
        %v3689 = vshll.u32 %v3307, 16
        %v3691 = vrot.slane %v3689, 5
        %v3692 = vor.u32 %v3688, %v3691
        %v3693 = vrot.slane %v3692, 4
        %v3695 = vshll.u32 %v3308, 16
        %v3697 = vrot.slane %v3695, 5
        %v3698 = vsel %vm289, %v3693, %v3697
        %v3699 = vshrl.u32 %v3308, 16
        %v3701 = vrot.slane %v3699, 4
        %v3702 = vor.u32 %v3701, %v3697
        %v3703 = vrot.slane %v3702, 4
        %v3705 = vshll.u32 %v3324, 16
        %v3707 = vrot.slane %v3705, 5
        %v3708 = vsel %vm289, %v3703, %v3707
        %v3709 = vld [vmem:[%s3276] sm:$0xe]
        %v3710 = vld [vmem:[%s3276 + $0xc] sm:$0xe]
        %v3711 = vld [vmem:[%s3276 + $0x18] sm:$0xe]
        %v3712 = vld [vmem:[%s3276 + $0x24] sm:$0xe]
        %v3713 = vld [vmem:[%s3276 + $0x30] sm:$0xe]
        %v3714 = vld [vmem:[%s3276 + $0x3c] sm:$0xe]
        %v3715 = vld [vmem:[%s3276 + $0x48] sm:$0xe]
        %v3716 = vld [vmem:[%s3276 + $0x54] sm:$0xe]
        %v3717 = vld [vmem:[%s3276 + $0x60] sm:$0xe]
        %v3718 = vld [vmem:[%s3276 + $0x6c] sm:$0xe]
        %v3719 = vld [vmem:[%s3276 + $0x78] sm:$0xe]
        %v3720 = vld [vmem:[%s3276 + $0x84] sm:$0xe]
        %v3721 = vld [vmem:[%s3276 + $0x90] sm:$0xe]
        %v3722 = vld [vmem:[%s3276 + $0x9c] sm:$0xe]
        %v3723 = vld [vmem:[%s3276 + $0xa8] sm:$0xe]
        %v3724 = vld [vmem:[%s3276 + $0xb4] sm:$0xe]
        %v3773 = vrot.slane %v3709, 5
        %v3774 = vrot.slane %v3773, 4
        %v3775 = vrot.slane %v3278, 5
        %v3776 = vsel %vm740, %v3774, %v3775
        %v3777 = vrot.slane %v3775, 4
        %v3778 = vrot.slane %v3309, 5
        %v3779 = vsel %vm740, %v3777, %v3778
        %v3780 = vrot.slane %v3710, 5
        %v3781 = vrot.slane %v3780, 4
        %v3782 = vrot.slane %v3280, 5
        %v3783 = vsel %vm740, %v3781, %v3782
        %v3784 = vrot.slane %v3782, 4
        %v3785 = vrot.slane %v3310, 5
        %v3786 = vsel %vm740, %v3784, %v3785
        %v3787 = vrot.slane %v3711, 5
        %v3788 = vrot.slane %v3787, 4
        %v3789 = vrot.slane %v3282, 5
        %v3790 = vsel %vm740, %v3788, %v3789
        %v3791 = vrot.slane %v3789, 4
        %v3792 = vrot.slane %v3311, 5
        %v3793 = vsel %vm740, %v3791, %v3792
        %v3794 = vrot.slane %v3712, 5
        %v3795 = vrot.slane %v3794, 4
        %v3796 = vrot.slane %v3284, 5
        %v3797 = vsel %vm740, %v3795, %v3796
        %v3798 = vrot.slane %v3796, 4
        %v3799 = vrot.slane %v3312, 5
        %v3800 = vsel %vm740, %v3798, %v3799
        %v3801 = vrot.slane %v3713, 5
        %v3802 = vrot.slane %v3801, 4
        %v3803 = vrot.slane %v3286, 5
        %v3804 = vsel %vm740, %v3802, %v3803
        %v3805 = vrot.slane %v3803, 4
        %v3806 = vrot.slane %v3313, 5
        %v3807 = vsel %vm740, %v3805, %v3806
        %v3808 = vrot.slane %v3714, 5
        %v3809 = vrot.slane %v3808, 4
        %v3810 = vrot.slane %v3288, 5
        %v3811 = vsel %vm740, %v3809, %v3810
        %v3812 = vrot.slane %v3810, 4
        %v3813 = vrot.slane %v3314, 5
        %v3814 = vsel %vm740, %v3812, %v3813
        %v3815 = vrot.slane %v3715, 5
        %v3816 = vrot.slane %v3815, 4
        %v3817 = vrot.slane %v3290, 5
        %v3818 = vsel %vm740, %v3816, %v3817
        %v3819 = vrot.slane %v3817, 4
        %v3820 = vrot.slane %v3315, 5
        %v3821 = vsel %vm740, %v3819, %v3820
        %v3822 = vrot.slane %v3716, 5
        %v3823 = vrot.slane %v3822, 4
        %v3824 = vrot.slane %v3292, 5
        %v3825 = vsel %vm740, %v3823, %v3824
        %v3826 = vrot.slane %v3824, 4
        %v3827 = vrot.slane %v3316, 5
        %v3828 = vsel %vm740, %v3826, %v3827
        %v3829 = vrot.slane %v3717, 5
        %v3830 = vrot.slane %v3829, 4
        %v3831 = vrot.slane %v3294, 5
        %v3832 = vsel %vm740, %v3830, %v3831
        %v3833 = vrot.slane %v3831, 4
        %v3834 = vrot.slane %v3317, 5
        %v3835 = vsel %vm740, %v3833, %v3834
        %v3836 = vrot.slane %v3718, 5
        %v3837 = vrot.slane %v3836, 4
        %v3838 = vrot.slane %v3296, 5
        %v3839 = vsel %vm740, %v3837, %v3838
        %v3840 = vrot.slane %v3838, 4
        %v3841 = vrot.slane %v3318, 5
        %v3842 = vsel %vm740, %v3840, %v3841
        %v3843 = vrot.slane %v3719, 5
        %v3844 = vrot.slane %v3843, 4
        %v3845 = vrot.slane %v3298, 5
        %v3846 = vsel %vm740, %v3844, %v3845
        %v3847 = vrot.slane %v3845, 4
        %v3848 = vrot.slane %v3319, 5
        %v3849 = vsel %vm740, %v3847, %v3848
        %v3850 = vrot.slane %v3720, 5
        %v3851 = vrot.slane %v3850, 4
        %v3852 = vrot.slane %v3300, 5
        %v3853 = vsel %vm740, %v3851, %v3852
        %v3854 = vrot.slane %v3852, 4
        %v3855 = vrot.slane %v3320, 5
        %v3856 = vsel %vm740, %v3854, %v3855
        %v3857 = vrot.slane %v3721, 5
        %v3858 = vrot.slane %v3857, 4
        %v3859 = vrot.slane %v3302, 5
        %v3860 = vsel %vm740, %v3858, %v3859
        %v3861 = vrot.slane %v3859, 4
        %v3862 = vrot.slane %v3321, 5
        %v3863 = vsel %vm740, %v3861, %v3862
        %v3864 = vrot.slane %v3722, 5
        %v3865 = vrot.slane %v3864, 4
        %v3866 = vrot.slane %v3304, 5
        %v3867 = vsel %vm740, %v3865, %v3866
        %v3868 = vrot.slane %v3866, 4
        %v3869 = vrot.slane %v3322, 5
        %v3870 = vsel %vm740, %v3868, %v3869
        %v3871 = vrot.slane %v3723, 5
        %v3872 = vrot.slane %v3871, 4
        %v3873 = vrot.slane %v3306, 5
        %v3874 = vsel %vm740, %v3872, %v3873
        %v3875 = vrot.slane %v3873, 4
        %v3876 = vrot.slane %v3323, 5
        %v3877 = vsel %vm740, %v3875, %v3876
        %v3878 = vrot.slane %v3724, 5
        %v3879 = vrot.slane %v3878, 4
        %v3880 = vrot.slane %v3308, 5
        %v3881 = vsel %vm740, %v3879, %v3880
        %v3882 = vrot.slane %v3880, 4
        %v3883 = vrot.slane %v3324, 5
        %v3884 = vsel %vm740, %v3882, %v3883
        %s3885 = scalar_lea.vmem %s188, 228 [#allocation2]
        %v3886 = vld [vmem:[%s3885] sm:$0xf]
        %v3887 = vld [vmem:[%s3885 + $0x4] sm:$0xf]
        %v3888 = vld [vmem:[%s3885 + $0xc] sm:$0xf]
        %v3889 = vld [vmem:[%s3885 + $0x10] sm:$0xf]
        %v3890 = vld [vmem:[%s3885 + $0x18] sm:$0xf]
        %v3891 = vld [vmem:[%s3885 + $0x1c] sm:$0xf]
        %v3892 = vld [vmem:[%s3885 + $0x24] sm:$0xf]
        %v3893 = vld [vmem:[%s3885 + $0x28] sm:$0xf]
        %v3894 = vld [vmem:[%s3885 + $0x30] sm:$0xf]
        %v3895 = vld [vmem:[%s3885 + $0x34] sm:$0xf]
        %v3896 = vld [vmem:[%s3885 + $0x3c] sm:$0xf]
        %v3897 = vld [vmem:[%s3885 + $0x40] sm:$0xf]
        %v3898 = vld [vmem:[%s3885 + $0x48] sm:$0xf]
        %v3899 = vld [vmem:[%s3885 + $0x4c] sm:$0xf]
        %v3900 = vld [vmem:[%s3885 + $0x54] sm:$0xf]
        %v3901 = vld [vmem:[%s3885 + $0x58] sm:$0xf]
        %v3902 = vld [vmem:[%s3885 + $0x60] sm:$0xf]
        %v3903 = vld [vmem:[%s3885 + $0x64] sm:$0xf]
        %v3904 = vld [vmem:[%s3885 + $0x6c] sm:$0xf]
        %v3905 = vld [vmem:[%s3885 + $0x70] sm:$0xf]
        %v3906 = vld [vmem:[%s3885 + $0x78] sm:$0xf]
        %v3907 = vld [vmem:[%s3885 + $0x7c] sm:$0xf]
        %v3908 = vld [vmem:[%s3885 + $0x84] sm:$0xf]
        %v3909 = vld [vmem:[%s3885 + $0x88] sm:$0xf]
        %v3910 = vld [vmem:[%s3885 + $0x90] sm:$0xf]
        %v3911 = vld [vmem:[%s3885 + $0x94] sm:$0xf]
        %v3912 = vld [vmem:[%s3885 + $0x9c] sm:$0xf]
        %v3913 = vld [vmem:[%s3885 + $0xa0] sm:$0xf]
        %v3914 = vld [vmem:[%s3885 + $0xa8] sm:$0xf]
        %v3915 = vld [vmem:[%s3885 + $0xac] sm:$0xf]
        %v3916 = vld [vmem:[%s3885 + $0xb4] sm:$0xf]
        %v3917 = vld [vmem:[%s3885 + $0xb8] sm:$0xf]
        %v3918 = vld [vmem:[%s3885 + $0x8] sm:$0x1]
        %v3919 = vld [vmem:[%s3885 + $0x14] sm:$0x1]
        %v3920 = vld [vmem:[%s3885 + $0x20] sm:$0x1]
        %v3921 = vld [vmem:[%s3885 + $0x2c] sm:$0x1]
        %v3922 = vld [vmem:[%s3885 + $0x38] sm:$0x1]
        %v3923 = vld [vmem:[%s3885 + $0x44] sm:$0x1]
        %v3924 = vld [vmem:[%s3885 + $0x50] sm:$0x1]
        %v3925 = vld [vmem:[%s3885 + $0x5c] sm:$0x1]
        %v3926 = vld [vmem:[%s3885 + $0x68] sm:$0x1]
        %v3927 = vld [vmem:[%s3885 + $0x74] sm:$0x1]
        %v3928 = vld [vmem:[%s3885 + $0x80] sm:$0x1]
        %v3929 = vld [vmem:[%s3885 + $0x8c] sm:$0x1]
        %v3930 = vld [vmem:[%s3885 + $0x98] sm:$0x1]
        %v3931 = vld [vmem:[%s3885 + $0xa4] sm:$0x1]
        %v3932 = vld [vmem:[%s3885 + $0xb0] sm:$0x1]
        %v3933 = vld [vmem:[%s3885 + $0xbc] sm:$0x1]
        %v3935 = vshrl.u32 %v3886, 16
        %v3937 = vrot.slane %v3935, 4
        %v3938 = vshll.u32 %v3886, 16
        %v3940 = vrot.slane %v3938, 5
        %v3941 = vor.u32 %v3937, %v3940
        %v3942 = vrot.slane %v3941, 4
        %v3944 = vshll.u32 %v3887, 16
        %v3946 = vrot.slane %v3944, 5
        %v3947 = vsel %vm289, %v3942, %v3946
        %v3948 = vshrl.u32 %v3887, 16
        %v3950 = vrot.slane %v3948, 4
        %v3951 = vor.u32 %v3950, %v3946
        %v3952 = vrot.slane %v3951, 4
        %v3954 = vshll.u32 %v3918, 16
        %v3956 = vrot.slane %v3954, 5
        %v3957 = vsel %vm289, %v3952, %v3956
        %v3959 = vshrl.u32 %v3888, 16
        %v3961 = vrot.slane %v3959, 4
        %v3962 = vshll.u32 %v3888, 16
        %v3964 = vrot.slane %v3962, 5
        %v3965 = vor.u32 %v3961, %v3964
        %v3966 = vrot.slane %v3965, 4
        %v3968 = vshll.u32 %v3889, 16
        %v3970 = vrot.slane %v3968, 5
        %v3971 = vsel %vm289, %v3966, %v3970
        %v3972 = vshrl.u32 %v3889, 16
        %v3974 = vrot.slane %v3972, 4
        %v3975 = vor.u32 %v3974, %v3970
        %v3976 = vrot.slane %v3975, 4
        %v3978 = vshll.u32 %v3919, 16
        %v3980 = vrot.slane %v3978, 5
        %v3981 = vsel %vm289, %v3976, %v3980
        %v3983 = vshrl.u32 %v3890, 16
        %v3985 = vrot.slane %v3983, 4
        %v3986 = vshll.u32 %v3890, 16
        %v3988 = vrot.slane %v3986, 5
        %v3989 = vor.u32 %v3985, %v3988
        %v3990 = vrot.slane %v3989, 4
        %v3992 = vshll.u32 %v3891, 16
        %v3994 = vrot.slane %v3992, 5
        %v3995 = vsel %vm289, %v3990, %v3994
        %v3996 = vshrl.u32 %v3891, 16
        %v3998 = vrot.slane %v3996, 4
        %v3999 = vor.u32 %v3998, %v3994
        %v4000 = vrot.slane %v3999, 4
        %v4002 = vshll.u32 %v3920, 16
        %v4004 = vrot.slane %v4002, 5
        %v4005 = vsel %vm289, %v4000, %v4004
        %v4007 = vshrl.u32 %v3892, 16
        %v4009 = vrot.slane %v4007, 4
        %v4010 = vshll.u32 %v3892, 16
        %v4012 = vrot.slane %v4010, 5
        %v4013 = vor.u32 %v4009, %v4012
        %v4014 = vrot.slane %v4013, 4
        %v4016 = vshll.u32 %v3893, 16
        %v4018 = vrot.slane %v4016, 5
        %v4019 = vsel %vm289, %v4014, %v4018
        %v4020 = vshrl.u32 %v3893, 16
        %v4022 = vrot.slane %v4020, 4
        %v4023 = vor.u32 %v4022, %v4018
        %v4024 = vrot.slane %v4023, 4
        %v4026 = vshll.u32 %v3921, 16
        %v4028 = vrot.slane %v4026, 5
        %v4029 = vsel %vm289, %v4024, %v4028
        %v4031 = vshrl.u32 %v3894, 16
        %v4033 = vrot.slane %v4031, 4
        %v4034 = vshll.u32 %v3894, 16
        %v4036 = vrot.slane %v4034, 5
        %v4037 = vor.u32 %v4033, %v4036
        %v4038 = vrot.slane %v4037, 4
        %v4040 = vshll.u32 %v3895, 16
        %v4042 = vrot.slane %v4040, 5
        %v4043 = vsel %vm289, %v4038, %v4042
        %v4044 = vshrl.u32 %v3895, 16
        %v4046 = vrot.slane %v4044, 4
        %v4047 = vor.u32 %v4046, %v4042
        %v4048 = vrot.slane %v4047, 4
        %v4050 = vshll.u32 %v3922, 16
        %v4052 = vrot.slane %v4050, 5
        %v4053 = vsel %vm289, %v4048, %v4052
        %v4055 = vshrl.u32 %v3896, 16
        %v4057 = vrot.slane %v4055, 4
        %v4058 = vshll.u32 %v3896, 16
        %v4060 = vrot.slane %v4058, 5
        %v4061 = vor.u32 %v4057, %v4060
        %v4062 = vrot.slane %v4061, 4
        %v4064 = vshll.u32 %v3897, 16
        %v4066 = vrot.slane %v4064, 5
        %v4067 = vsel %vm289, %v4062, %v4066
        %v4068 = vshrl.u32 %v3897, 16
        %v4070 = vrot.slane %v4068, 4
        %v4071 = vor.u32 %v4070, %v4066
        %v4072 = vrot.slane %v4071, 4
        %v4074 = vshll.u32 %v3923, 16
        %v4076 = vrot.slane %v4074, 5
        %v4077 = vsel %vm289, %v4072, %v4076
        %v4079 = vshrl.u32 %v3898, 16
        %v4081 = vrot.slane %v4079, 4
        %v4082 = vshll.u32 %v3898, 16
        %v4084 = vrot.slane %v4082, 5
        %v4085 = vor.u32 %v4081, %v4084
        %v4086 = vrot.slane %v4085, 4
        %v4088 = vshll.u32 %v3899, 16
        %v4090 = vrot.slane %v4088, 5
        %v4091 = vsel %vm289, %v4086, %v4090
        %v4092 = vshrl.u32 %v3899, 16
        %v4094 = vrot.slane %v4092, 4
        %v4095 = vor.u32 %v4094, %v4090
        %v4096 = vrot.slane %v4095, 4
        %v4098 = vshll.u32 %v3924, 16
        %v4100 = vrot.slane %v4098, 5
        %v4101 = vsel %vm289, %v4096, %v4100
        %v4103 = vshrl.u32 %v3900, 16
        %v4105 = vrot.slane %v4103, 4
        %v4106 = vshll.u32 %v3900, 16
        %v4108 = vrot.slane %v4106, 5
        %v4109 = vor.u32 %v4105, %v4108
        %v4110 = vrot.slane %v4109, 4
        %v4112 = vshll.u32 %v3901, 16
        %v4114 = vrot.slane %v4112, 5
        %v4115 = vsel %vm289, %v4110, %v4114
        %v4116 = vshrl.u32 %v3901, 16
        %v4118 = vrot.slane %v4116, 4
        %v4119 = vor.u32 %v4118, %v4114
        %v4120 = vrot.slane %v4119, 4
        %v4122 = vshll.u32 %v3925, 16
        %v4124 = vrot.slane %v4122, 5
        %v4125 = vsel %vm289, %v4120, %v4124
        %v4127 = vshrl.u32 %v3902, 16
        %v4129 = vrot.slane %v4127, 4
        %v4130 = vshll.u32 %v3902, 16
        %v4132 = vrot.slane %v4130, 5
        %v4133 = vor.u32 %v4129, %v4132
        %v4134 = vrot.slane %v4133, 4
        %v4136 = vshll.u32 %v3903, 16
        %v4138 = vrot.slane %v4136, 5
        %v4139 = vsel %vm289, %v4134, %v4138
        %v4140 = vshrl.u32 %v3903, 16
        %v4142 = vrot.slane %v4140, 4
        %v4143 = vor.u32 %v4142, %v4138
        %v4144 = vrot.slane %v4143, 4
        %v4146 = vshll.u32 %v3926, 16
        %v4148 = vrot.slane %v4146, 5
        %v4149 = vsel %vm289, %v4144, %v4148
        %v4151 = vshrl.u32 %v3904, 16
        %v4153 = vrot.slane %v4151, 4
        %v4154 = vshll.u32 %v3904, 16
        %v4156 = vrot.slane %v4154, 5
        %v4157 = vor.u32 %v4153, %v4156
        %v4158 = vrot.slane %v4157, 4
        %v4160 = vshll.u32 %v3905, 16
        %v4162 = vrot.slane %v4160, 5
        %v4163 = vsel %vm289, %v4158, %v4162
        %v4164 = vshrl.u32 %v3905, 16
        %v4166 = vrot.slane %v4164, 4
        %v4167 = vor.u32 %v4166, %v4162
        %v4168 = vrot.slane %v4167, 4
        %v4170 = vshll.u32 %v3927, 16
        %v4172 = vrot.slane %v4170, 5
        %v4173 = vsel %vm289, %v4168, %v4172
        %v4175 = vshrl.u32 %v3906, 16
        %v4177 = vrot.slane %v4175, 4
        %v4178 = vshll.u32 %v3906, 16
        %v4180 = vrot.slane %v4178, 5
        %v4181 = vor.u32 %v4177, %v4180
        %v4182 = vrot.slane %v4181, 4
        %v4184 = vshll.u32 %v3907, 16
        %v4186 = vrot.slane %v4184, 5
        %v4187 = vsel %vm289, %v4182, %v4186
        %v4188 = vshrl.u32 %v3907, 16
        %v4190 = vrot.slane %v4188, 4
        %v4191 = vor.u32 %v4190, %v4186
        %v4192 = vrot.slane %v4191, 4
        %v4194 = vshll.u32 %v3928, 16
        %v4196 = vrot.slane %v4194, 5
        %v4197 = vsel %vm289, %v4192, %v4196
        %v4199 = vshrl.u32 %v3908, 16
        %v4201 = vrot.slane %v4199, 4
        %v4202 = vshll.u32 %v3908, 16
        %v4204 = vrot.slane %v4202, 5
        %v4205 = vor.u32 %v4201, %v4204
        %v4206 = vrot.slane %v4205, 4
        %v4208 = vshll.u32 %v3909, 16
        %v4210 = vrot.slane %v4208, 5
        %v4211 = vsel %vm289, %v4206, %v4210
        %v4212 = vshrl.u32 %v3909, 16
        %v4214 = vrot.slane %v4212, 4
        %v4215 = vor.u32 %v4214, %v4210
        %v4216 = vrot.slane %v4215, 4
        %v4218 = vshll.u32 %v3929, 16
        %v4220 = vrot.slane %v4218, 5
        %v4221 = vsel %vm289, %v4216, %v4220
        %v4223 = vshrl.u32 %v3910, 16
        %v4225 = vrot.slane %v4223, 4
        %v4226 = vshll.u32 %v3910, 16
        %v4228 = vrot.slane %v4226, 5
        %v4229 = vor.u32 %v4225, %v4228
        %v4230 = vrot.slane %v4229, 4
        %v4232 = vshll.u32 %v3911, 16
        %v4234 = vrot.slane %v4232, 5
        %v4235 = vsel %vm289, %v4230, %v4234
        %v4236 = vshrl.u32 %v3911, 16
        %v4238 = vrot.slane %v4236, 4
        %v4239 = vor.u32 %v4238, %v4234
        %v4240 = vrot.slane %v4239, 4
        %v4242 = vshll.u32 %v3930, 16
        %v4244 = vrot.slane %v4242, 5
        %v4245 = vsel %vm289, %v4240, %v4244
        %v4247 = vshrl.u32 %v3912, 16
        %v4249 = vrot.slane %v4247, 4
        %v4250 = vshll.u32 %v3912, 16
        %v4252 = vrot.slane %v4250, 5
        %v4253 = vor.u32 %v4249, %v4252
        %v4254 = vrot.slane %v4253, 4
        %v4256 = vshll.u32 %v3913, 16
        %v4258 = vrot.slane %v4256, 5
        %v4259 = vsel %vm289, %v4254, %v4258
        %v4260 = vshrl.u32 %v3913, 16
        %v4262 = vrot.slane %v4260, 4
        %v4263 = vor.u32 %v4262, %v4258
        %v4264 = vrot.slane %v4263, 4
        %v4266 = vshll.u32 %v3931, 16
        %v4268 = vrot.slane %v4266, 5
        %v4269 = vsel %vm289, %v4264, %v4268
        %v4271 = vshrl.u32 %v3914, 16
        %v4273 = vrot.slane %v4271, 4
        %v4274 = vshll.u32 %v3914, 16
        %v4276 = vrot.slane %v4274, 5
        %v4277 = vor.u32 %v4273, %v4276
        %v4278 = vrot.slane %v4277, 4
        %v4280 = vshll.u32 %v3915, 16
        %v4282 = vrot.slane %v4280, 5
        %v4283 = vsel %vm289, %v4278, %v4282
        %v4284 = vshrl.u32 %v3915, 16
        %v4286 = vrot.slane %v4284, 4
        %v4287 = vor.u32 %v4286, %v4282
        %v4288 = vrot.slane %v4287, 4
        %v4290 = vshll.u32 %v3932, 16
        %v4292 = vrot.slane %v4290, 5
        %v4293 = vsel %vm289, %v4288, %v4292
        %v4295 = vshrl.u32 %v3916, 16
        %v4297 = vrot.slane %v4295, 4
        %v4298 = vshll.u32 %v3916, 16
        %v4300 = vrot.slane %v4298, 5
        %v4301 = vor.u32 %v4297, %v4300
        %v4302 = vrot.slane %v4301, 4
        %v4304 = vshll.u32 %v3917, 16
        %v4306 = vrot.slane %v4304, 5
        %v4307 = vsel %vm289, %v4302, %v4306
        %v4308 = vshrl.u32 %v3917, 16
        %v4310 = vrot.slane %v4308, 4
        %v4311 = vor.u32 %v4310, %v4306
        %v4312 = vrot.slane %v4311, 4
        %v4314 = vshll.u32 %v3933, 16
        %v4316 = vrot.slane %v4314, 5
        %v4317 = vsel %vm289, %v4312, %v4316
        %v4318 = vld [vmem:[%s3885] sm:$0xe]
        %v4319 = vld [vmem:[%s3885 + $0xc] sm:$0xe]
        %v4320 = vld [vmem:[%s3885 + $0x18] sm:$0xe]
        %v4321 = vld [vmem:[%s3885 + $0x24] sm:$0xe]
        %v4322 = vld [vmem:[%s3885 + $0x30] sm:$0xe]
        %v4323 = vld [vmem:[%s3885 + $0x3c] sm:$0xe]
        %v4324 = vld [vmem:[%s3885 + $0x48] sm:$0xe]
        %v4325 = vld [vmem:[%s3885 + $0x54] sm:$0xe]
        %v4326 = vld [vmem:[%s3885 + $0x60] sm:$0xe]
        %v4327 = vld [vmem:[%s3885 + $0x6c] sm:$0xe]
        %v4328 = vld [vmem:[%s3885 + $0x78] sm:$0xe]
        %v4329 = vld [vmem:[%s3885 + $0x84] sm:$0xe]
        %v4330 = vld [vmem:[%s3885 + $0x90] sm:$0xe]
        %v4331 = vld [vmem:[%s3885 + $0x9c] sm:$0xe]
        %v4332 = vld [vmem:[%s3885 + $0xa8] sm:$0xe]
        %v4333 = vld [vmem:[%s3885 + $0xb4] sm:$0xe]
        %v4382 = vrot.slane %v4318, 5
        %v4383 = vrot.slane %v4382, 4
        %v4384 = vrot.slane %v3887, 5
        %v4385 = vsel %vm740, %v4383, %v4384
        %v4386 = vrot.slane %v4384, 4
        %v4387 = vrot.slane %v3918, 5
        %v4388 = vsel %vm740, %v4386, %v4387
        %v4389 = vrot.slane %v4319, 5
        %v4390 = vrot.slane %v4389, 4
        %v4391 = vrot.slane %v3889, 5
        %v4392 = vsel %vm740, %v4390, %v4391
        %v4393 = vrot.slane %v4391, 4
        %v4394 = vrot.slane %v3919, 5
        %v4395 = vsel %vm740, %v4393, %v4394
        %v4396 = vrot.slane %v4320, 5
        %v4397 = vrot.slane %v4396, 4
        %v4398 = vrot.slane %v3891, 5
        %v4399 = vsel %vm740, %v4397, %v4398
        %v4400 = vrot.slane %v4398, 4
        %v4401 = vrot.slane %v3920, 5
        %v4402 = vsel %vm740, %v4400, %v4401
        %v4403 = vrot.slane %v4321, 5
        %v4404 = vrot.slane %v4403, 4
        %v4405 = vrot.slane %v3893, 5
        %v4406 = vsel %vm740, %v4404, %v4405
        %v4407 = vrot.slane %v4405, 4
        %v4408 = vrot.slane %v3921, 5
        %v4409 = vsel %vm740, %v4407, %v4408
        %v4410 = vrot.slane %v4322, 5
        %v4411 = vrot.slane %v4410, 4
        %v4412 = vrot.slane %v3895, 5
        %v4413 = vsel %vm740, %v4411, %v4412
        %v4414 = vrot.slane %v4412, 4
        %v4415 = vrot.slane %v3922, 5
        %v4416 = vsel %vm740, %v4414, %v4415
        %v4417 = vrot.slane %v4323, 5
        %v4418 = vrot.slane %v4417, 4
        %v4419 = vrot.slane %v3897, 5
        %v4420 = vsel %vm740, %v4418, %v4419
        %v4421 = vrot.slane %v4419, 4
        %v4422 = vrot.slane %v3923, 5
        %v4423 = vsel %vm740, %v4421, %v4422
        %v4424 = vrot.slane %v4324, 5
        %v4425 = vrot.slane %v4424, 4
        %v4426 = vrot.slane %v3899, 5
        %v4427 = vsel %vm740, %v4425, %v4426
        %v4428 = vrot.slane %v4426, 4
        %v4429 = vrot.slane %v3924, 5
        %v4430 = vsel %vm740, %v4428, %v4429
        %v4431 = vrot.slane %v4325, 5
        %v4432 = vrot.slane %v4431, 4
        %v4433 = vrot.slane %v3901, 5
        %v4434 = vsel %vm740, %v4432, %v4433
        %v4435 = vrot.slane %v4433, 4
        %v4436 = vrot.slane %v3925, 5
        %v4437 = vsel %vm740, %v4435, %v4436
        %v4438 = vrot.slane %v4326, 5
        %v4439 = vrot.slane %v4438, 4
        %v4440 = vrot.slane %v3903, 5
        %v4441 = vsel %vm740, %v4439, %v4440
        %v4442 = vrot.slane %v4440, 4
        %v4443 = vrot.slane %v3926, 5
        %v4444 = vsel %vm740, %v4442, %v4443
        %v4445 = vrot.slane %v4327, 5
        %v4446 = vrot.slane %v4445, 4
        %v4447 = vrot.slane %v3905, 5
        %v4448 = vsel %vm740, %v4446, %v4447
        %v4449 = vrot.slane %v4447, 4
        %v4450 = vrot.slane %v3927, 5
        %v4451 = vsel %vm740, %v4449, %v4450
        %v4452 = vrot.slane %v4328, 5
        %v4453 = vrot.slane %v4452, 4
        %v4454 = vrot.slane %v3907, 5
        %v4455 = vsel %vm740, %v4453, %v4454
        %v4456 = vrot.slane %v4454, 4
        %v4457 = vrot.slane %v3928, 5
        %v4458 = vsel %vm740, %v4456, %v4457
        %v4459 = vrot.slane %v4329, 5
        %v4460 = vrot.slane %v4459, 4
        %v4461 = vrot.slane %v3909, 5
        %v4462 = vsel %vm740, %v4460, %v4461
        %v4463 = vrot.slane %v4461, 4
        %v4464 = vrot.slane %v3929, 5
        %v4465 = vsel %vm740, %v4463, %v4464
        %v4466 = vrot.slane %v4330, 5
        %v4467 = vrot.slane %v4466, 4
        %v4468 = vrot.slane %v3911, 5
        %v4469 = vsel %vm740, %v4467, %v4468
        %v4470 = vrot.slane %v4468, 4
        %v4471 = vrot.slane %v3930, 5
        %v4472 = vsel %vm740, %v4470, %v4471
        %v4473 = vrot.slane %v4331, 5
        %v4474 = vrot.slane %v4473, 4
        %v4475 = vrot.slane %v3913, 5
        %v4476 = vsel %vm740, %v4474, %v4475
        %v4477 = vrot.slane %v4475, 4
        %v4478 = vrot.slane %v3931, 5
        %v4479 = vsel %vm740, %v4477, %v4478
        %v4480 = vrot.slane %v4332, 5
        %v4481 = vrot.slane %v4480, 4
        %v4482 = vrot.slane %v3915, 5
        %v4483 = vsel %vm740, %v4481, %v4482
        %v4484 = vrot.slane %v4482, 4
        %v4485 = vrot.slane %v3932, 5
        %v4486 = vsel %vm740, %v4484, %v4485
        %v4487 = vrot.slane %v4333, 5
        %v4488 = vrot.slane %v4487, 4
        %v4489 = vrot.slane %v3917, 5
        %v4490 = vsel %vm740, %v4488, %v4489
        %v4491 = vrot.slane %v4489, 4
        %v4492 = vrot.slane %v3933, 5
        %v4493 = vsel %vm740, %v4491, %v4492
        %s4494 = scalar_lea.vmem %s188, 240 [#allocation2]
        %v4495 = vld [vmem:[%s4494] sm:$0xf]
        %v4496 = vld [vmem:[%s4494 + $0x4] sm:$0xf]
        %v4497 = vld [vmem:[%s4494 + $0xc] sm:$0xf]
        %v4498 = vld [vmem:[%s4494 + $0x10] sm:$0xf]
        %v4499 = vld [vmem:[%s4494 + $0x18] sm:$0xf]
        %v4500 = vld [vmem:[%s4494 + $0x1c] sm:$0xf]
        %v4501 = vld [vmem:[%s4494 + $0x24] sm:$0xf]
        %v4502 = vld [vmem:[%s4494 + $0x28] sm:$0xf]
        %v4503 = vld [vmem:[%s4494 + $0x30] sm:$0xf]
        %v4504 = vld [vmem:[%s4494 + $0x34] sm:$0xf]
        %v4505 = vld [vmem:[%s4494 + $0x3c] sm:$0xf]
        %v4506 = vld [vmem:[%s4494 + $0x40] sm:$0xf]
        %v4507 = vld [vmem:[%s4494 + $0x48] sm:$0xf]
        %v4508 = vld [vmem:[%s4494 + $0x4c] sm:$0xf]
        %v4509 = vld [vmem:[%s4494 + $0x54] sm:$0xf]
        %v4510 = vld [vmem:[%s4494 + $0x58] sm:$0xf]
        %v4511 = vld [vmem:[%s4494 + $0x60] sm:$0xf]
        %v4512 = vld [vmem:[%s4494 + $0x64] sm:$0xf]
        %v4513 = vld [vmem:[%s4494 + $0x6c] sm:$0xf]
        %v4514 = vld [vmem:[%s4494 + $0x70] sm:$0xf]
        %v4515 = vld [vmem:[%s4494 + $0x78] sm:$0xf]
        %v4516 = vld [vmem:[%s4494 + $0x7c] sm:$0xf]
        %v4517 = vld [vmem:[%s4494 + $0x84] sm:$0xf]
        %v4518 = vld [vmem:[%s4494 + $0x88] sm:$0xf]
        %v4519 = vld [vmem:[%s4494 + $0x90] sm:$0xf]
        %v4520 = vld [vmem:[%s4494 + $0x94] sm:$0xf]
        %v4521 = vld [vmem:[%s4494 + $0x9c] sm:$0xf]
        %v4522 = vld [vmem:[%s4494 + $0xa0] sm:$0xf]
        %v4523 = vld [vmem:[%s4494 + $0xa8] sm:$0xf]
        %v4524 = vld [vmem:[%s4494 + $0xac] sm:$0xf]
        %v4525 = vld [vmem:[%s4494 + $0xb4] sm:$0xf]
        %v4526 = vld [vmem:[%s4494 + $0xb8] sm:$0xf]
        %v4527 = vld [vmem:[%s4494 + $0x8] sm:$0x1]
        %v4528 = vld [vmem:[%s4494 + $0x14] sm:$0x1]
        %v4529 = vld [vmem:[%s4494 + $0x20] sm:$0x1]
        %v4530 = vld [vmem:[%s4494 + $0x2c] sm:$0x1]
        %v4531 = vld [vmem:[%s4494 + $0x38] sm:$0x1]
        %v4532 = vld [vmem:[%s4494 + $0x44] sm:$0x1]
        %v4533 = vld [vmem:[%s4494 + $0x50] sm:$0x1]
        %v4534 = vld [vmem:[%s4494 + $0x5c] sm:$0x1]
        %v4535 = vld [vmem:[%s4494 + $0x68] sm:$0x1]
        %v4536 = vld [vmem:[%s4494 + $0x74] sm:$0x1]
        %v4537 = vld [vmem:[%s4494 + $0x80] sm:$0x1]
        %v4538 = vld [vmem:[%s4494 + $0x8c] sm:$0x1]
        %v4539 = vld [vmem:[%s4494 + $0x98] sm:$0x1]
        %v4540 = vld [vmem:[%s4494 + $0xa4] sm:$0x1]
        %v4541 = vld [vmem:[%s4494 + $0xb0] sm:$0x1]
        %v4542 = vld [vmem:[%s4494 + $0xbc] sm:$0x1]
        %v4544 = vshrl.u32 %v4495, 16
        %v4546 = vrot.slane %v4544, 4
        %v4547 = vshll.u32 %v4495, 16
        %v4549 = vrot.slane %v4547, 5
        %v4550 = vor.u32 %v4546, %v4549
        %v4551 = vrot.slane %v4550, 4
        %v4553 = vshll.u32 %v4496, 16
        %v4555 = vrot.slane %v4553, 5
        %v4556 = vsel %vm289, %v4551, %v4555
        %v4557 = vshrl.u32 %v4496, 16
        %v4559 = vrot.slane %v4557, 4
        %v4560 = vor.u32 %v4559, %v4555
        %v4561 = vrot.slane %v4560, 4
        %v4563 = vshll.u32 %v4527, 16
        %v4565 = vrot.slane %v4563, 5
        %v4566 = vsel %vm289, %v4561, %v4565
        %v4568 = vshrl.u32 %v4497, 16
        %v4570 = vrot.slane %v4568, 4
        %v4571 = vshll.u32 %v4497, 16
        %v4573 = vrot.slane %v4571, 5
        %v4574 = vor.u32 %v4570, %v4573
        %v4575 = vrot.slane %v4574, 4
        %v4577 = vshll.u32 %v4498, 16
        %v4579 = vrot.slane %v4577, 5
        %v4580 = vsel %vm289, %v4575, %v4579
        %v4581 = vshrl.u32 %v4498, 16
        %v4583 = vrot.slane %v4581, 4
        %v4584 = vor.u32 %v4583, %v4579
        %v4585 = vrot.slane %v4584, 4
        %v4587 = vshll.u32 %v4528, 16
        %v4589 = vrot.slane %v4587, 5
        %v4590 = vsel %vm289, %v4585, %v4589
        %v4592 = vshrl.u32 %v4499, 16
        %v4594 = vrot.slane %v4592, 4
        %v4595 = vshll.u32 %v4499, 16
        %v4597 = vrot.slane %v4595, 5
        %v4598 = vor.u32 %v4594, %v4597
        %v4599 = vrot.slane %v4598, 4
        %v4601 = vshll.u32 %v4500, 16
        %v4603 = vrot.slane %v4601, 5
        %v4604 = vsel %vm289, %v4599, %v4603
        %v4605 = vshrl.u32 %v4500, 16
        %v4607 = vrot.slane %v4605, 4
        %v4608 = vor.u32 %v4607, %v4603
        %v4609 = vrot.slane %v4608, 4
        %v4611 = vshll.u32 %v4529, 16
        %v4613 = vrot.slane %v4611, 5
        %v4614 = vsel %vm289, %v4609, %v4613
        %v4616 = vshrl.u32 %v4501, 16
        %v4618 = vrot.slane %v4616, 4
        %v4619 = vshll.u32 %v4501, 16
        %v4621 = vrot.slane %v4619, 5
        %v4622 = vor.u32 %v4618, %v4621
        %v4623 = vrot.slane %v4622, 4
        %v4625 = vshll.u32 %v4502, 16
        %v4627 = vrot.slane %v4625, 5
        %v4628 = vsel %vm289, %v4623, %v4627
        %v4629 = vshrl.u32 %v4502, 16
        %v4631 = vrot.slane %v4629, 4
        %v4632 = vor.u32 %v4631, %v4627
        %v4633 = vrot.slane %v4632, 4
        %v4635 = vshll.u32 %v4530, 16
        %v4637 = vrot.slane %v4635, 5
        %v4638 = vsel %vm289, %v4633, %v4637
        %v4640 = vshrl.u32 %v4503, 16
        %v4642 = vrot.slane %v4640, 4
        %v4643 = vshll.u32 %v4503, 16
        %v4645 = vrot.slane %v4643, 5
        %v4646 = vor.u32 %v4642, %v4645
        %v4647 = vrot.slane %v4646, 4
        %v4649 = vshll.u32 %v4504, 16
        %v4651 = vrot.slane %v4649, 5
        %v4652 = vsel %vm289, %v4647, %v4651
        %v4653 = vshrl.u32 %v4504, 16
        %v4655 = vrot.slane %v4653, 4
        %v4656 = vor.u32 %v4655, %v4651
        %v4657 = vrot.slane %v4656, 4
        %v4659 = vshll.u32 %v4531, 16
        %v4661 = vrot.slane %v4659, 5
        %v4662 = vsel %vm289, %v4657, %v4661
        %v4664 = vshrl.u32 %v4505, 16
        %v4666 = vrot.slane %v4664, 4
        %v4667 = vshll.u32 %v4505, 16
        %v4669 = vrot.slane %v4667, 5
        %v4670 = vor.u32 %v4666, %v4669
        %v4671 = vrot.slane %v4670, 4
        %v4673 = vshll.u32 %v4506, 16
        %v4675 = vrot.slane %v4673, 5
        %v4676 = vsel %vm289, %v4671, %v4675
        %v4677 = vshrl.u32 %v4506, 16
        %v4679 = vrot.slane %v4677, 4
        %v4680 = vor.u32 %v4679, %v4675
        %v4681 = vrot.slane %v4680, 4
        %v4683 = vshll.u32 %v4532, 16
        %v4685 = vrot.slane %v4683, 5
        %v4686 = vsel %vm289, %v4681, %v4685
        %v4688 = vshrl.u32 %v4507, 16
        %v4690 = vrot.slane %v4688, 4
        %v4691 = vshll.u32 %v4507, 16
        %v4693 = vrot.slane %v4691, 5
        %v4694 = vor.u32 %v4690, %v4693
        %v4695 = vrot.slane %v4694, 4
        %v4697 = vshll.u32 %v4508, 16
        %v4699 = vrot.slane %v4697, 5
        %v4700 = vsel %vm289, %v4695, %v4699
        %v4701 = vshrl.u32 %v4508, 16
        %v4703 = vrot.slane %v4701, 4
        %v4704 = vor.u32 %v4703, %v4699
        %v4705 = vrot.slane %v4704, 4
        %v4707 = vshll.u32 %v4533, 16
        %v4709 = vrot.slane %v4707, 5
        %v4710 = vsel %vm289, %v4705, %v4709
        %v4712 = vshrl.u32 %v4509, 16
        %v4714 = vrot.slane %v4712, 4
        %v4715 = vshll.u32 %v4509, 16
        %v4717 = vrot.slane %v4715, 5
        %v4718 = vor.u32 %v4714, %v4717
        %v4719 = vrot.slane %v4718, 4
        %v4721 = vshll.u32 %v4510, 16
        %v4723 = vrot.slane %v4721, 5
        %v4724 = vsel %vm289, %v4719, %v4723
        %v4725 = vshrl.u32 %v4510, 16
        %v4727 = vrot.slane %v4725, 4
        %v4728 = vor.u32 %v4727, %v4723
        %v4729 = vrot.slane %v4728, 4
        %v4731 = vshll.u32 %v4534, 16
        %v4733 = vrot.slane %v4731, 5
        %v4734 = vsel %vm289, %v4729, %v4733
        %v4736 = vshrl.u32 %v4511, 16
        %v4738 = vrot.slane %v4736, 4
        %v4739 = vshll.u32 %v4511, 16
        %v4741 = vrot.slane %v4739, 5
        %v4742 = vor.u32 %v4738, %v4741
        %v4743 = vrot.slane %v4742, 4
        %v4745 = vshll.u32 %v4512, 16
        %v4747 = vrot.slane %v4745, 5
        %v4748 = vsel %vm289, %v4743, %v4747
        %v4749 = vshrl.u32 %v4512, 16
        %v4751 = vrot.slane %v4749, 4
        %v4752 = vor.u32 %v4751, %v4747
        %v4753 = vrot.slane %v4752, 4
        %v4755 = vshll.u32 %v4535, 16
        %v4757 = vrot.slane %v4755, 5
        %v4758 = vsel %vm289, %v4753, %v4757
        %v4760 = vshrl.u32 %v4513, 16
        %v4762 = vrot.slane %v4760, 4
        %v4763 = vshll.u32 %v4513, 16
        %v4765 = vrot.slane %v4763, 5
        %v4766 = vor.u32 %v4762, %v4765
        %v4767 = vrot.slane %v4766, 4
        %v4769 = vshll.u32 %v4514, 16
        %v4771 = vrot.slane %v4769, 5
        %v4772 = vsel %vm289, %v4767, %v4771
        %v4773 = vshrl.u32 %v4514, 16
        %v4775 = vrot.slane %v4773, 4
        %v4776 = vor.u32 %v4775, %v4771
        %v4777 = vrot.slane %v4776, 4
        %v4779 = vshll.u32 %v4536, 16
        %v4781 = vrot.slane %v4779, 5
        %v4782 = vsel %vm289, %v4777, %v4781
        %v4784 = vshrl.u32 %v4515, 16
        %v4786 = vrot.slane %v4784, 4
        %v4787 = vshll.u32 %v4515, 16
        %v4789 = vrot.slane %v4787, 5
        %v4790 = vor.u32 %v4786, %v4789
        %v4791 = vrot.slane %v4790, 4
        %v4793 = vshll.u32 %v4516, 16
        %v4795 = vrot.slane %v4793, 5
        %v4796 = vsel %vm289, %v4791, %v4795
        %v4797 = vshrl.u32 %v4516, 16
        %v4799 = vrot.slane %v4797, 4
        %v4800 = vor.u32 %v4799, %v4795
        %v4801 = vrot.slane %v4800, 4
        %v4803 = vshll.u32 %v4537, 16
        %v4805 = vrot.slane %v4803, 5
        %v4806 = vsel %vm289, %v4801, %v4805
        %v4808 = vshrl.u32 %v4517, 16
        %v4810 = vrot.slane %v4808, 4
        %v4811 = vshll.u32 %v4517, 16
        %v4813 = vrot.slane %v4811, 5
        %v4814 = vor.u32 %v4810, %v4813
        %v4815 = vrot.slane %v4814, 4
        %v4817 = vshll.u32 %v4518, 16
        %v4819 = vrot.slane %v4817, 5
        %v4820 = vsel %vm289, %v4815, %v4819
        %v4821 = vshrl.u32 %v4518, 16
        %v4823 = vrot.slane %v4821, 4
        %v4824 = vor.u32 %v4823, %v4819
        %v4825 = vrot.slane %v4824, 4
        %v4827 = vshll.u32 %v4538, 16
        %v4829 = vrot.slane %v4827, 5
        %v4830 = vsel %vm289, %v4825, %v4829
        %v4832 = vshrl.u32 %v4519, 16
        %v4834 = vrot.slane %v4832, 4
        %v4835 = vshll.u32 %v4519, 16
        %v4837 = vrot.slane %v4835, 5
        %v4838 = vor.u32 %v4834, %v4837
        %v4839 = vrot.slane %v4838, 4
        %v4841 = vshll.u32 %v4520, 16
        %v4843 = vrot.slane %v4841, 5
        %v4844 = vsel %vm289, %v4839, %v4843
        %v4845 = vshrl.u32 %v4520, 16
        %v4847 = vrot.slane %v4845, 4
        %v4848 = vor.u32 %v4847, %v4843
        %v4849 = vrot.slane %v4848, 4
        %v4851 = vshll.u32 %v4539, 16
        %v4853 = vrot.slane %v4851, 5
        %v4854 = vsel %vm289, %v4849, %v4853
        %v4856 = vshrl.u32 %v4521, 16
        %v4858 = vrot.slane %v4856, 4
        %v4859 = vshll.u32 %v4521, 16
        %v4861 = vrot.slane %v4859, 5
        %v4862 = vor.u32 %v4858, %v4861
        %v4863 = vrot.slane %v4862, 4
        %v4865 = vshll.u32 %v4522, 16
        %v4867 = vrot.slane %v4865, 5
        %v4868 = vsel %vm289, %v4863, %v4867
        %v4869 = vshrl.u32 %v4522, 16
        %v4871 = vrot.slane %v4869, 4
        %v4872 = vor.u32 %v4871, %v4867
        %v4873 = vrot.slane %v4872, 4
        %v4875 = vshll.u32 %v4540, 16
        %v4877 = vrot.slane %v4875, 5
        %v4878 = vsel %vm289, %v4873, %v4877
        %v4880 = vshrl.u32 %v4523, 16
        %v4882 = vrot.slane %v4880, 4
        %v4883 = vshll.u32 %v4523, 16
        %v4885 = vrot.slane %v4883, 5
        %v4886 = vor.u32 %v4882, %v4885
        %v4887 = vrot.slane %v4886, 4
        %v4889 = vshll.u32 %v4524, 16
        %v4891 = vrot.slane %v4889, 5
        %v4892 = vsel %vm289, %v4887, %v4891
        %v4893 = vshrl.u32 %v4524, 16
        %v4895 = vrot.slane %v4893, 4
        %v4896 = vor.u32 %v4895, %v4891
        %v4897 = vrot.slane %v4896, 4
        %v4899 = vshll.u32 %v4541, 16
        %v4901 = vrot.slane %v4899, 5
        %v4902 = vsel %vm289, %v4897, %v4901
        %v4904 = vshrl.u32 %v4525, 16
        %v4906 = vrot.slane %v4904, 4
        %v4907 = vshll.u32 %v4525, 16
        %v4909 = vrot.slane %v4907, 5
        %v4910 = vor.u32 %v4906, %v4909
        %v4911 = vrot.slane %v4910, 4
        %v4913 = vshll.u32 %v4526, 16
        %v4915 = vrot.slane %v4913, 5
        %v4916 = vsel %vm289, %v4911, %v4915
        %v4917 = vshrl.u32 %v4526, 16
        %v4919 = vrot.slane %v4917, 4
        %v4920 = vor.u32 %v4919, %v4915
        %v4921 = vrot.slane %v4920, 4
        %v4923 = vshll.u32 %v4542, 16
        %v4925 = vrot.slane %v4923, 5
        %v4926 = vsel %vm289, %v4921, %v4925
        %v4927 = vld [vmem:[%s4494] sm:$0xe]
        %v4928 = vld [vmem:[%s4494 + $0xc] sm:$0xe]
        %v4929 = vld [vmem:[%s4494 + $0x18] sm:$0xe]
        %v4930 = vld [vmem:[%s4494 + $0x24] sm:$0xe]
        %v4931 = vld [vmem:[%s4494 + $0x30] sm:$0xe]
        %v4932 = vld [vmem:[%s4494 + $0x3c] sm:$0xe]
        %v4933 = vld [vmem:[%s4494 + $0x48] sm:$0xe]
        %v4934 = vld [vmem:[%s4494 + $0x54] sm:$0xe]
        %v4935 = vld [vmem:[%s4494 + $0x60] sm:$0xe]
        %v4936 = vld [vmem:[%s4494 + $0x6c] sm:$0xe]
        %v4937 = vld [vmem:[%s4494 + $0x78] sm:$0xe]
        %v4938 = vld [vmem:[%s4494 + $0x84] sm:$0xe]
        %v4939 = vld [vmem:[%s4494 + $0x90] sm:$0xe]
        %v4940 = vld [vmem:[%s4494 + $0x9c] sm:$0xe]
        %v4941 = vld [vmem:[%s4494 + $0xa8] sm:$0xe]
        %v4942 = vld [vmem:[%s4494 + $0xb4] sm:$0xe]
        %v4991 = vrot.slane %v4927, 5
        %v4992 = vrot.slane %v4991, 4
        %v4993 = vrot.slane %v4496, 5
        %v4994 = vsel %vm740, %v4992, %v4993
        %v4995 = vrot.slane %v4993, 4
        %v4996 = vrot.slane %v4527, 5
        %v4997 = vsel %vm740, %v4995, %v4996
        %v4998 = vrot.slane %v4928, 5
        %v4999 = vrot.slane %v4998, 4
        %v5000 = vrot.slane %v4498, 5
        %v5001 = vsel %vm740, %v4999, %v5000
        %v5002 = vrot.slane %v5000, 4
        %v5003 = vrot.slane %v4528, 5
        %v5004 = vsel %vm740, %v5002, %v5003
        %v5005 = vrot.slane %v4929, 5
        %v5006 = vrot.slane %v5005, 4
        %v5007 = vrot.slane %v4500, 5
        %v5008 = vsel %vm740, %v5006, %v5007
        %v5009 = vrot.slane %v5007, 4
        %v5010 = vrot.slane %v4529, 5
        %v5011 = vsel %vm740, %v5009, %v5010
        %v5012 = vrot.slane %v4930, 5
        %v5013 = vrot.slane %v5012, 4
        %v5014 = vrot.slane %v4502, 5
        %v5015 = vsel %vm740, %v5013, %v5014
        %v5016 = vrot.slane %v5014, 4
        %v5017 = vrot.slane %v4530, 5
        %v5018 = vsel %vm740, %v5016, %v5017
        %v5019 = vrot.slane %v4931, 5
        %v5020 = vrot.slane %v5019, 4
        %v5021 = vrot.slane %v4504, 5
        %v5022 = vsel %vm740, %v5020, %v5021
        %v5023 = vrot.slane %v5021, 4
        %v5024 = vrot.slane %v4531, 5
        %v5025 = vsel %vm740, %v5023, %v5024
        %v5026 = vrot.slane %v4932, 5
        %v5027 = vrot.slane %v5026, 4
        %v5028 = vrot.slane %v4506, 5
        %v5029 = vsel %vm740, %v5027, %v5028
        %v5030 = vrot.slane %v5028, 4
        %v5031 = vrot.slane %v4532, 5
        %v5032 = vsel %vm740, %v5030, %v5031
        %v5033 = vrot.slane %v4933, 5
        %v5034 = vrot.slane %v5033, 4
        %v5035 = vrot.slane %v4508, 5
        %v5036 = vsel %vm740, %v5034, %v5035
        %v5037 = vrot.slane %v5035, 4
        %v5038 = vrot.slane %v4533, 5
        %v5039 = vsel %vm740, %v5037, %v5038
        %v5040 = vrot.slane %v4934, 5
        %v5041 = vrot.slane %v5040, 4
        %v5042 = vrot.slane %v4510, 5
        %v5043 = vsel %vm740, %v5041, %v5042
        %v5044 = vrot.slane %v5042, 4
        %v5045 = vrot.slane %v4534, 5
        %v5046 = vsel %vm740, %v5044, %v5045
        %v5047 = vrot.slane %v4935, 5
        %v5048 = vrot.slane %v5047, 4
        %v5049 = vrot.slane %v4512, 5
        %v5050 = vsel %vm740, %v5048, %v5049
        %v5051 = vrot.slane %v5049, 4
        %v5052 = vrot.slane %v4535, 5
        %v5053 = vsel %vm740, %v5051, %v5052
        %v5054 = vrot.slane %v4936, 5
        %v5055 = vrot.slane %v5054, 4
        %v5056 = vrot.slane %v4514, 5
        %v5057 = vsel %vm740, %v5055, %v5056
        %v5058 = vrot.slane %v5056, 4
        %v5059 = vrot.slane %v4536, 5
        %v5060 = vsel %vm740, %v5058, %v5059
        %v5061 = vrot.slane %v4937, 5
        %v5062 = vrot.slane %v5061, 4
        %v5063 = vrot.slane %v4516, 5
        %v5064 = vsel %vm740, %v5062, %v5063
        %v5065 = vrot.slane %v5063, 4
        %v5066 = vrot.slane %v4537, 5
        %v5067 = vsel %vm740, %v5065, %v5066
        %v5068 = vrot.slane %v4938, 5
        %v5069 = vrot.slane %v5068, 4
        %v5070 = vrot.slane %v4518, 5
        %v5071 = vsel %vm740, %v5069, %v5070
        %v5072 = vrot.slane %v5070, 4
        %v5073 = vrot.slane %v4538, 5
        %v5074 = vsel %vm740, %v5072, %v5073
        %v5075 = vrot.slane %v4939, 5
        %v5076 = vrot.slane %v5075, 4
        %v5077 = vrot.slane %v4520, 5
        %v5078 = vsel %vm740, %v5076, %v5077
        %v5079 = vrot.slane %v5077, 4
        %v5080 = vrot.slane %v4539, 5
        %v5081 = vsel %vm740, %v5079, %v5080
        %v5082 = vrot.slane %v4940, 5
        %v5083 = vrot.slane %v5082, 4
        %v5084 = vrot.slane %v4522, 5
        %v5085 = vsel %vm740, %v5083, %v5084
        %v5086 = vrot.slane %v5084, 4
        %v5087 = vrot.slane %v4540, 5
        %v5088 = vsel %vm740, %v5086, %v5087
        %v5089 = vrot.slane %v4941, 5
        %v5090 = vrot.slane %v5089, 4
        %v5091 = vrot.slane %v4524, 5
        %v5092 = vsel %vm740, %v5090, %v5091
        %v5093 = vrot.slane %v5091, 4
        %v5094 = vrot.slane %v4541, 5
        %v5095 = vsel %vm740, %v5093, %v5094
        %v5096 = vrot.slane %v4942, 5
        %v5097 = vrot.slane %v5096, 4
        %v5098 = vrot.slane %v4526, 5
        %v5099 = vsel %vm740, %v5097, %v5098
        %v5100 = vrot.slane %v5098, 4
        %v5101 = vrot.slane %v4542, 5
        %v5102 = vsel %vm740, %v5100, %v5101
        %v5119 = vunpack.c.l.b16 %v3277
        %v5120 = vunpack.c.l.b16 %v3278
        %v5121 = vunpack.c.l.b16 %v3279
        %v5122 = vunpack.c.l.b16 %v3280
        %v5123 = vunpack.c.l.b16 %v3281
        %v5124 = vunpack.c.l.b16 %v3282
        %v5125 = vunpack.c.l.b16 %v3283
        %v5126 = vunpack.c.l.b16 %v3284
        %v5127 = vunpack.c.l.b16 %v3285
        %v5128 = vunpack.c.l.b16 %v3286
        %v5129 = vunpack.c.l.b16 %v3287
        %v5130 = vunpack.c.l.b16 %v3288
        %v5131 = vunpack.c.l.b16 %v3289
        %v5132 = vunpack.c.l.b16 %v3290
        %v5133 = vunpack.c.l.b16 %v3291
        %v5134 = vunpack.c.l.b16 %v3292
        %v5135 = vunpack.c.l.b16 %v3293
        %v5136 = vunpack.c.l.b16 %v3294
        %v5137 = vunpack.c.l.b16 %v3295
        %v5138 = vunpack.c.l.b16 %v3296
        %v5139 = vunpack.c.l.b16 %v3297
        %v5140 = vunpack.c.l.b16 %v3298
        %v5141 = vunpack.c.l.b16 %v3299
        %v5142 = vunpack.c.l.b16 %v3300
        %v5143 = vunpack.c.l.b16 %v3301
        %v5144 = vunpack.c.l.b16 %v3302
        %v5145 = vunpack.c.l.b16 %v3303
        %v5146 = vunpack.c.l.b16 %v3304
        %v5147 = vunpack.c.l.b16 %v3305
        %v5148 = vunpack.c.l.b16 %v3306
        %v5149 = vunpack.c.l.b16 %v3307
        %v5150 = vunpack.c.l.b16 %v3308
        %v5151 = vpack.c.b16 %v5120, %v5119
        %v5152 = vpack.c.b16 %v5122, %v5121
        %v5153 = vpack.c.b16 %v5124, %v5123
        %v5154 = vpack.c.b16 %v5126, %v5125
        %v5155 = vpack.c.b16 %v5128, %v5127
        %v5156 = vpack.c.b16 %v5130, %v5129
        %v5157 = vpack.c.b16 %v5132, %v5131
        %v5158 = vpack.c.b16 %v5134, %v5133
        %v5159 = vpack.c.b16 %v5136, %v5135
        %v5160 = vpack.c.b16 %v5138, %v5137
        %v5161 = vpack.c.b16 %v5140, %v5139
        %v5162 = vpack.c.b16 %v5142, %v5141
        %v5163 = vpack.c.b16 %v5144, %v5143
        %v5164 = vpack.c.b16 %v5146, %v5145
        %v5165 = vpack.c.b16 %v5148, %v5147
        %v5166 = vpack.c.b16 %v5150, %v5149
        %v5167 = vunpack.c.l.b16 %v3338
        %v5168 = vunpack.c.l.b16 %v3348
        %v5169 = vunpack.c.l.b16 %v3362
        %v5170 = vunpack.c.l.b16 %v3372
        %v5171 = vunpack.c.l.b16 %v3386
        %v5172 = vunpack.c.l.b16 %v3396
        %v5173 = vunpack.c.l.b16 %v3410
        %v5174 = vunpack.c.l.b16 %v3420
        %v5175 = vunpack.c.l.b16 %v3434
        %v5176 = vunpack.c.l.b16 %v3444
        %v5177 = vunpack.c.l.b16 %v3458
        %v5178 = vunpack.c.l.b16 %v3468
        %v5179 = vunpack.c.l.b16 %v3482
        %v5180 = vunpack.c.l.b16 %v3492
        %v5181 = vunpack.c.l.b16 %v3506
        %v5182 = vunpack.c.l.b16 %v3516
        %v5183 = vunpack.c.l.b16 %v3530
        %v5184 = vunpack.c.l.b16 %v3540
        %v5185 = vunpack.c.l.b16 %v3554
        %v5186 = vunpack.c.l.b16 %v3564
        %v5187 = vunpack.c.l.b16 %v3578
        %v5188 = vunpack.c.l.b16 %v3588
        %v5189 = vunpack.c.l.b16 %v3602
        %v5190 = vunpack.c.l.b16 %v3612
        %v5191 = vunpack.c.l.b16 %v3626
        %v5192 = vunpack.c.l.b16 %v3636
        %v5193 = vunpack.c.l.b16 %v3650
        %v5194 = vunpack.c.l.b16 %v3660
        %v5195 = vunpack.c.l.b16 %v3674
        %v5196 = vunpack.c.l.b16 %v3684
        %v5197 = vunpack.c.l.b16 %v3698
        %v5198 = vunpack.c.l.b16 %v3708
        %v5199 = vpack.c.b16 %v5168, %v5167
        %v5200 = vpack.c.b16 %v5170, %v5169
        %v5201 = vpack.c.b16 %v5172, %v5171
        %v5202 = vpack.c.b16 %v5174, %v5173
        %v5203 = vpack.c.b16 %v5176, %v5175
        %v5204 = vpack.c.b16 %v5178, %v5177
        %v5205 = vpack.c.b16 %v5180, %v5179
        %v5206 = vpack.c.b16 %v5182, %v5181
        %v5207 = vpack.c.b16 %v5184, %v5183
        %v5208 = vpack.c.b16 %v5186, %v5185
        %v5209 = vpack.c.b16 %v5188, %v5187
        %v5210 = vpack.c.b16 %v5190, %v5189
        %v5211 = vpack.c.b16 %v5192, %v5191
        %v5212 = vpack.c.b16 %v5194, %v5193
        %v5213 = vpack.c.b16 %v5196, %v5195
        %v5214 = vpack.c.b16 %v5198, %v5197
        %5215 = vrot.lane.b32.xlu0 %v5199, 4
        %v5216 = vpop.permute.xlu0 %5215
        %5217 = vrot.lane.b32.xlu0 %v5200, 4
        %v5218 = vpop.permute.xlu0 %5217
        %5219 = vrot.lane.b32.xlu0 %v5201, 4
        %v5220 = vpop.permute.xlu0 %5219
        %5221 = vrot.lane.b32.xlu0 %v5202, 4
        %v5222 = vpop.permute.xlu0 %5221
        %5223 = vrot.lane.b32.xlu0 %v5203, 4
        %v5224 = vpop.permute.xlu0 %5223
        %5225 = vrot.lane.b32.xlu0 %v5204, 4
        %v5226 = vpop.permute.xlu0 %5225
        %5227 = vrot.lane.b32.xlu0 %v5205, 4
        %v5228 = vpop.permute.xlu0 %5227
        %5229 = vrot.lane.b32.xlu0 %v5206, 4
        %v5230 = vpop.permute.xlu0 %5229
        %5231 = vrot.lane.b32.xlu0 %v5207, 4
        %v5232 = vpop.permute.xlu0 %5231
        %5233 = vrot.lane.b32.xlu0 %v5208, 4
        %v5234 = vpop.permute.xlu0 %5233
        %5235 = vrot.lane.b32.xlu0 %v5209, 4
        %v5236 = vpop.permute.xlu0 %5235
        %5237 = vrot.lane.b32.xlu0 %v5210, 4
        %v5238 = vpop.permute.xlu0 %5237
        %5239 = vrot.lane.b32.xlu0 %v5211, 4
        %v5240 = vpop.permute.xlu0 %5239
        %5241 = vrot.lane.b32.xlu0 %v5212, 4
        %v5242 = vpop.permute.xlu0 %5241
        %5243 = vrot.lane.b32.xlu0 %v5213, 4
        %v5244 = vpop.permute.xlu0 %5243
        %5245 = vrot.lane.b32.xlu0 %v5214, 4
        %v5246 = vpop.permute.xlu0 %5245
        %v5247 = vunpack.c.l.b16 %v3776
        %v5248 = vunpack.c.l.b16 %v3779
        %v5249 = vunpack.c.l.b16 %v3783
        %v5250 = vunpack.c.l.b16 %v3786
        %v5251 = vunpack.c.l.b16 %v3790
        %v5252 = vunpack.c.l.b16 %v3793
        %v5253 = vunpack.c.l.b16 %v3797
        %v5254 = vunpack.c.l.b16 %v3800
        %v5255 = vunpack.c.l.b16 %v3804
        %v5256 = vunpack.c.l.b16 %v3807
        %v5257 = vunpack.c.l.b16 %v3811
        %v5258 = vunpack.c.l.b16 %v3814
        %v5259 = vunpack.c.l.b16 %v3818
        %v5260 = vunpack.c.l.b16 %v3821
        %v5261 = vunpack.c.l.b16 %v3825
        %v5262 = vunpack.c.l.b16 %v3828
        %v5263 = vunpack.c.l.b16 %v3832
        %v5264 = vunpack.c.l.b16 %v3835
        %v5265 = vunpack.c.l.b16 %v3839
        %v5266 = vunpack.c.l.b16 %v3842
        %v5267 = vunpack.c.l.b16 %v3846
        %v5268 = vunpack.c.l.b16 %v3849
        %v5269 = vunpack.c.l.b16 %v3853
        %v5270 = vunpack.c.l.b16 %v3856
        %v5271 = vunpack.c.l.b16 %v3860
        %v5272 = vunpack.c.l.b16 %v3863
        %v5273 = vunpack.c.l.b16 %v3867
        %v5274 = vunpack.c.l.b16 %v3870
        %v5275 = vunpack.c.l.b16 %v3874
        %v5276 = vunpack.c.l.b16 %v3877
        %v5277 = vunpack.c.l.b16 %v3881
        %v5278 = vunpack.c.l.b16 %v3884
        %v5279 = vpack.c.b16 %v5248, %v5247
        %v5280 = vpack.c.b16 %v5250, %v5249
        %v5281 = vpack.c.b16 %v5252, %v5251
        %v5282 = vpack.c.b16 %v5254, %v5253
        %v5283 = vpack.c.b16 %v5256, %v5255
        %v5284 = vpack.c.b16 %v5258, %v5257
        %v5285 = vpack.c.b16 %v5260, %v5259
        %v5286 = vpack.c.b16 %v5262, %v5261
        %v5287 = vpack.c.b16 %v5264, %v5263
        %v5288 = vpack.c.b16 %v5266, %v5265
        %v5289 = vpack.c.b16 %v5268, %v5267
        %v5290 = vpack.c.b16 %v5270, %v5269
        %v5291 = vpack.c.b16 %v5272, %v5271
        %v5292 = vpack.c.b16 %v5274, %v5273
        %v5293 = vpack.c.b16 %v5276, %v5275
        %v5294 = vpack.c.b16 %v5278, %v5277
        %5295 = vrot.lane.b32.xlu0 %v5279, 8
        %v5296 = vpop.permute.xlu0 %5295
        %5297 = vrot.lane.b32.xlu0 %v5280, 8
        %v5298 = vpop.permute.xlu0 %5297
        %5299 = vrot.lane.b32.xlu0 %v5281, 8
        %v5300 = vpop.permute.xlu0 %5299
        %5301 = vrot.lane.b32.xlu0 %v5282, 8
        %v5302 = vpop.permute.xlu0 %5301
        %5303 = vrot.lane.b32.xlu0 %v5283, 8
        %v5304 = vpop.permute.xlu0 %5303
        %5305 = vrot.lane.b32.xlu0 %v5284, 8
        %v5306 = vpop.permute.xlu0 %5305
        %5307 = vrot.lane.b32.xlu0 %v5285, 8
        %v5308 = vpop.permute.xlu0 %5307
        %5309 = vrot.lane.b32.xlu0 %v5286, 8
        %v5310 = vpop.permute.xlu0 %5309
        %5311 = vrot.lane.b32.xlu0 %v5287, 8
        %v5312 = vpop.permute.xlu0 %5311
        %5313 = vrot.lane.b32.xlu0 %v5288, 8
        %v5314 = vpop.permute.xlu0 %5313
        %5315 = vrot.lane.b32.xlu0 %v5289, 8
        %v5316 = vpop.permute.xlu0 %5315
        %5317 = vrot.lane.b32.xlu0 %v5290, 8
        %v5318 = vpop.permute.xlu0 %5317
        %5319 = vrot.lane.b32.xlu0 %v5291, 8
        %v5320 = vpop.permute.xlu0 %5319
        %5321 = vrot.lane.b32.xlu0 %v5292, 8
        %v5322 = vpop.permute.xlu0 %5321
        %5323 = vrot.lane.b32.xlu0 %v5293, 8
        %v5324 = vpop.permute.xlu0 %5323
        %5325 = vrot.lane.b32.xlu0 %v5294, 8
        %v5326 = vpop.permute.xlu0 %5325
        %v5343 = vunpack.c.l.b16 %v3886
        %v5344 = vunpack.c.l.b16 %v3887
        %v5345 = vunpack.c.l.b16 %v3888
        %v5346 = vunpack.c.l.b16 %v3889
        %v5347 = vunpack.c.l.b16 %v3890
        %v5348 = vunpack.c.l.b16 %v3891
        %v5349 = vunpack.c.l.b16 %v3892
        %v5350 = vunpack.c.l.b16 %v3893
        %v5351 = vunpack.c.l.b16 %v3894
        %v5352 = vunpack.c.l.b16 %v3895
        %v5353 = vunpack.c.l.b16 %v3896
        %v5354 = vunpack.c.l.b16 %v3897
        %v5355 = vunpack.c.l.b16 %v3898
        %v5356 = vunpack.c.l.b16 %v3899
        %v5357 = vunpack.c.l.b16 %v3900
        %v5358 = vunpack.c.l.b16 %v3901
        %v5359 = vunpack.c.l.b16 %v3902
        %v5360 = vunpack.c.l.b16 %v3903
        %v5361 = vunpack.c.l.b16 %v3904
        %v5362 = vunpack.c.l.b16 %v3905
        %v5363 = vunpack.c.l.b16 %v3906
        %v5364 = vunpack.c.l.b16 %v3907
        %v5365 = vunpack.c.l.b16 %v3908
        %v5366 = vunpack.c.l.b16 %v3909
        %v5367 = vunpack.c.l.b16 %v3910
        %v5368 = vunpack.c.l.b16 %v3911
        %v5369 = vunpack.c.l.b16 %v3912
        %v5370 = vunpack.c.l.b16 %v3913
        %v5371 = vunpack.c.l.b16 %v3914
        %v5372 = vunpack.c.l.b16 %v3915
        %v5373 = vunpack.c.l.b16 %v3916
        %v5374 = vunpack.c.l.b16 %v3917
        %v5375 = vpack.c.b16 %v5344, %v5343
        %v5376 = vpack.c.b16 %v5346, %v5345
        %v5377 = vpack.c.b16 %v5348, %v5347
        %v5378 = vpack.c.b16 %v5350, %v5349
        %v5379 = vpack.c.b16 %v5352, %v5351
        %v5380 = vpack.c.b16 %v5354, %v5353
        %v5381 = vpack.c.b16 %v5356, %v5355
        %v5382 = vpack.c.b16 %v5358, %v5357
        %v5383 = vpack.c.b16 %v5360, %v5359
        %v5384 = vpack.c.b16 %v5362, %v5361
        %v5385 = vpack.c.b16 %v5364, %v5363
        %v5386 = vpack.c.b16 %v5366, %v5365
        %v5387 = vpack.c.b16 %v5368, %v5367
        %v5388 = vpack.c.b16 %v5370, %v5369
        %v5389 = vpack.c.b16 %v5372, %v5371
        %v5390 = vpack.c.b16 %v5374, %v5373
        %5391 = vrot.lane.b32.xlu0 %v5375, 12
        %v5392 = vpop.permute.xlu0 %5391
        %5393 = vrot.lane.b32.xlu0 %v5376, 12
        %v5394 = vpop.permute.xlu0 %5393
        %5395 = vrot.lane.b32.xlu0 %v5377, 12
        %v5396 = vpop.permute.xlu0 %5395
        %5397 = vrot.lane.b32.xlu0 %v5378, 12
        %v5398 = vpop.permute.xlu0 %5397
        %5399 = vrot.lane.b32.xlu0 %v5379, 12
        %v5400 = vpop.permute.xlu0 %5399
        %5401 = vrot.lane.b32.xlu0 %v5380, 12
        %v5402 = vpop.permute.xlu0 %5401
        %5403 = vrot.lane.b32.xlu0 %v5381, 12
        %v5404 = vpop.permute.xlu0 %5403
        %5405 = vrot.lane.b32.xlu0 %v5382, 12
        %v5406 = vpop.permute.xlu0 %5405
        %5407 = vrot.lane.b32.xlu0 %v5383, 12
        %v5408 = vpop.permute.xlu0 %5407
        %5409 = vrot.lane.b32.xlu0 %v5384, 12
        %v5410 = vpop.permute.xlu0 %5409
        %5411 = vrot.lane.b32.xlu0 %v5385, 12
        %v5412 = vpop.permute.xlu0 %5411
        %5413 = vrot.lane.b32.xlu0 %v5386, 12
        %v5414 = vpop.permute.xlu0 %5413
        %5415 = vrot.lane.b32.xlu0 %v5387, 12
        %v5416 = vpop.permute.xlu0 %5415
        %5417 = vrot.lane.b32.xlu0 %v5388, 12
        %v5418 = vpop.permute.xlu0 %5417
        %5419 = vrot.lane.b32.xlu0 %v5389, 12
        %v5420 = vpop.permute.xlu0 %5419
        %5421 = vrot.lane.b32.xlu0 %v5390, 12
        %v5422 = vpop.permute.xlu0 %5421
        %v5423 = vunpack.c.l.b16 %v3947
        %v5424 = vunpack.c.l.b16 %v3957
        %v5425 = vunpack.c.l.b16 %v3971
        %v5426 = vunpack.c.l.b16 %v3981
        %v5427 = vunpack.c.l.b16 %v3995
        %v5428 = vunpack.c.l.b16 %v4005
        %v5429 = vunpack.c.l.b16 %v4019
        %v5430 = vunpack.c.l.b16 %v4029
        %v5431 = vunpack.c.l.b16 %v4043
        %v5432 = vunpack.c.l.b16 %v4053
        %v5433 = vunpack.c.l.b16 %v4067
        %v5434 = vunpack.c.l.b16 %v4077
        %v5435 = vunpack.c.l.b16 %v4091
        %v5436 = vunpack.c.l.b16 %v4101
        %v5437 = vunpack.c.l.b16 %v4115
        %v5438 = vunpack.c.l.b16 %v4125
        %v5439 = vunpack.c.l.b16 %v4139
        %v5440 = vunpack.c.l.b16 %v4149
        %v5441 = vunpack.c.l.b16 %v4163
        %v5442 = vunpack.c.l.b16 %v4173
        %v5443 = vunpack.c.l.b16 %v4187
        %v5444 = vunpack.c.l.b16 %v4197
        %v5445 = vunpack.c.l.b16 %v4211
        %v5446 = vunpack.c.l.b16 %v4221
        %v5447 = vunpack.c.l.b16 %v4235
        %v5448 = vunpack.c.l.b16 %v4245
        %v5449 = vunpack.c.l.b16 %v4259
        %v5450 = vunpack.c.l.b16 %v4269
        %v5451 = vunpack.c.l.b16 %v4283
        %v5452 = vunpack.c.l.b16 %v4293
        %v5453 = vunpack.c.l.b16 %v4307
        %v5454 = vunpack.c.l.b16 %v4317
        %v5455 = vpack.c.b16 %v5424, %v5423
        %v5456 = vpack.c.b16 %v5426, %v5425
        %v5457 = vpack.c.b16 %v5428, %v5427
        %v5458 = vpack.c.b16 %v5430, %v5429
        %v5459 = vpack.c.b16 %v5432, %v5431
        %v5460 = vpack.c.b16 %v5434, %v5433
        %v5461 = vpack.c.b16 %v5436, %v5435
        %v5462 = vpack.c.b16 %v5438, %v5437
        %v5463 = vpack.c.b16 %v5440, %v5439
        %v5464 = vpack.c.b16 %v5442, %v5441
        %v5465 = vpack.c.b16 %v5444, %v5443
        %v5466 = vpack.c.b16 %v5446, %v5445
        %v5467 = vpack.c.b16 %v5448, %v5447
        %v5468 = vpack.c.b16 %v5450, %v5449
        %v5469 = vpack.c.b16 %v5452, %v5451
        %v5470 = vpack.c.b16 %v5454, %v5453
        %5471 = vrot.lane.b32.xlu0 %v5455, 16
        %v5472 = vpop.permute.xlu0 %5471
        %5473 = vrot.lane.b32.xlu0 %v5456, 16
        %v5474 = vpop.permute.xlu0 %5473
        %5475 = vrot.lane.b32.xlu0 %v5457, 16
        %v5476 = vpop.permute.xlu0 %5475
        %5477 = vrot.lane.b32.xlu0 %v5458, 16
        %v5478 = vpop.permute.xlu0 %5477
        %5479 = vrot.lane.b32.xlu0 %v5459, 16
        %v5480 = vpop.permute.xlu0 %5479
        %5481 = vrot.lane.b32.xlu0 %v5460, 16
        %v5482 = vpop.permute.xlu0 %5481
        %5483 = vrot.lane.b32.xlu0 %v5461, 16
        %v5484 = vpop.permute.xlu0 %5483
        %5485 = vrot.lane.b32.xlu0 %v5462, 16
        %v5486 = vpop.permute.xlu0 %5485
        %5487 = vrot.lane.b32.xlu0 %v5463, 16
        %v5488 = vpop.permute.xlu0 %5487
        %5489 = vrot.lane.b32.xlu0 %v5464, 16
        %v5490 = vpop.permute.xlu0 %5489
        %5491 = vrot.lane.b32.xlu0 %v5465, 16
        %v5492 = vpop.permute.xlu0 %5491
        %5493 = vrot.lane.b32.xlu0 %v5466, 16
        %v5494 = vpop.permute.xlu0 %5493
        %5495 = vrot.lane.b32.xlu0 %v5467, 16
        %v5496 = vpop.permute.xlu0 %5495
        %5497 = vrot.lane.b32.xlu0 %v5468, 16
        %v5498 = vpop.permute.xlu0 %5497
        %5499 = vrot.lane.b32.xlu0 %v5469, 16
        %v5500 = vpop.permute.xlu0 %5499
        %5501 = vrot.lane.b32.xlu0 %v5470, 16
        %v5502 = vpop.permute.xlu0 %5501
        %v5503 = vunpack.c.l.b16 %v4385
        %v5504 = vunpack.c.l.b16 %v4388
        %v5505 = vunpack.c.l.b16 %v4392
        %v5506 = vunpack.c.l.b16 %v4395
        %v5507 = vunpack.c.l.b16 %v4399
        %v5508 = vunpack.c.l.b16 %v4402
        %v5509 = vunpack.c.l.b16 %v4406
        %v5510 = vunpack.c.l.b16 %v4409
        %v5511 = vunpack.c.l.b16 %v4413
        %v5512 = vunpack.c.l.b16 %v4416
        %v5513 = vunpack.c.l.b16 %v4420
        %v5514 = vunpack.c.l.b16 %v4423
        %v5515 = vunpack.c.l.b16 %v4427
        %v5516 = vunpack.c.l.b16 %v4430
        %v5517 = vunpack.c.l.b16 %v4434
        %v5518 = vunpack.c.l.b16 %v4437
        %v5519 = vunpack.c.l.b16 %v4441
        %v5520 = vunpack.c.l.b16 %v4444
        %v5521 = vunpack.c.l.b16 %v4448
        %v5522 = vunpack.c.l.b16 %v4451
        %v5523 = vunpack.c.l.b16 %v4455
        %v5524 = vunpack.c.l.b16 %v4458
        %v5525 = vunpack.c.l.b16 %v4462
        %v5526 = vunpack.c.l.b16 %v4465
        %v5527 = vunpack.c.l.b16 %v4469
        %v5528 = vunpack.c.l.b16 %v4472
        %v5529 = vunpack.c.l.b16 %v4476
        %v5530 = vunpack.c.l.b16 %v4479
        %v5531 = vunpack.c.l.b16 %v4483
        %v5532 = vunpack.c.l.b16 %v4486
        %v5533 = vunpack.c.l.b16 %v4490
        %v5534 = vunpack.c.l.b16 %v4493
        %v5535 = vpack.c.b16 %v5504, %v5503
        %v5536 = vpack.c.b16 %v5506, %v5505
        %v5537 = vpack.c.b16 %v5508, %v5507
        %v5538 = vpack.c.b16 %v5510, %v5509
        %v5539 = vpack.c.b16 %v5512, %v5511
        %v5540 = vpack.c.b16 %v5514, %v5513
        %v5541 = vpack.c.b16 %v5516, %v5515
        %v5542 = vpack.c.b16 %v5518, %v5517
        %v5543 = vpack.c.b16 %v5520, %v5519
        %v5544 = vpack.c.b16 %v5522, %v5521
        %v5545 = vpack.c.b16 %v5524, %v5523
        %v5546 = vpack.c.b16 %v5526, %v5525
        %v5547 = vpack.c.b16 %v5528, %v5527
        %v5548 = vpack.c.b16 %v5530, %v5529
        %v5549 = vpack.c.b16 %v5532, %v5531
        %v5550 = vpack.c.b16 %v5534, %v5533
        %5551 = vrot.lane.b32.xlu0 %v5535, 20
        %v5552 = vpop.permute.xlu0 %5551
        %5553 = vrot.lane.b32.xlu0 %v5536, 20
        %v5554 = vpop.permute.xlu0 %5553
        %5555 = vrot.lane.b32.xlu0 %v5537, 20
        %v5556 = vpop.permute.xlu0 %5555
        %5557 = vrot.lane.b32.xlu0 %v5538, 20
        %v5558 = vpop.permute.xlu0 %5557
        %5559 = vrot.lane.b32.xlu0 %v5539, 20
        %v5560 = vpop.permute.xlu0 %5559
        %5561 = vrot.lane.b32.xlu0 %v5540, 20
        %v5562 = vpop.permute.xlu0 %5561
        %5563 = vrot.lane.b32.xlu0 %v5541, 20
        %v5564 = vpop.permute.xlu0 %5563
        %5565 = vrot.lane.b32.xlu0 %v5542, 20
        %v5566 = vpop.permute.xlu0 %5565
        %5567 = vrot.lane.b32.xlu0 %v5543, 20
        %v5568 = vpop.permute.xlu0 %5567
        %5569 = vrot.lane.b32.xlu0 %v5544, 20
        %v5570 = vpop.permute.xlu0 %5569
        %5571 = vrot.lane.b32.xlu0 %v5545, 20
        %v5572 = vpop.permute.xlu0 %5571
        %5573 = vrot.lane.b32.xlu0 %v5546, 20
        %v5574 = vpop.permute.xlu0 %5573
        %5575 = vrot.lane.b32.xlu0 %v5547, 20
        %v5576 = vpop.permute.xlu0 %5575
        %5577 = vrot.lane.b32.xlu0 %v5548, 20
        %v5578 = vpop.permute.xlu0 %5577
        %5579 = vrot.lane.b32.xlu0 %v5549, 20
        %v5580 = vpop.permute.xlu0 %5579
        %5581 = vrot.lane.b32.xlu0 %v5550, 20
        %v5582 = vpop.permute.xlu0 %5581
        %v5599 = vunpack.c.l.b16 %v4495
        %v5600 = vunpack.c.l.b16 %v4496
        %v5601 = vunpack.c.l.b16 %v4497
        %v5602 = vunpack.c.l.b16 %v4498
        %v5603 = vunpack.c.l.b16 %v4499
        %v5604 = vunpack.c.l.b16 %v4500
        %v5605 = vunpack.c.l.b16 %v4501
        %v5606 = vunpack.c.l.b16 %v4502
        %v5607 = vunpack.c.l.b16 %v4503
        %v5608 = vunpack.c.l.b16 %v4504
        %v5609 = vunpack.c.l.b16 %v4505
        %v5610 = vunpack.c.l.b16 %v4506
        %v5611 = vunpack.c.l.b16 %v4507
        %v5612 = vunpack.c.l.b16 %v4508
        %v5613 = vunpack.c.l.b16 %v4509
        %v5614 = vunpack.c.l.b16 %v4510
        %v5615 = vunpack.c.l.b16 %v4511
        %v5616 = vunpack.c.l.b16 %v4512
        %v5617 = vunpack.c.l.b16 %v4513
        %v5618 = vunpack.c.l.b16 %v4514
        %v5619 = vunpack.c.l.b16 %v4515
        %v5620 = vunpack.c.l.b16 %v4516
        %v5621 = vunpack.c.l.b16 %v4517
        %v5622 = vunpack.c.l.b16 %v4518
        %v5623 = vunpack.c.l.b16 %v4519
        %v5624 = vunpack.c.l.b16 %v4520
        %v5625 = vunpack.c.l.b16 %v4521
        %v5626 = vunpack.c.l.b16 %v4522
        %v5627 = vunpack.c.l.b16 %v4523
        %v5628 = vunpack.c.l.b16 %v4524
        %v5629 = vunpack.c.l.b16 %v4525
        %v5630 = vunpack.c.l.b16 %v4526
        %v5631 = vpack.c.b16 %v5600, %v5599
        %v5632 = vpack.c.b16 %v5602, %v5601
        %v5633 = vpack.c.b16 %v5604, %v5603
        %v5634 = vpack.c.b16 %v5606, %v5605
        %v5635 = vpack.c.b16 %v5608, %v5607
        %v5636 = vpack.c.b16 %v5610, %v5609
        %v5637 = vpack.c.b16 %v5612, %v5611
        %v5638 = vpack.c.b16 %v5614, %v5613
        %v5639 = vpack.c.b16 %v5616, %v5615
        %v5640 = vpack.c.b16 %v5618, %v5617
        %v5641 = vpack.c.b16 %v5620, %v5619
        %v5642 = vpack.c.b16 %v5622, %v5621
        %v5643 = vpack.c.b16 %v5624, %v5623
        %v5644 = vpack.c.b16 %v5626, %v5625
        %v5645 = vpack.c.b16 %v5628, %v5627
        %v5646 = vpack.c.b16 %v5630, %v5629
        %5647 = vrot.lane.b32.xlu0 %v5631, 24
        %v5648 = vpop.permute.xlu0 %5647
        %5649 = vrot.lane.b32.xlu0 %v5632, 24
        %v5650 = vpop.permute.xlu0 %5649
        %5651 = vrot.lane.b32.xlu0 %v5633, 24
        %v5652 = vpop.permute.xlu0 %5651
        %5653 = vrot.lane.b32.xlu0 %v5634, 24
        %v5654 = vpop.permute.xlu0 %5653
        %5655 = vrot.lane.b32.xlu0 %v5635, 24
        %v5656 = vpop.permute.xlu0 %5655
        %5657 = vrot.lane.b32.xlu0 %v5636, 24
        %v5658 = vpop.permute.xlu0 %5657
        %5659 = vrot.lane.b32.xlu0 %v5637, 24
        %v5660 = vpop.permute.xlu0 %5659
        %5661 = vrot.lane.b32.xlu0 %v5638, 24
        %v5662 = vpop.permute.xlu0 %5661
        %5663 = vrot.lane.b32.xlu0 %v5639, 24
        %v5664 = vpop.permute.xlu0 %5663
        %5665 = vrot.lane.b32.xlu0 %v5640, 24
        %v5666 = vpop.permute.xlu0 %5665
        %5667 = vrot.lane.b32.xlu0 %v5641, 24
        %v5668 = vpop.permute.xlu0 %5667
        %5669 = vrot.lane.b32.xlu0 %v5642, 24
        %v5670 = vpop.permute.xlu0 %5669
        %5671 = vrot.lane.b32.xlu0 %v5643, 24
        %v5672 = vpop.permute.xlu0 %5671
        %5673 = vrot.lane.b32.xlu0 %v5644, 24
        %v5674 = vpop.permute.xlu0 %5673
        %5675 = vrot.lane.b32.xlu0 %v5645, 24
        %v5676 = vpop.permute.xlu0 %5675
        %5677 = vrot.lane.b32.xlu0 %v5646, 24
        %v5678 = vpop.permute.xlu0 %5677
        %v5679 = vunpack.c.l.b16 %v4556
        %v5680 = vunpack.c.l.b16 %v4566
        %v5681 = vunpack.c.l.b16 %v4580
        %v5682 = vunpack.c.l.b16 %v4590
        %v5683 = vunpack.c.l.b16 %v4604
        %v5684 = vunpack.c.l.b16 %v4614
        %v5685 = vunpack.c.l.b16 %v4628
        %v5686 = vunpack.c.l.b16 %v4638
        %v5687 = vunpack.c.l.b16 %v4652
        %v5688 = vunpack.c.l.b16 %v4662
        %v5689 = vunpack.c.l.b16 %v4676
        %v5690 = vunpack.c.l.b16 %v4686
        %v5691 = vunpack.c.l.b16 %v4700
        %v5692 = vunpack.c.l.b16 %v4710
        %v5693 = vunpack.c.l.b16 %v4724
        %v5694 = vunpack.c.l.b16 %v4734
        %v5695 = vunpack.c.l.b16 %v4748
        %v5696 = vunpack.c.l.b16 %v4758
        %v5697 = vunpack.c.l.b16 %v4772
        %v5698 = vunpack.c.l.b16 %v4782
        %v5699 = vunpack.c.l.b16 %v4796
        %v5700 = vunpack.c.l.b16 %v4806
        %v5701 = vunpack.c.l.b16 %v4820
        %v5702 = vunpack.c.l.b16 %v4830
        %v5703 = vunpack.c.l.b16 %v4844
        %v5704 = vunpack.c.l.b16 %v4854
        %v5705 = vunpack.c.l.b16 %v4868
        %v5706 = vunpack.c.l.b16 %v4878
        %v5707 = vunpack.c.l.b16 %v4892
        %v5708 = vunpack.c.l.b16 %v4902
        %v5709 = vunpack.c.l.b16 %v4916
        %v5710 = vunpack.c.l.b16 %v4926
        %v5711 = vpack.c.b16 %v5680, %v5679
        %v5712 = vpack.c.b16 %v5682, %v5681
        %v5713 = vpack.c.b16 %v5684, %v5683
        %v5714 = vpack.c.b16 %v5686, %v5685
        %v5715 = vpack.c.b16 %v5688, %v5687
        %v5716 = vpack.c.b16 %v5690, %v5689
        %v5717 = vpack.c.b16 %v5692, %v5691
        %v5718 = vpack.c.b16 %v5694, %v5693
        %v5719 = vpack.c.b16 %v5696, %v5695
        %v5720 = vpack.c.b16 %v5698, %v5697
        %v5721 = vpack.c.b16 %v5700, %v5699
        %v5722 = vpack.c.b16 %v5702, %v5701
        %v5723 = vpack.c.b16 %v5704, %v5703
        %v5724 = vpack.c.b16 %v5706, %v5705
        %v5725 = vpack.c.b16 %v5708, %v5707
        %v5726 = vpack.c.b16 %v5710, %v5709
        %5727 = vrot.lane.b32.xlu0 %v5711, 28
        %v5728 = vpop.permute.xlu0 %5727
        %5729 = vrot.lane.b32.xlu0 %v5712, 28
        %v5730 = vpop.permute.xlu0 %5729
        %5731 = vrot.lane.b32.xlu0 %v5713, 28
        %v5732 = vpop.permute.xlu0 %5731
        %5733 = vrot.lane.b32.xlu0 %v5714, 28
        %v5734 = vpop.permute.xlu0 %5733
        %5735 = vrot.lane.b32.xlu0 %v5715, 28
        %v5736 = vpop.permute.xlu0 %5735
        %5737 = vrot.lane.b32.xlu0 %v5716, 28
        %v5738 = vpop.permute.xlu0 %5737
        %5739 = vrot.lane.b32.xlu0 %v5717, 28
        %v5740 = vpop.permute.xlu0 %5739
        %5741 = vrot.lane.b32.xlu0 %v5718, 28
        %v5742 = vpop.permute.xlu0 %5741
        %5743 = vrot.lane.b32.xlu0 %v5719, 28
        %v5744 = vpop.permute.xlu0 %5743
        %5745 = vrot.lane.b32.xlu0 %v5720, 28
        %v5746 = vpop.permute.xlu0 %5745
        %5747 = vrot.lane.b32.xlu0 %v5721, 28
        %v5748 = vpop.permute.xlu0 %5747
        %5749 = vrot.lane.b32.xlu0 %v5722, 28
        %v5750 = vpop.permute.xlu0 %5749
        %5751 = vrot.lane.b32.xlu0 %v5723, 28
        %v5752 = vpop.permute.xlu0 %5751
        %5753 = vrot.lane.b32.xlu0 %v5724, 28
        %v5754 = vpop.permute.xlu0 %5753
        %5755 = vrot.lane.b32.xlu0 %v5725, 28
        %v5756 = vpop.permute.xlu0 %5755
        %5757 = vrot.lane.b32.xlu0 %v5726, 28
        %v5758 = vpop.permute.xlu0 %5757
        %v5759 = vunpack.c.l.b16 %v4994
        %v5760 = vunpack.c.l.b16 %v4997
        %v5761 = vunpack.c.l.b16 %v5001
        %v5762 = vunpack.c.l.b16 %v5004
        %v5763 = vunpack.c.l.b16 %v5008
        %v5764 = vunpack.c.l.b16 %v5011
        %v5765 = vunpack.c.l.b16 %v5015
        %v5766 = vunpack.c.l.b16 %v5018
        %v5767 = vunpack.c.l.b16 %v5022
        %v5768 = vunpack.c.l.b16 %v5025
        %v5769 = vunpack.c.l.b16 %v5029
        %v5770 = vunpack.c.l.b16 %v5032
        %v5771 = vunpack.c.l.b16 %v5036
        %v5772 = vunpack.c.l.b16 %v5039
        %v5773 = vunpack.c.l.b16 %v5043
        %v5774 = vunpack.c.l.b16 %v5046
        %v5775 = vunpack.c.l.b16 %v5050
        %v5776 = vunpack.c.l.b16 %v5053
        %v5777 = vunpack.c.l.b16 %v5057
        %v5778 = vunpack.c.l.b16 %v5060
        %v5779 = vunpack.c.l.b16 %v5064
        %v5780 = vunpack.c.l.b16 %v5067
        %v5781 = vunpack.c.l.b16 %v5071
        %v5782 = vunpack.c.l.b16 %v5074
        %v5783 = vunpack.c.l.b16 %v5078
        %v5784 = vunpack.c.l.b16 %v5081
        %v5785 = vunpack.c.l.b16 %v5085
        %v5786 = vunpack.c.l.b16 %v5088
        %v5787 = vunpack.c.l.b16 %v5092
        %v5788 = vunpack.c.l.b16 %v5095
        %v5789 = vunpack.c.l.b16 %v5099
        %v5790 = vunpack.c.l.b16 %v5102
        %v5791 = vpack.c.b16 %v5760, %v5759
        %v5792 = vpack.c.b16 %v5762, %v5761
        %v5793 = vpack.c.b16 %v5764, %v5763
        %v5794 = vpack.c.b16 %v5766, %v5765
        %v5795 = vpack.c.b16 %v5768, %v5767
        %v5796 = vpack.c.b16 %v5770, %v5769
        %v5797 = vpack.c.b16 %v5772, %v5771
        %v5798 = vpack.c.b16 %v5774, %v5773
        %v5799 = vpack.c.b16 %v5776, %v5775
        %v5800 = vpack.c.b16 %v5778, %v5777
        %v5801 = vpack.c.b16 %v5780, %v5779
        %v5802 = vpack.c.b16 %v5782, %v5781
        %v5803 = vpack.c.b16 %v5784, %v5783
        %v5804 = vpack.c.b16 %v5786, %v5785
        %v5805 = vpack.c.b16 %v5788, %v5787
        %v5806 = vpack.c.b16 %v5790, %v5789
        %5807 = vrot.lane.b32.xlu0 %v5791, 32
        %v5808 = vpop.permute.xlu0 %5807
        %5809 = vrot.lane.b32.xlu0 %v5792, 32
        %v5810 = vpop.permute.xlu0 %5809
        %5811 = vrot.lane.b32.xlu0 %v5793, 32
        %v5812 = vpop.permute.xlu0 %5811
        %5813 = vrot.lane.b32.xlu0 %v5794, 32
        %v5814 = vpop.permute.xlu0 %5813
        %5815 = vrot.lane.b32.xlu0 %v5795, 32
        %v5816 = vpop.permute.xlu0 %5815
        %5817 = vrot.lane.b32.xlu0 %v5796, 32
        %v5818 = vpop.permute.xlu0 %5817
        %5819 = vrot.lane.b32.xlu0 %v5797, 32
        %v5820 = vpop.permute.xlu0 %5819
        %5821 = vrot.lane.b32.xlu0 %v5798, 32
        %v5822 = vpop.permute.xlu0 %5821
        %5823 = vrot.lane.b32.xlu0 %v5799, 32
        %v5824 = vpop.permute.xlu0 %5823
        %5825 = vrot.lane.b32.xlu0 %v5800, 32
        %v5826 = vpop.permute.xlu0 %5825
        %5827 = vrot.lane.b32.xlu0 %v5801, 32
        %v5828 = vpop.permute.xlu0 %5827
        %5829 = vrot.lane.b32.xlu0 %v5802, 32
        %v5830 = vpop.permute.xlu0 %5829
        %5831 = vrot.lane.b32.xlu0 %v5803, 32
        %v5832 = vpop.permute.xlu0 %5831
        %5833 = vrot.lane.b32.xlu0 %v5804, 32
        %v5834 = vpop.permute.xlu0 %5833
        %5835 = vrot.lane.b32.xlu0 %v5805, 32
        %v5836 = vpop.permute.xlu0 %5835
        %5837 = vrot.lane.b32.xlu0 %v5806, 32
        %v5838 = vpop.permute.xlu0 %5837
        %v5841 = vsel %vm2807, %v5151, %v5216
        %v5844 = vsel %vm2807, %v5152, %v5218
        %v5847 = vsel %vm2807, %v5153, %v5220
        %v5850 = vsel %vm2807, %v5154, %v5222
        %v5853 = vsel %vm2807, %v5155, %v5224
        %v5856 = vsel %vm2807, %v5156, %v5226
        %v5859 = vsel %vm2807, %v5157, %v5228
        %v5862 = vsel %vm2807, %v5158, %v5230
        %v5865 = vsel %vm2807, %v5159, %v5232
        %v5868 = vsel %vm2807, %v5160, %v5234
        %v5871 = vsel %vm2807, %v5161, %v5236
        %v5874 = vsel %vm2807, %v5162, %v5238
        %v5877 = vsel %vm2807, %v5163, %v5240
        %v5880 = vsel %vm2807, %v5164, %v5242
        %v5883 = vsel %vm2807, %v5165, %v5244
        %v5886 = vsel %vm2807, %v5166, %v5246
        %v5888 = vsel %vm2856, %v5841, %v5296
        %v5890 = vsel %vm2856, %v5844, %v5298
        %v5892 = vsel %vm2856, %v5847, %v5300
        %v5894 = vsel %vm2856, %v5850, %v5302
        %v5896 = vsel %vm2856, %v5853, %v5304
        %v5898 = vsel %vm2856, %v5856, %v5306
        %v5900 = vsel %vm2856, %v5859, %v5308
        %v5902 = vsel %vm2856, %v5862, %v5310
        %v5904 = vsel %vm2856, %v5865, %v5312
        %v5906 = vsel %vm2856, %v5868, %v5314
        %v5908 = vsel %vm2856, %v5871, %v5316
        %v5910 = vsel %vm2856, %v5874, %v5318
        %v5912 = vsel %vm2856, %v5877, %v5320
        %v5914 = vsel %vm2856, %v5880, %v5322
        %v5916 = vsel %vm2856, %v5883, %v5324
        %v5918 = vsel %vm2856, %v5886, %v5326
        %v5920 = vsel %vm2889, %v5888, %v5392
        %v5922 = vsel %vm2889, %v5890, %v5394
        %v5924 = vsel %vm2889, %v5892, %v5396
        %v5926 = vsel %vm2889, %v5894, %v5398
        %v5928 = vsel %vm2889, %v5896, %v5400
        %v5930 = vsel %vm2889, %v5898, %v5402
        %v5932 = vsel %vm2889, %v5900, %v5404
        %v5934 = vsel %vm2889, %v5902, %v5406
        %v5936 = vsel %vm2889, %v5904, %v5408
        %v5938 = vsel %vm2889, %v5906, %v5410
        %v5940 = vsel %vm2889, %v5908, %v5412
        %v5942 = vsel %vm2889, %v5910, %v5414
        %v5944 = vsel %vm2889, %v5912, %v5416
        %v5946 = vsel %vm2889, %v5914, %v5418
        %v5948 = vsel %vm2889, %v5916, %v5420
        %v5950 = vsel %vm2889, %v5918, %v5422
        %v5952 = vsel %vm2922, %v5920, %v5472
        %v5954 = vsel %vm2922, %v5922, %v5474
        %v5956 = vsel %vm2922, %v5924, %v5476
        %v5958 = vsel %vm2922, %v5926, %v5478
        %v5960 = vsel %vm2922, %v5928, %v5480
        %v5962 = vsel %vm2922, %v5930, %v5482
        %v5964 = vsel %vm2922, %v5932, %v5484
        %v5966 = vsel %vm2922, %v5934, %v5486
        %v5968 = vsel %vm2922, %v5936, %v5488
        %v5970 = vsel %vm2922, %v5938, %v5490
        %v5972 = vsel %vm2922, %v5940, %v5492
        %v5974 = vsel %vm2922, %v5942, %v5494
        %v5976 = vsel %vm2922, %v5944, %v5496
        %v5978 = vsel %vm2922, %v5946, %v5498
        %v5980 = vsel %vm2922, %v5948, %v5500
        %v5982 = vsel %vm2922, %v5950, %v5502
        %v5984 = vsel %vm2955, %v5952, %v5552
        %v5986 = vsel %vm2955, %v5954, %v5554
        %v5988 = vsel %vm2955, %v5956, %v5556
        %v5990 = vsel %vm2955, %v5958, %v5558
        %v5992 = vsel %vm2955, %v5960, %v5560
        %v5994 = vsel %vm2955, %v5962, %v5562
        %v5996 = vsel %vm2955, %v5964, %v5564
        %v5998 = vsel %vm2955, %v5966, %v5566
        %v6000 = vsel %vm2955, %v5968, %v5568
        %v6002 = vsel %vm2955, %v5970, %v5570
        %v6004 = vsel %vm2955, %v5972, %v5572
        %v6006 = vsel %vm2955, %v5974, %v5574
        %v6008 = vsel %vm2955, %v5976, %v5576
        %v6010 = vsel %vm2955, %v5978, %v5578
        %v6012 = vsel %vm2955, %v5980, %v5580
        %v6014 = vsel %vm2955, %v5982, %v5582
        %v6016 = vsel %vm2988, %v5984, %v5648
        %v6018 = vsel %vm2988, %v5986, %v5650
        %v6020 = vsel %vm2988, %v5988, %v5652
        %v6022 = vsel %vm2988, %v5990, %v5654
        %v6024 = vsel %vm2988, %v5992, %v5656
        %v6026 = vsel %vm2988, %v5994, %v5658
        %v6028 = vsel %vm2988, %v5996, %v5660
        %v6030 = vsel %vm2988, %v5998, %v5662
        %v6032 = vsel %vm2988, %v6000, %v5664
        %v6034 = vsel %vm2988, %v6002, %v5666
        %v6036 = vsel %vm2988, %v6004, %v5668
        %v6038 = vsel %vm2988, %v6006, %v5670
        %v6040 = vsel %vm2988, %v6008, %v5672
        %v6042 = vsel %vm2988, %v6010, %v5674
        %v6044 = vsel %vm2988, %v6012, %v5676
        %v6046 = vsel %vm2988, %v6014, %v5678
        %v6048 = vsel %vm3021, %v6016, %v5728
        %v6050 = vsel %vm3021, %v6018, %v5730
        %v6052 = vsel %vm3021, %v6020, %v5732
        %v6054 = vsel %vm3021, %v6022, %v5734
        %v6056 = vsel %vm3021, %v6024, %v5736
        %v6058 = vsel %vm3021, %v6026, %v5738
        %v6060 = vsel %vm3021, %v6028, %v5740
        %v6062 = vsel %vm3021, %v6030, %v5742
        %v6064 = vsel %vm3021, %v6032, %v5744
        %v6066 = vsel %vm3021, %v6034, %v5746
        %v6068 = vsel %vm3021, %v6036, %v5748
        %v6070 = vsel %vm3021, %v6038, %v5750
        %v6072 = vsel %vm3021, %v6040, %v5752
        %v6074 = vsel %vm3021, %v6042, %v5754
        %v6076 = vsel %vm3021, %v6044, %v5756
        %v6078 = vsel %vm3021, %v6046, %v5758
        %v6080 = vsel %vm3054, %v6048, %v5808
        %v6082 = vsel %vm3054, %v6050, %v5810
        %v6084 = vsel %vm3054, %v6052, %v5812
        %v6086 = vsel %vm3054, %v6054, %v5814
        %v6088 = vsel %vm3054, %v6056, %v5816
        %v6090 = vsel %vm3054, %v6058, %v5818
        %v6092 = vsel %vm3054, %v6060, %v5820
        %v6094 = vsel %vm3054, %v6062, %v5822
        %v6096 = vsel %vm3054, %v6064, %v5824
        %v6098 = vsel %vm3054, %v6066, %v5826
        %v6100 = vsel %vm3054, %v6068, %v5828
        %v6102 = vsel %vm3054, %v6070, %v5830
        %v6104 = vsel %vm3054, %v6072, %v5832
        %v6106 = vsel %vm3054, %v6074, %v5834
        %v6108 = vsel %vm3054, %v6076, %v5836
        %v6110 = vsel %vm3054, %v6078, %v5838
        %v6111 = vsel %vm3127, %v6080, 0
        %v6113 = vsel %vm3127, %v6082, 0
        %v6115 = vsel %vm3127, %v6084, 0
        %v6117 = vsel %vm3127, %v6086, 0
        %v6119 = vsel %vm3127, %v6088, 0
        %v6121 = vsel %vm3127, %v6090, 0
        %v6123 = vsel %vm3127, %v6092, 0
        %v6125 = vsel %vm3127, %v6094, 0
        %v6127 = vsel %vm3127, %v6096, 0
        %v6129 = vsel %vm3127, %v6098, 0
        %v6131 = vsel %vm3127, %v6100, 0
        %v6133 = vsel %vm3127, %v6102, 0
        %v6135 = vsel %vm3127, %v6104, 0
        %v6137 = vsel %vm3127, %v6106, 0
        %v6139 = vsel %vm3127, %v6108, 0
        %v6141 = vsel %vm3127, %v6110, 0
        %6143 = vmatprep.subr.bf16.mxu0 0
        %6144 = vmatpush1.bf16.xpose.msra.mxu0 %v6111
        %6145 = vmatprep.subr.bf16.mxu0 0
        %6146 = vmatpush1.bf16.xpose.msra.mxu0 %v6113
        %6147 = vmatprep.subr.bf16.mxu0 0
        %6148 = vmatpush1.bf16.xpose.msra.mxu0 %v6115
        %6149 = vmatprep.subr.bf16.mxu0 0
        %6150 = vmatpush1.bf16.xpose.msra.mxu0 %v6117
        %6151 = vmatprep.subr.bf16.mxu0 0
        %6152 = vmatpush1.bf16.xpose.msra.mxu0 %v6119
        %6153 = vmatprep.subr.bf16.mxu0 0
        %6154 = vmatpush1.bf16.xpose.msra.mxu0 %v6121
        %6155 = vmatprep.subr.bf16.mxu0 0
        %6156 = vmatpush1.bf16.xpose.msra.mxu0 %v6123
        %6157 = vmatprep.subr.bf16.mxu0 0
        %6158 = vmatpush1.bf16.xpose.msra.mxu0 %v6125
        %6159 = vmatprep.subr.bf16.mxu0 0
        %6160 = vmatpush1.bf16.xpose.msra.mxu0 %v6127
        %6161 = vmatprep.subr.bf16.mxu0 0
        %6162 = vmatpush1.bf16.xpose.msra.mxu0 %v6129
        %6163 = vmatprep.subr.bf16.mxu0 0
        %6164 = vmatpush1.bf16.xpose.msra.mxu0 %v6131
        %6165 = vmatprep.subr.bf16.mxu0 0
        %6166 = vmatpush1.bf16.xpose.msra.mxu0 %v6133
        %6167 = vmatprep.subr.bf16.mxu0 0
        %6168 = vmatpush1.bf16.xpose.msra.mxu0 %v6135
        %6169 = vmatprep.subr.bf16.mxu0 0
        %6170 = vmatpush1.bf16.xpose.msra.mxu0 %v6137
        %6171 = vmatprep.subr.bf16.mxu0 0
        %6172 = vmatpush1.bf16.xpose.msra.mxu0 %v6139
        %6173 = vmatprep.subr.bf16.mxu0 0
        %6174 = vmatpush1.bf16.xpose.msra.mxu0 %v6141
        %6175 = vmatprep.mubr.bf16.mxu0 0
        %6176 = vmatmul.mubr.bf16.gmra.mrb[0].mxu0 %v3129
        %v6177 = vpop.f32.mrb[0].mxu0
        %v6178 = vadd.f32 0.0, %v6177
        %v6179 = vpop.f32.mrb[0].mxu0
        %v6180 = vadd.f32 0.0, %v6179
        %v6181 = vpop.f32.mrb[0].mxu0
        %v6182 = vpop.f32.mrb[0].mxu0
        %6183 = vmatprep.mubr.bf16.mxu0 0
        %6184 = vmatmul.mubr.bf16.gmra.mrb[0].mxu0 %v3132
        %v6185 = vpop.f32.mrb[0].mxu0
        %v6186 = vpop.f32.mrb[0].mxu0
        %v6187 = vpop.f32.mrb[0].mxu0
        %v6188 = vpop.f32.mrb[0].mxu0
        %6189 = vmatprep.mubr.bf16.mxu0 0
        %6190 = vmatmul.mubr.bf16.gmra.mrb[0].mxu0 %v3135
        %v6191 = vpop.f32.mrb[0].mxu0
        %v6192 = vpop.f32.mrb[0].mxu0
        %v6193 = vpop.f32.mrb[0].mxu0
        %v6194 = vpop.f32.mrb[0].mxu0
        %6195 = vmatprep.mubr.bf16.mxu0 0
        %6196 = vmatmul.mubr.bf16.gmra.mrb[0].mxu0 %v3138
        %v6197 = vpop.f32.mrb[0].mxu0
        %v6198 = vpop.f32.mrb[0].mxu0
        %v6199 = vpop.f32.mrb[0].mxu0
        %v6200 = vpop.f32.mrb[0].mxu0
        %6201 = vmatprep.mubr.bf16.mxu0 0
        %6202 = vmatmul.mubr.bf16.gmra.mrb[0].mxu0 %v3141
        %v6203 = vpop.f32.mrb[0].mxu0
        %v6204 = vpop.f32.mrb[0].mxu0
        %v6205 = vpop.f32.mrb[0].mxu0
        %v6206 = vpop.f32.mrb[0].mxu0
        %6207 = vmatprep.mubr.bf16.mxu0 0
        %6208 = vmatmul.mubr.bf16.gmra.mrb[0].mxu0 %v3144
        %v6209 = vpop.f32.mrb[0].mxu0
        %v6210 = vpop.f32.mrb[0].mxu0
        %v6211 = vpop.f32.mrb[0].mxu0
        %v6212 = vpop.f32.mrb[0].mxu0
        %6213 = vmatprep.mubr.bf16.mxu0 0
        %6214 = vmatmul.mubr.bf16.gmra.mrb[0].mxu0 %v3147
        %v6215 = vpop.f32.mrb[0].mxu0
        %v6216 = vpop.f32.mrb[0].mxu0
        %v6217 = vpop.f32.mrb[0].mxu0
        %v6218 = vpop.f32.mrb[0].mxu0
        %6219 = vmatprep.mubr.bf16.mxu0 0
        %6220 = vmatmul.mubr.bf16.gmra.mrb[0].mxu0 %v3150
        %v6221 = vpop.f32.mrb[0].mxu0
        %v6222 = vpop.f32.mrb[0].mxu0
        %v6223 = vpop.f32.mrb[0].mxu0
        %v6224 = vpop.f32.mrb[0].mxu0
        %6225 = vdwg.mxu0
        %v6226 = vadd.f32 %v6178, %v3270
        %v6227 = vadd.f32 %v6180, %v3270
        %s6228 = scalar_lea.vmem %s218, 16 [#allocation8]
        %6229 = vst [vmem:[%s6228] sm:$0xff] %v6226
        %6230 = vst [vmem:[%s6228 + $0x8] sm:$0xff] %v6227
        %s6231 = sand.u32 %s97, 1
        %s6232 = scalar_lea.sflag [#allocation4], %s6231
        %s6233 = sand.u32 %s97, 1
        %s6234 = smul.addr %s6233, 32
        %s6235 = scalar_lea.vmem [#allocation8], %s6234
        // Predicated region
        $region45: #{conv_dcf_forward.1} parent=31 // pred_check
          %p6236 = pneg %p107
        $region46: #{conv_dcf_forward.1} parent=31 // pred_check_branch
          %6238 = sbr.rel (%p6236) target = $region48
        $region47: #{conv_dcf_forward.1} parent=31 // pred_region
          %s6239 = smul.u32 2, %s21
          %s6241 = ssub.s32 512, 512
          %6242 = vsyncadd %s6232, %s6241
          %s6243 = smul.addr %s6239, 2
          %s6244 = smul.addr %s6243, 128
          %s6245 = scalar_lea.hbm %s3, %s6244
          %s6246 = sshll.u32 %s6235, 4
          %s6247 = int_to_ptr.vmem [resolvable:$true] %s6246
          %6252 = dma.vmem_to_hbm [thread:$0]  %s6247, 512, %s6245, %s6232, 256, 256, 16
        $region48: #{conv_dcf_forward.1} parent=31 // pred_fallthru
          _
      $region32: #{conv_dcf_forward.1} parent=5 // pred_fallthru
        _
      %p6253 = scmp.le.s32.totalorder 2, %s16
      // Predicated region
      $region49: #{conv_dcf_forward.1} parent=5 // pred_check
        %p6254 = pneg %p6253
      $region50: #{conv_dcf_forward.1} parent=5 // pred_check_branch
        %6256 = sbr.rel (%p6254) target = $region52
      $region51: #{conv_dcf_forward.1} parent=5 // pred_region
        %s6257 = ssub.s32 %s16, 2
        // Predicated region
        $region53: #{conv_dcf_forward.1} parent=51 // pred_check
          %p6258 = pneg %p113
        $region54: #{conv_dcf_forward.1} parent=51 // pred_check_branch
          %6260 = sbr.rel (%p6258) target = $region56
        $region55: #{conv_dcf_forward.1} parent=51 // pred_region
          %s6261 = sand.u32 %s98, 1
          %s6262 = scalar_lea.sflag [#allocation4], %s6261
          %s6263 = sand.u32 %s98, 1
          %s6264 = smul.addr %s6263, 32
          %s6265 = scalar_lea.vmem [#allocation8], %s6264
          %6266 = dma.done %s6262, 512
        $region56: #{conv_dcf_forward.1} parent=51 // pred_fallthru
          _
      $region52: #{conv_dcf_forward.1} parent=5 // pred_fallthru
        _
    $region6: #{conv_dcf_forward.1} parent=1 // loop_footer
      %s20 = sadd.s32 1, %s16
    $region7: #{conv_dcf_forward.1} parent=1 // loop_footer_branch
      %15 = sbr.rel target = $region3
    $region8: #{conv_dcf_forward.1} parent=1 // loop_exit
      _
    %6267 = vsyncpa [#allocation3], 1
    %s6268 = scalar_lea.sflag [#allocation3], 1
    %6269 = vsyncpa %s6268, 1
    %6270 = vsyncpa [#allocation6], 1
    %6271 = vsyncpa [#allocation4], 1
    %s6272 = scalar_lea.sflag [#allocation4], 1
    %6273 = vsyncpa %s6272, 1

</llo_original>
